<compile_context>
chip_gen: v7x
topology: tpu7x:2x2x1
jax: 0.10.0
libtpu: 0.0.40
codegen_flags: <defaults>
</compile_context>

<pallas_src>
import math
import functools

import jax
import jax.numpy as jnp
from jax.experimental import pallas as pl
from jax.experimental.pallas import tpu as pltpu


# ----------------------------------------------------------------------------
# Pallas kernel: one grid step == one batch image, full Bottleneck forward.
# ----------------------------------------------------------------------------
def _bottleneck_kernel(
    x_ref,                        # (1, H, W, Cin)  f32
    w1_ref, s1_ref, b1_ref,       # (Cin, P) bf16, (1, P) f32, (1, P) f32
    w2_ref, s2_ref, b2_ref,       # (3, 3P, P) bf16, (1, P), (1, P)
    w3_ref, s3_ref, b3_ref,       # (P, 4P) bf16, (1, 4P), (1, 4P)
    wsp1_ref, ssp1_ref, bsp1_ref,  # SPBlock conv(3,1): (3P, P) bf16, (1, P), (1, P)
    wsp2_ref, ssp2_ref, bsp2_ref,  # SPBlock conv(1,3): (3P, P) bf16, (1, P), (1, P)
    wsp3_ref, bsp3_ref,            # SPBlock 1x1: (P, P) bf16, (1, P)
    out_ref,                      # (1, H, W, 4P) f32
    pad_ref,                      # VMEM scratch (H+2d, W+2d, P) f32
    hpad_ref,                     # VMEM scratch (H+2, P) f32
    wpad_ref,                     # VMEM scratch (W+2, P) f32
    *, spm_on, dilation):
    H, W, Cin = x_ref.shape[1], x_ref.shape[2], x_ref.shape[3]
    P = w1_ref.shape[1]
    Cout = w3_ref.shape[1]
    d = dilation
    bf = jnp.bfloat16

    # ---- conv1 (1x1, no bias) + bn1 + relu  (bf16 MXU, f32 accumulate) ----
    x_bf = x_ref[0].reshape(H * W, Cin).astype(bf)
    o1 = jnp.dot(x_bf, w1_ref[...], preferred_element_type=jnp.float32)
    o1 = jnp.maximum(o1 * s1_ref[...] + b1_ref[...], 0.0)       # (H*W, P) f32

    # ---- conv2 (3x3, pad=d, dilation=d, stride=1, no bias) + bn2 + relu ---
    # Zero only the d-wide halo strips; the interior is fully overwritten
    # every grid step (stride==1 invariant) and the halo is never written.
    pad_ref[0:d, :, :] = jnp.zeros((d, W + 2 * d, P), jnp.float32)
    pad_ref[d + H:d + H + d, :, :] = jnp.zeros((d, W + 2 * d, P), jnp.float32)
    pad_ref[d:d + H, 0:d, :] = jnp.zeros((H, d, P), jnp.float32)
    pad_ref[d:d + H, d + W:d + W + d, :] = jnp.zeros((H, d, P), jnp.float32)
    pad_ref[d:d + H, d:d + W, :] = o1.reshape(H, W, P)

    # Fattened contraction: per kernel row kh, one (H*W, 3P) x (3P, P) matmul.
    # Row slabs are H-shifted loads (outer dim, no sublane misalignment); the
    # W shifts happen in-register on the loaded value.
    acc = jnp.zeros((H * W, P), jnp.float32)
    for kh in range(3):
        row = pad_ref[kh * d:kh * d + H, :, :]                   # (H, W+2d, P)
        slab = jnp.concatenate(
            [row[:, kw * d:kw * d + W, :] for kw in range(3)], axis=-1)
        acc = acc + jnp.dot(slab.astype(bf).reshape(H * W, 3 * P),
                            w2_ref[kh],
                            preferred_element_type=jnp.float32)
    o2 = jnp.maximum(acc * s2_ref[...] + b2_ref[...], 0.0)       # (H*W, P) f32

    # ---- optional SPBlock gate:  out = out * sigmoid(conv(relu(h+w paths)))
    if spm_on:
        o2hw = o2.reshape(H, W, P)

        # pool over W (AdaptiveAvgPool2d((None,1))) -> conv(3,1) along H + bn
        p1 = jnp.mean(o2hw, axis=1)                              # (H, P)
        hpad_ref[...] = jnp.zeros_like(hpad_ref)
        hpad_ref[1:1 + H, :] = p1
        hp = hpad_ref[...]                                       # (H+2, P)
        hslab = jnp.concatenate([hp[k:k + H, :] for k in range(3)], axis=-1)
        y1 = jnp.dot(hslab.astype(bf), wsp1_ref[...],
                     preferred_element_type=jnp.float32)
        y1 = y1 * ssp1_ref[...] + bsp1_ref[...]                  # (H, P)

        # pool over H (AdaptiveAvgPool2d((1,None))) -> conv(1,3) along W + bn
        p2 = jnp.mean(o2hw, axis=0)                              # (W, P)
        wpad_ref[...] = jnp.zeros_like(wpad_ref)
        wpad_ref[1:1 + W, :] = p2
        wp = wpad_ref[...]                                       # (W+2, P)
        wslab = jnp.concatenate([wp[k:k + W, :] for k in range(3)], axis=-1)
        y2 = jnp.dot(wslab.astype(bf), wsp2_ref[...],
                     preferred_element_type=jnp.float32)
        y2 = y2 * ssp2_ref[...] + bsp2_ref[...]                  # (W, P)

        y = jnp.maximum(
            jnp.broadcast_to(y1.reshape(H, 1, P), (H, W, P))
            + jnp.broadcast_to(y2.reshape(1, W, P), (H, W, P)), 0.0)
        gate = jax.nn.sigmoid(
            jnp.dot(y.astype(bf).reshape(H * W, P), wsp3_ref[...],
                    preferred_element_type=jnp.float32) + bsp3_ref[...])
        o2 = o2 * gate

    # ---- conv3 (1x1, no bias) + bn3 + identity residual + relu -----------
    o3 = jnp.dot(o2.astype(bf), w3_ref[...],
                 preferred_element_type=jnp.float32)
    o3 = o3 * s3_ref[...] + b3_ref[...]
    # Residual read deferred to here (x_ref is VMEM-resident; late re-load is
    # cheap and keeps the full-image f32 input out of the live set above).
    res = x_ref[0].reshape(H * W, Cin)
    out_ref[0] = jnp.maximum(o3 + res, 0.0).reshape(H, W, Cout)  # Cin == Cout


# ----------------------------------------------------------------------------
# Wrapper
# ----------------------------------------------------------------------------
def bottleneck_pallas(x_nchw, params, *, spm_on=False, dilation=1):
    x = jnp.transpose(x_nchw, (0, 2, 3, 1)).astype(jnp.float32)  # NCHW -> NHWC
    N, H, W, Cin = x.shape
    P = params["w1"].shape[1]
    Cout = params["w3"].shape[1]
    assert Cin == Cout, "identity residual requires inplanes == planes*4"
    d = int(dilation)
    bf = jnp.bfloat16

    def _full(arr):
        shp = arr.shape
        return pl.BlockSpec(shp, lambda n, _r=len(shp): (0,) * _r)

    args = (
        x,
        params["w1"].astype(bf), params["s1"], params["b1"],
        params["w2_hwio"].reshape(3, 3 * P, P).astype(bf),
        params["s2"], params["b2"],
        params["w3"].astype(bf), params["s3"], params["b3"],
        params["wsp1_hwio"].reshape(3 * P, P).astype(bf),
        params["ssp1"], params["bsp1"],
        params["wsp2_hwio"].reshape(3 * P, P).astype(bf),
        params["ssp2"], params["bsp2"],
        params["wsp3"].astype(bf), params["bsp3"],
    )
    in_specs = [pl.BlockSpec((1, H, W, Cin), lambda n: (n, 0, 0, 0))]
    in_specs += [_full(a) for a in args[1:]]

    # VMEM budget: double-buffered image blocks + weights + scratch + headroom
    # for live jnp temporaries; clamped to a range that is safe on v5e/v6e/v7x.
    img_bytes = H * W * (Cin + Cout) * 4
    wgt_bytes = sum(int(a.size) * a.dtype.itemsize for a in args[1:])
    scr_bytes = ((H + 2 * d) * (W + 2 * d) * P
                 + (H + 2) * P + (W + 2) * P) * 4
    tmp_bytes = 10 * H * W * max(4 * P, Cout) * 4
    est = 2 * img_bytes + 2 * wgt_bytes + scr_bytes + tmp_bytes
    vmem_limit = int(min(max(2 * est, 32 * 1024 * 1024), 64 * 1024 * 1024))

    out = pl.pallas_call(
        functools.partial(_bottleneck_kernel, spm_on=spm_on, dilation=d),
        out_shape=jax.ShapeDtypeStruct((N, H, W, Cout), jnp.float32),
        grid_spec=pltpu.PrefetchScalarGridSpec(
            num_scalar_prefetch=0,
            grid=(N,),
            in_specs=in_specs,
            out_specs=pl.BlockSpec((1, H, W, Cout), lambda n: (n, 0, 0, 0)),
            scratch_shapes=[
                pltpu.VMEM((H + 2 * d, W + 2 * d, P), jnp.float32),
                pltpu.VMEM((H + 2, P), jnp.float32),
                pltpu.VMEM((W + 2, P), jnp.float32),
            ]),
        compiler_params=pltpu.CompilerParams(
            dimension_semantics=("parallel",),   # independent images -> megacore
            vmem_limit_bytes=vmem_limit),
    )(*args)
    return jnp.transpose(out, (0, 3, 1, 2))                      # NHWC -> NCHW


# ----------------------------------------------------------------------------
# Deterministic parameter construction (BN folded to inference-mode scale/bias)
# ----------------------------------------------------------------------------
def _bn_fold(key, c):
    k1, k2, k3, k4 = jax.random.split(key, 4)
    gamma = jax.random.uniform(k1, (1, c), jnp.float32, 0.5, 1.5)
    beta = jax.random.normal(k2, (1, c), jnp.float32) * 0.1
    mean = jax.random.normal(k3, (1, c), jnp.float32) * 0.1
    var = jax.random.uniform(k4, (1, c), jnp.float32, 0.5, 1.5)
    scale = gamma / jnp.sqrt(var + 1e-5)
    return scale, beta - mean * scale


def make_params(key, cin, p):
    ks = jax.random.split(key, 12)

    def w(k, shape, fan_in):
        return jax.random.normal(k, shape, jnp.float32) / math.sqrt(fan_in)

    prm = {}
    prm["w1"] = w(ks[0], (cin, p), cin)                 # conv1 1x1  (Cin, P)
    prm["s1"], prm["b1"] = _bn_fold(ks[1], p)
    prm["w2_hwio"] = w(ks[2], (3, 3, p, p), 9 * p)      # conv2 3x3  HWIO
    prm["s2"], prm["b2"] = _bn_fold(ks[3], p)
    prm["w3"] = w(ks[4], (p, 4 * p), p)                 # conv3 1x1  (P, 4P)
    prm["s3"], prm["b3"] = _bn_fold(ks[5], 4 * p)
    # SPBlock
    prm["wsp1_hwio"] = w(ks[6], (3, 1, p, p), 3 * p)    # conv (3,1)
    prm["ssp1"], prm["bsp1"] = _bn_fold(ks[7], p)
    prm["wsp2_hwio"] = w(ks[8], (1, 3, p, p), 3 * p)    # conv (1,3)
    prm["ssp2"], prm["bsp2"] = _bn_fold(ks[9], p)
    prm["wsp3"] = w(ks[10], (p, p), p)                  # conv 1x1 (+bias)
    prm["bsp3"] = jax.random.normal(ks[11], (1, p), jnp.float32) * 0.1
    return prm


# ----------------------------------------------------------------------------
# Pure-JAX reference (NHWC) with the same bf16-in / f32-accumulate precision
# ----------------------------------------------------------------------------
def _conv(x, w_hwio, padding, dilation=(1, 1)):
    return jax.lax.conv_general_dilated(
        x.astype(jnp.bfloat16), w_hwio.astype(jnp.bfloat16),
        window_strides=(1, 1), padding=padding, rhs_dilation=dilation,
        dimension_numbers=("NHWC", "HWIO", "NHWC"),
        preferred_element_type=jnp.float32)


def _spblock_ref(x, p):
    N, H, W, C = x.shape
    x1 = jnp.mean(x, axis=2, keepdims=True)
    x1 = _conv(x1, p["wsp1_hwio"], ((1, 1), (0, 0))) * p["ssp1"] + p["bsp1"]
    x1 = jnp.broadcast_to(x1, (N, H, W, C))
    x2 = jnp.mean(x, axis=1, keepdims=True)
    x2 = _conv(x2, p["wsp2_hwio"], ((0, 0), (1, 1))) * p["ssp2"] + p["bsp2"]
    x2 = jnp.broadcast_to(x2, (N, H, W, C))
    y = jax.nn.relu(x1 + x2)
    g = _conv(y, p["wsp3"][None, None], "VALID") + p["bsp3"]
    return jax.nn.sigmoid(g)


def bottleneck_ref(x_nhwc, p, spm_on, dilation):
    d = dilation
    o = _conv(x_nhwc, p["w1"][None, None], "VALID")
    o = jax.nn.relu(o * p["s1"] + p["b1"])
    o = _conv(o, p["w2_hwio"], ((d, d), (d, d)), (d, d))
    o = jax.nn.relu(o * p["s2"] + p["b2"])
    if spm_on:
        o = o * _spblock_ref(o, p)
    o = _conv(o, p["w3"][None, None], "VALID")
    o = o * p["s3"] + p["b3"]
    return jax.nn.relu(o + x_nhwc)


# ----------------------------------------------------------------------------
if __name__ == "__main__":
    N, planes = 2, 32
    inplanes = 4 * planes        # inplanes == planes*4 -> identity residual
    H = W = 16                   # output channels = 128 -> lane-dense stores

    key = jax.random.PRNGKey(0)
    kx, kp = jax.random.split(key)
    x_nchw = jax.random.normal(kx, (N, inplanes, H, W), jnp.float32)
    params = make_params(kp, inplanes, planes)

    for spm_on in (False, True):
        out = bottleneck_pallas(x_nchw, params, spm_on=spm_on, dilation=1)
        out = jax.block_until_ready(out)
        ref = bottleneck_ref(jnp.transpose(x_nchw, (0, 2, 3, 1)),
                             params, spm_on, 1)
        ref = jnp.transpose(ref, (0, 3, 1, 2))
        err = float(jnp.max(jnp.abs(out - ref)))
        assert out.shape == (N, 4 * planes, H, W), out.shape
        assert err < 2e-2, f"spm_on={spm_on} max abs err {err}"

    print("KERNEL_OK")
</pallas_src>

<mosaic_0001>
module attributes {stable_mosaic.version = 11 : i64} {
  func.func @_bottleneck_kernel(%arg0: i32, %arg1: memref<1x16x16x128xf32, #tpu.memory_space<vmem>>, %arg2: memref<128x32xbf16, #tpu.memory_space<vmem>>, %arg3: memref<1x32xf32, #tpu.memory_space<vmem>>, %arg4: memref<1x32xf32, #tpu.memory_space<vmem>>, %arg5: memref<3x96x32xbf16, #tpu.memory_space<vmem>>, %arg6: memref<1x32xf32, #tpu.memory_space<vmem>>, %arg7: memref<1x32xf32, #tpu.memory_space<vmem>>, %arg8: memref<32x128xbf16, #tpu.memory_space<vmem>>, %arg9: memref<1x128xf32, #tpu.memory_space<vmem>>, %arg10: memref<1x128xf32, #tpu.memory_space<vmem>>, %arg11: memref<96x32xbf16, #tpu.memory_space<vmem>>, %arg12: memref<1x32xf32, #tpu.memory_space<vmem>>, %arg13: memref<1x32xf32, #tpu.memory_space<vmem>>, %arg14: memref<96x32xbf16, #tpu.memory_space<vmem>>, %arg15: memref<1x32xf32, #tpu.memory_space<vmem>>, %arg16: memref<1x32xf32, #tpu.memory_space<vmem>>, %arg17: memref<32x32xbf16, #tpu.memory_space<vmem>>, %arg18: memref<1x32xf32, #tpu.memory_space<vmem>>, %arg19: memref<1x16x16x128xf32, #tpu.memory_space<vmem>>, %arg20: memref<18x18x32xf32, #tpu.memory_space<vmem>>, %arg21: memref<18x32xf32, #tpu.memory_space<vmem>>, %arg22: memref<18x32xf32, #tpu.memory_space<vmem>>) attributes {dimension_semantics = [#tpu.dimension_semantics<parallel>], iteration_bounds = array<i64: 2>, scalar_prefetch = 0 : i64, scratch_operands = 3 : i64, tpu.core_type = #tpu.core_type<tc>, window_params = [{transform_indices = @transform_0, window_bounds = array<i64: 1, 16, 16, 128>}, {pipeline_mode = #tpu.pipeline_mode<synchronous>, transform_indices = @transform_1, window_bounds = array<i64: 128, 32>}, {pipeline_mode = #tpu.pipeline_mode<synchronous>, transform_indices = @transform_2, window_bounds = array<i64: 1, 32>}, {pipeline_mode = #tpu.pipeline_mode<synchronous>, transform_indices = @transform_3, window_bounds = array<i64: 1, 32>}, {pipeline_mode = #tpu.pipeline_mode<synchronous>, transform_indices = @transform_4, window_bounds = array<i64: 3, 96, 32>}, {pipeline_mode = #tpu.pipeline_mode<synchronous>, transform_indices = @transform_5, window_bounds = array<i64: 1, 32>}, {pipeline_mode = #tpu.pipeline_mode<synchronous>, transform_indices = @transform_6, window_bounds = array<i64: 1, 32>}, {pipeline_mode = #tpu.pipeline_mode<synchronous>, transform_indices = @transform_7, window_bounds = array<i64: 32, 128>}, {pipeline_mode = #tpu.pipeline_mode<synchronous>, transform_indices = @transform_8, window_bounds = array<i64: 1, 128>}, {pipeline_mode = #tpu.pipeline_mode<synchronous>, transform_indices = @transform_9, window_bounds = array<i64: 1, 128>}, {pipeline_mode = #tpu.pipeline_mode<synchronous>, transform_indices = @transform_10, window_bounds = array<i64: 96, 32>}, {pipeline_mode = #tpu.pipeline_mode<synchronous>, transform_indices = @transform_11, window_bounds = array<i64: 1, 32>}, {pipeline_mode = #tpu.pipeline_mode<synchronous>, transform_indices = @transform_12, window_bounds = array<i64: 1, 32>}, {pipeline_mode = #tpu.pipeline_mode<synchronous>, transform_indices = @transform_13, window_bounds = array<i64: 96, 32>}, {pipeline_mode = #tpu.pipeline_mode<synchronous>, transform_indices = @transform_14, window_bounds = array<i64: 1, 32>}, {pipeline_mode = #tpu.pipeline_mode<synchronous>, transform_indices = @transform_15, window_bounds = array<i64: 1, 32>}, {pipeline_mode = #tpu.pipeline_mode<synchronous>, transform_indices = @transform_16, window_bounds = array<i64: 32, 32>}, {pipeline_mode = #tpu.pipeline_mode<synchronous>, transform_indices = @transform_17, window_bounds = array<i64: 1, 32>}, {transform_indices = @transform_18, window_bounds = array<i64: 1, 16, 16, 128>}]} {
    %c0 = arith.constant 0 : index
    %c0_0 = arith.constant 0 : index
    %c0_1 = arith.constant 0 : index
    %c0_2 = arith.constant 0 : index
    %0 = vector.load %arg1[%c0, %c0_0, %c0_1, %c0_2] : memref<1x16x16x128xf32, #tpu.memory_space<vmem>>, vector<1x16x16x128xf32>
    %1 = vector.shape_cast %0 : vector<1x16x16x128xf32> to vector<16x16x128xf32>
    %2 = vector.shape_cast %1 : vector<16x16x128xf32> to vector<256x128xf32>
    %3 = arith.truncf %2 : vector<256x128xf32> to vector<256x128xbf16>
    %c0_3 = arith.constant 0 : index
    %c0_4 = arith.constant 0 : index
    %4 = vector.load %arg2[%c0_3, %c0_4] : memref<128x32xbf16, #tpu.memory_space<vmem>>, vector<128x32xbf16>
    %cst = arith.constant dense<0.000000e+00> : vector<256x32xf32>
    %5 = tpu.matmul %3, %4, %cst {dimension_numbers = #tpu.dot_dimension_numbers<[1], [0], [0], [1], [0, 0, 1, 1], [], []>} : vector<256x128xbf16>, vector<128x32xbf16>, vector<256x32xf32> -> vector<256x32xf32>
    %c0_5 = arith.constant 0 : index
    %c0_6 = arith.constant 0 : index
    %6 = vector.load %arg3[%c0_5, %c0_6] : memref<1x32xf32, #tpu.memory_space<vmem>>, vector<1x32xf32>
    %7 = vector.broadcast %6 : vector<1x32xf32> to vector<256x32xf32>
    %8 = arith.mulf %5, %7 : vector<256x32xf32>
    %c0_7 = arith.constant 0 : index
    %c0_8 = arith.constant 0 : index
    %9 = vector.load %arg4[%c0_7, %c0_8] : memref<1x32xf32, #tpu.memory_space<vmem>>, vector<1x32xf32>
    %10 = vector.broadcast %9 : vector<1x32xf32> to vector<256x32xf32>
    %11 = arith.addf %8, %10 : vector<256x32xf32>
    %cst_9 = arith.constant 0.000000e+00 : f32
    %12 = vector.broadcast %cst_9 : f32 to vector<256x32xf32>
    %13 = arith.maximumf %11, %12 : vector<256x32xf32>
    %cst_10 = arith.constant 0.000000e+00 : f32
    %14 = vector.broadcast %cst_10 : f32 to vector<1x18x32xf32>
    %c0_11 = arith.constant 0 : index
    %c0_12 = arith.constant 0 : index
    %c0_13 = arith.constant 0 : index
    %15 = vector.load %arg20[%c0_11, %c0_12, %c0_13] : memref<18x18x32xf32, #tpu.memory_space<vmem>>, vector<1x18x32xf32>
    tpu.vector_store %arg20[%c0_11, %c0_12, %c0_13], %14 {strides = array<i32>} : memref<18x18x32xf32, #tpu.memory_space<vmem>>, vector<1x18x32xf32>,
    %cst_14 = arith.constant 0.000000e+00 : f32
    %16 = vector.broadcast %cst_14 : f32 to vector<1x18x32xf32>
    %c17 = arith.constant 17 : index
    %c0_15 = arith.constant 0 : index
    %c0_16 = arith.constant 0 : index
    %17 = vector.load %arg20[%c17, %c0_15, %c0_16] : memref<18x18x32xf32, #tpu.memory_space<vmem>>, vector<1x18x32xf32>
    tpu.vector_store %arg20[%c17, %c0_15, %c0_16], %16 {strides = array<i32>} : memref<18x18x32xf32, #tpu.memory_space<vmem>>, vector<1x18x32xf32>,
    %cst_17 = arith.constant 0.000000e+00 : f32
    %18 = vector.broadcast %cst_17 : f32 to vector<16x1x32xf32>
    %c1 = arith.constant 1 : index
    %c0_18 = arith.constant 0 : index
    %c0_19 = arith.constant 0 : index
    %19 = vector.load %arg20[%c1, %c0_18, %c0_19] : memref<18x18x32xf32, #tpu.memory_space<vmem>>, vector<16x1x32xf32>
    tpu.vector_store %arg20[%c1, %c0_18, %c0_19], %18 {strides = array<i32>} : memref<18x18x32xf32, #tpu.memory_space<vmem>>, vector<16x1x32xf32>,
    %cst_20 = arith.constant 0.000000e+00 : f32
    %20 = vector.broadcast %cst_20 : f32 to vector<16x1x32xf32>
    %c1_21 = arith.constant 1 : index
    %c17_22 = arith.constant 17 : index
    %c0_23 = arith.constant 0 : index
    %21 = vector.load %arg20[%c1_21, %c17_22, %c0_23] : memref<18x18x32xf32, #tpu.memory_space<vmem>>, vector<16x1x32xf32>
    tpu.vector_store %arg20[%c1_21, %c17_22, %c0_23], %20 {strides = array<i32>} : memref<18x18x32xf32, #tpu.memory_space<vmem>>, vector<16x1x32xf32>,
    %22 = vector.shape_cast %13 : vector<256x32xf32> to vector<16x16x32xf32>
    %c1_24 = arith.constant 1 : index
    %c1_25 = arith.constant 1 : index
    %c0_26 = arith.constant 0 : index
    %23 = vector.load %arg20[%c1_24, %c1_25, %c0_26] : memref<18x18x32xf32, #tpu.memory_space<vmem>>, vector<16x16x32xf32>
    tpu.vector_store %arg20[%c1_24, %c1_25, %c0_26], %22 {strides = array<i32>} : memref<18x18x32xf32, #tpu.memory_space<vmem>>, vector<16x16x32xf32>,
    %cst_27 = arith.constant 0.000000e+00 : f32
    %24 = vector.broadcast %cst_27 : f32 to vector<256x32xf32>
    %c0_28 = arith.constant 0 : index
    %c0_29 = arith.constant 0 : index
    %c0_30 = arith.constant 0 : index
    %25 = vector.load %arg20[%c0_28, %c0_29, %c0_30] : memref<18x18x32xf32, #tpu.memory_space<vmem>>, vector<16x18x32xf32>
    %26 = vector.extract_strided_slice %25 {offsets = [0, 0, 0], sizes = [16, 16, 32], strides = [1, 1, 1]} : vector<16x18x32xf32> to vector<16x16x32xf32>
    %27 = vector.extract_strided_slice %25 {offsets = [0, 1, 0], sizes = [16, 16, 32], strides = [1, 1, 1]} : vector<16x18x32xf32> to vector<16x16x32xf32>
    %28 = vector.extract_strided_slice %25 {offsets = [0, 2, 0], sizes = [16, 16, 32], strides = [1, 1, 1]} : vector<16x18x32xf32> to vector<16x16x32xf32>
    %29 = tpu.concatenate %26, %27, %28 in 2 : vector<16x16x32xf32>, vector<16x16x32xf32>, vector<16x16x32xf32> -> vector<16x16x96xf32>
    %30 = arith.truncf %29 : vector<16x16x96xf32> to vector<16x16x96xbf16>
    %31 = vector.shape_cast %30 : vector<16x16x96xbf16> to vector<256x96xbf16>
    %c0_31 = arith.constant 0 : index
    %c0_32 = arith.constant 0 : index
    %c0_33 = arith.constant 0 : index
    %32 = vector.load %arg5[%c0_31, %c0_32, %c0_33] : memref<3x96x32xbf16, #tpu.memory_space<vmem>>, vector<1x96x32xbf16>
    %33 = vector.shape_cast %32 : vector<1x96x32xbf16> to vector<96x32xbf16>
    %cst_34 = arith.constant dense<0.000000e+00> : vector<256x32xf32>
    %34 = tpu.matmul %31, %33, %cst_34 {dimension_numbers = #tpu.dot_dimension_numbers<[1], [0], [0], [1], [0, 0, 1, 1], [], []>} : vector<256x96xbf16>, vector<96x32xbf16>, vector<256x32xf32> -> vector<256x32xf32>
    %35 = arith.addf %24, %34 : vector<256x32xf32>
    %c1_35 = arith.constant 1 : index
    %c0_36 = arith.constant 0 : index
    %c0_37 = arith.constant 0 : index
    %36 = vector.load %arg20[%c1_35, %c0_36, %c0_37] : memref<18x18x32xf32, #tpu.memory_space<vmem>>, vector<16x18x32xf32>
    %37 = vector.extract_strided_slice %36 {offsets = [0, 0, 0], sizes = [16, 16, 32], strides = [1, 1, 1]} : vector<16x18x32xf32> to vector<16x16x32xf32>
    %38 = vector.extract_strided_slice %36 {offsets = [0, 1, 0], sizes = [16, 16, 32], strides = [1, 1, 1]} : vector<16x18x32xf32> to vector<16x16x32xf32>
    %39 = vector.extract_strided_slice %36 {offsets = [0, 2, 0], sizes = [16, 16, 32], strides = [1, 1, 1]} : vector<16x18x32xf32> to vector<16x16x32xf32>
    %40 = tpu.concatenate %37, %38, %39 in 2 : vector<16x16x32xf32>, vector<16x16x32xf32>, vector<16x16x32xf32> -> vector<16x16x96xf32>
    %41 = arith.truncf %40 : vector<16x16x96xf32> to vector<16x16x96xbf16>
    %42 = vector.shape_cast %41 : vector<16x16x96xbf16> to vector<256x96xbf16>
    %c1_38 = arith.constant 1 : index
    %c0_39 = arith.constant 0 : index
    %c0_40 = arith.constant 0 : index
    %43 = vector.load %arg5[%c1_38, %c0_39, %c0_40] : memref<3x96x32xbf16, #tpu.memory_space<vmem>>, vector<1x96x32xbf16>
    %44 = vector.shape_cast %43 : vector<1x96x32xbf16> to vector<96x32xbf16>
    %cst_41 = arith.constant dense<0.000000e+00> : vector<256x32xf32>
    %45 = tpu.matmul %42, %44, %cst_41 {dimension_numbers = #tpu.dot_dimension_numbers<[1], [0], [0], [1], [0, 0, 1, 1], [], []>} : vector<256x96xbf16>, vector<96x32xbf16>, vector<256x32xf32> -> vector<256x32xf32>
    %46 = arith.addf %35, %45 : vector<256x32xf32>
    %c2 = arith.constant 2 : index
    %c0_42 = arith.constant 0 : index
    %c0_43 = arith.constant 0 : index
    %47 = vector.load %arg20[%c2, %c0_42, %c0_43] : memref<18x18x32xf32, #tpu.memory_space<vmem>>, vector<16x18x32xf32>
    %48 = vector.extract_strided_slice %47 {offsets = [0, 0, 0], sizes = [16, 16, 32], strides = [1, 1, 1]} : vector<16x18x32xf32> to vector<16x16x32xf32>
    %49 = vector.extract_strided_slice %47 {offsets = [0, 1, 0], sizes = [16, 16, 32], strides = [1, 1, 1]} : vector<16x18x32xf32> to vector<16x16x32xf32>
    %50 = vector.extract_strided_slice %47 {offsets = [0, 2, 0], sizes = [16, 16, 32], strides = [1, 1, 1]} : vector<16x18x32xf32> to vector<16x16x32xf32>
    %51 = tpu.concatenate %48, %49, %50 in 2 : vector<16x16x32xf32>, vector<16x16x32xf32>, vector<16x16x32xf32> -> vector<16x16x96xf32>
    %52 = arith.truncf %51 : vector<16x16x96xf32> to vector<16x16x96xbf16>
    %53 = vector.shape_cast %52 : vector<16x16x96xbf16> to vector<256x96xbf16>
    %c2_44 = arith.constant 2 : index
    %c0_45 = arith.constant 0 : index
    %c0_46 = arith.constant 0 : index
    %54 = vector.load %arg5[%c2_44, %c0_45, %c0_46] : memref<3x96x32xbf16, #tpu.memory_space<vmem>>, vector<1x96x32xbf16>
    %55 = vector.shape_cast %54 : vector<1x96x32xbf16> to vector<96x32xbf16>
    %cst_47 = arith.constant dense<0.000000e+00> : vector<256x32xf32>
    %56 = tpu.matmul %53, %55, %cst_47 {dimension_numbers = #tpu.dot_dimension_numbers<[1], [0], [0], [1], [0, 0, 1, 1], [], []>} : vector<256x96xbf16>, vector<96x32xbf16>, vector<256x32xf32> -> vector<256x32xf32>
    %57 = arith.addf %46, %56 : vector<256x32xf32>
    %c0_48 = arith.constant 0 : index
    %c0_49 = arith.constant 0 : index
    %58 = vector.load %arg6[%c0_48, %c0_49] : memref<1x32xf32, #tpu.memory_space<vmem>>, vector<1x32xf32>
    %59 = vector.broadcast %58 : vector<1x32xf32> to vector<256x32xf32>
    %60 = arith.mulf %57, %59 : vector<256x32xf32>
    %c0_50 = arith.constant 0 : index
    %c0_51 = arith.constant 0 : index
    %61 = vector.load %arg7[%c0_50, %c0_51] : memref<1x32xf32, #tpu.memory_space<vmem>>, vector<1x32xf32>
    %62 = vector.broadcast %61 : vector<1x32xf32> to vector<256x32xf32>
    %63 = arith.addf %60, %62 : vector<256x32xf32>
    %cst_52 = arith.constant 0.000000e+00 : f32
    %64 = vector.broadcast %cst_52 : f32 to vector<256x32xf32>
    %65 = arith.maximumf %63, %64 : vector<256x32xf32>
    %66 = arith.truncf %65 : vector<256x32xf32> to vector<256x32xbf16>
    %c0_53 = arith.constant 0 : index
    %c0_54 = arith.constant 0 : index
    %67 = vector.load %arg8[%c0_53, %c0_54] : memref<32x128xbf16, #tpu.memory_space<vmem>>, vector<32x128xbf16>
    %cst_55 = arith.constant dense<0.000000e+00> : vector<256x128xf32>
    %68 = tpu.matmul %66, %67, %cst_55 {dimension_numbers = #tpu.dot_dimension_numbers<[1], [0], [0], [1], [0, 0, 1, 1], [], []>} : vector<256x32xbf16>, vector<32x128xbf16>, vector<256x128xf32> -> vector<256x128xf32>
    %c0_56 = arith.constant 0 : index
    %c0_57 = arith.constant 0 : index
    %69 = vector.load %arg9[%c0_56, %c0_57] : memref<1x128xf32, #tpu.memory_space<vmem>>, vector<1x128xf32>
    %70 = vector.broadcast %69 : vector<1x128xf32> to vector<256x128xf32>
    %71 = arith.mulf %68, %70 : vector<256x128xf32>
    %c0_58 = arith.constant 0 : index
    %c0_59 = arith.constant 0 : index
    %72 = vector.load %arg10[%c0_58, %c0_59] : memref<1x128xf32, #tpu.memory_space<vmem>>, vector<1x128xf32>
    %73 = vector.broadcast %72 : vector<1x128xf32> to vector<256x128xf32>
    %74 = arith.addf %71, %73 : vector<256x128xf32>
    %c0_60 = arith.constant 0 : index
    %c0_61 = arith.constant 0 : index
    %c0_62 = arith.constant 0 : index
    %c0_63 = arith.constant 0 : index
    %75 = vector.load %arg1[%c0_60, %c0_61, %c0_62, %c0_63] : memref<1x16x16x128xf32, #tpu.memory_space<vmem>>, vector<1x16x16x128xf32>
    %76 = vector.shape_cast %75 : vector<1x16x16x128xf32> to vector<16x16x128xf32>
    %77 = vector.shape_cast %76 : vector<16x16x128xf32> to vector<256x128xf32>
    %78 = arith.addf %74, %77 : vector<256x128xf32>
    %cst_64 = arith.constant 0.000000e+00 : f32
    %79 = vector.broadcast %cst_64 : f32 to vector<256x128xf32>
    %80 = arith.maximumf %78, %79 : vector<256x128xf32>
    %81 = vector.shape_cast %80 : vector<256x128xf32> to vector<16x16x128xf32>
    %c0_65 = arith.constant 0 : index
    %c0_66 = arith.constant 0 : index
    %c0_67 = arith.constant 0 : index
    %c0_68 = arith.constant 0 : index
    %82 = vector.load %arg19[%c0_65, %c0_66, %c0_67, %c0_68] : memref<1x16x16x128xf32, #tpu.memory_space<vmem>>, vector<1x16x16x128xf32>
    %83 = vector.shape_cast %82 : vector<1x16x16x128xf32> to vector<16x16x128xf32>
    %84 = vector.shape_cast %81 : vector<16x16x128xf32> to vector<1x16x16x128xf32>
    tpu.vector_store %arg19[%c0_65, %c0_66, %c0_67, %c0_68], %84 {strides = array<i32>} : memref<1x16x16x128xf32, #tpu.memory_space<vmem>>, vector<1x16x16x128xf32>,
    return
  }
  func.func @transform_0(%arg0: i32) -> (i32, i32, i32, i32) {
    %c0_i32 = arith.constant 0 : i32
    %c0_i32_0 = arith.constant 0 : i32
    %c0_i32_1 = arith.constant 0 : i32
    %c0_i32_2 = arith.constant 0 : i32
    return %arg0, %c0_i32, %c0_i32_0, %c0_i32_1 : i32, i32, i32, i32
  }
  func.func @transform_1(%arg0: i32) -> (i32, i32) {
    %c0_i32 = arith.constant 0 : i32
    %c0_i32_0 = arith.constant 0 : i32
    %c0_i32_1 = arith.constant 0 : i32
    return %c0_i32, %c0_i32_0 : i32, i32
  }
  func.func @transform_2(%arg0: i32) -> (i32, i32) {
    %c0_i32 = arith.constant 0 : i32
    %c0_i32_0 = arith.constant 0 : i32
    %c0_i32_1 = arith.constant 0 : i32
    return %c0_i32, %c0_i32_0 : i32, i32
  }
  func.func @transform_3(%arg0: i32) -> (i32, i32) {
    %c0_i32 = arith.constant 0 : i32
    %c0_i32_0 = arith.constant 0 : i32
    %c0_i32_1 = arith.constant 0 : i32
    return %c0_i32, %c0_i32_0 : i32, i32
  }
  func.func @transform_4(%arg0: i32) -> (i32, i32, i32) {
    %c0_i32 = arith.constant 0 : i32
    %c0_i32_0 = arith.constant 0 : i32
    %c0_i32_1 = arith.constant 0 : i32
    %c0_i32_2 = arith.constant 0 : i32
    return %c0_i32, %c0_i32_0, %c0_i32_1 : i32, i32, i32
  }
  func.func @transform_5(%arg0: i32) -> (i32, i32) {
    %c0_i32 = arith.constant 0 : i32
    %c0_i32_0 = arith.constant 0 : i32
    %c0_i32_1 = arith.constant 0 : i32
    return %c0_i32, %c0_i32_0 : i32, i32
  }
  func.func @transform_6(%arg0: i32) -> (i32, i32) {
    %c0_i32 = arith.constant 0 : i32
    %c0_i32_0 = arith.constant 0 : i32
    %c0_i32_1 = arith.constant 0 : i32
    return %c0_i32, %c0_i32_0 : i32, i32
  }
  func.func @transform_7(%arg0: i32) -> (i32, i32) {
    %c0_i32 = arith.constant 0 : i32
    %c0_i32_0 = arith.constant 0 : i32
    %c0_i32_1 = arith.constant 0 : i32
    return %c0_i32, %c0_i32_0 : i32, i32
  }
  func.func @transform_8(%arg0: i32) -> (i32, i32) {
    %c0_i32 = arith.constant 0 : i32
    %c0_i32_0 = arith.constant 0 : i32
    %c0_i32_1 = arith.constant 0 : i32
    return %c0_i32, %c0_i32_0 : i32, i32
  }
  func.func @transform_9(%arg0: i32) -> (i32, i32) {
    %c0_i32 = arith.constant 0 : i32
    %c0_i32_0 = arith.constant 0 : i32
    %c0_i32_1 = arith.constant 0 : i32
    return %c0_i32, %c0_i32_0 : i32, i32
  }
  func.func @transform_10(%arg0: i32) -> (i32, i32) {
    %c0_i32 = arith.constant 0 : i32
    %c0_i32_0 = arith.constant 0 : i32
    %c0_i32_1 = arith.constant 0 : i32
    return %c0_i32, %c0_i32_0 : i32, i32
  }
  func.func @transform_11(%arg0: i32) -> (i32, i32) {
    %c0_i32 = arith.constant 0 : i32
    %c0_i32_0 = arith.constant 0 : i32
    %c0_i32_1 = arith.constant 0 : i32
    return %c0_i32, %c0_i32_0 : i32, i32
  }
  func.func @transform_12(%arg0: i32) -> (i32, i32) {
    %c0_i32 = arith.constant 0 : i32
    %c0_i32_0 = arith.constant 0 : i32
    %c0_i32_1 = arith.constant 0 : i32
    return %c0_i32, %c0_i32_0 : i32, i32
  }
  func.func @transform_13(%arg0: i32) -> (i32, i32) {
    %c0_i32 = arith.constant 0 : i32
    %c0_i32_0 = arith.constant 0 : i32
    %c0_i32_1 = arith.constant 0 : i32
    return %c0_i32, %c0_i32_0 : i32, i32
  }
  func.func @transform_14(%arg0: i32) -> (i32, i32) {
    %c0_i32 = arith.constant 0 : i32
    %c0_i32_0 = arith.constant 0 : i32
    %c0_i32_1 = arith.constant 0 : i32
    return %c0_i32, %c0_i32_0 : i32, i32
  }
  func.func @transform_15(%arg0: i32) -> (i32, i32) {
    %c0_i32 = arith.constant 0 : i32
    %c0_i32_0 = arith.constant 0 : i32
    %c0_i32_1 = arith.constant 0 : i32
    return %c0_i32, %c0_i32_0 : i32, i32
  }
  func.func @transform_16(%arg0: i32) -> (i32, i32) {
    %c0_i32 = arith.constant 0 : i32
    %c0_i32_0 = arith.constant 0 : i32
    %c0_i32_1 = arith.constant 0 : i32
    return %c0_i32, %c0_i32_0 : i32, i32
  }
  func.func @transform_17(%arg0: i32) -> (i32, i32) {
    %c0_i32 = arith.constant 0 : i32
    %c0_i32_0 = arith.constant 0 : i32
    %c0_i32_1 = arith.constant 0 : i32
    return %c0_i32, %c0_i32_0 : i32, i32
  }
  func.func @transform_18(%arg0: i32) -> (i32, i32, i32, i32) {
    %c0_i32 = arith.constant 0 : i32
    %c0_i32_0 = arith.constant 0 : i32
    %c0_i32_1 = arith.constant 0 : i32
    %c0_i32_2 = arith.constant 0 : i32
    return %arg0, %c0_i32, %c0_i32_0, %c0_i32_1 : i32, i32, i32, i32
  }
}

</mosaic_0001>

<llo_original>
// kernel: tpu_custom_call.1
$region0: #{tpu_custom_call.1}
  #allocation0 [shape = 'u32[]', space=smem, size = 0x4, offset = 0x4, fixed_abs, tag = 'smem constant byte address 0x4 - core index']
  #allocation1 [shape = 'u32[144,128]{1,0:T(1,128)}', space=vmem, size = 0x12000, scoped, tag = 'internal scratch']
  #allocation2 [shape = 'f32[18,18,32]{2,1,0:T(8,128)}', space=vmem, size = 0x36000, scoped, tag = 'scratch operand']
  #allocation3 [shape = 'f32[18,32]{1,0:T(8,128)}', space=vmem, size = 0x3000, scoped, tag = 'scratch operand']
  #allocation4 [shape = 'f32[18,32]{1,0:T(8,128)}', space=vmem, size = 0x3000, scoped, tag = 'scratch operand']
  %s0 = inlined_call_operand.hbm [shape: f32[2,16,16,128], index: 0, kind: input, shape index: {}]
  %s1 = inlined_call_operand.vmem [shape: bf16[128,32], index: 1, kind: input, shape index: {}]
  %s2 = inlined_call_operand.vmem [shape: f32[1,32], index: 2, kind: input, shape index: {}]
  %s3 = inlined_call_operand.vmem [shape: f32[1,32], index: 3, kind: input, shape index: {}]
  %s4 = inlined_call_operand.vmem [shape: bf16[3,96,32], index: 4, kind: input, shape index: {}]
  %s5 = inlined_call_operand.vmem [shape: f32[1,32], index: 5, kind: input, shape index: {}]
  %s6 = inlined_call_operand.vmem [shape: f32[1,32], index: 6, kind: input, shape index: {}]
  %s7 = inlined_call_operand.vmem [shape: bf16[32,128], index: 7, kind: input, shape index: {}]
  %s8 = inlined_call_operand.vmem [shape: f32[1,128], index: 8, kind: input, shape index: {}]
  %s9 = inlined_call_operand.vmem [shape: f32[1,128], index: 9, kind: input, shape index: {}]
  %s10 = inlined_call_operand.vmem [shape: bf16[96,32], index: 10, kind: input, shape index: {}]
  %s11 = inlined_call_operand.vmem [shape: f32[1,32], index: 11, kind: input, shape index: {}]
  %s12 = inlined_call_operand.vmem [shape: f32[1,32], index: 12, kind: input, shape index: {}]
  %s13 = inlined_call_operand.vmem [shape: bf16[96,32], index: 13, kind: input, shape index: {}]
  %s14 = inlined_call_operand.vmem [shape: f32[1,32], index: 14, kind: input, shape index: {}]
  %s15 = inlined_call_operand.vmem [shape: f32[1,32], index: 15, kind: input, shape index: {}]
  %s16 = inlined_call_operand.vmem [shape: bf16[32,32], index: 16, kind: input, shape index: {}]
  %s17 = inlined_call_operand.vmem [shape: f32[1,32], index: 17, kind: input, shape index: {}]
  %s18 = inlined_call_operand.hbm [shape: f32[2,16,16,128], index: 18, kind: output, shape index: {}]
  %s19 = sld [smem:[#allocation0]]
  $region109: #{tpu_custom_call.1} parent=0
    _
  %s21 = ssub.s32 1, %s19
  %s22 = scalar_select 0, %s21, %s19
  $region1: #{tpu_custom_call.1} parent=0
    #allocation5 [shape = 'u8[262144]{0}', space=vmem, size = 0x40000, scoped, tag = 'input window, operand 0']
    #allocation6 [shape = 's32[2]{0}', space=sflag, size = 0x8, scoped, tag = 'scoped memory for tpu_custom_call.1']
    #allocation7 [shape = 's32[2]{0}', space=sflag, size = 0x8, scoped, tag = 'scoped memory for tpu_custom_call.1']
    #allocation8 [shape = 'u8[262144]{0}', space=vmem, size = 0x40000, scoped, tag = 'output window, operand 0']
    %23 = vsyncpa [#allocation6], 0
    %s24 = scalar_lea.sflag [#allocation6], 1
    %25 = vsyncpa %s24, 0
    %26 = vsyncpa [#allocation7], 0
    %s27 = scalar_lea.sflag [#allocation7], 1
    %28 = vsyncpa %s27, 0
    loop: start=0, step=1, limit=4
    $region2: #{tpu_custom_call.1} parent=1 // loop_pre_header
      _
    $region3: #{tpu_custom_call.1} parent=1 // loop_header
      %s30 = sphi 0, %s34
      %p31 = scmp.ge.s32.totalorder %s30, 4
      %s40 = sphi 0, %s42
      %s43 = sphi 0, %s40
      %s44 = sphi 0, %s43
      %s60 = sphi 0, %s44
      %s64 = sphi 0, %s64
      %s66 = sphi 0, %s64
      %s67 = sphi 0, %s66
      %s81 = sphi 0, %s67
      %s85 = sphi 0, %s85
      %s87 = sphi 0, %s85
      %s88 = sphi 0, %s87
      %s102 = sphi 0, %s88
      %s106 = sphi 0, %s106
      %s108 = sphi 0, %s106
      %s109 = sphi 0, %s108
      %s123 = sphi 0, %s109
      %s127 = sphi 0, %s127
      %s129 = sphi 0, %s127
      %s130 = sphi 0, %s129
      %s144 = sphi 0, %s130
      %s148 = sphi 0, %s148
      %s150 = sphi 0, %s148
      %s151 = sphi 0, %s150
      %s165 = sphi 0, %s151
      %s169 = sphi 0, %s169
      %s171 = sphi 0, %s169
      %s172 = sphi 0, %s171
      %s186 = sphi 0, %s172
      %s190 = sphi 0, %s190
      %s192 = sphi 0, %s190
      %s193 = sphi 0, %s192
      %s207 = sphi 0, %s193
      %s211 = sphi 0, %s211
      %s213 = sphi 0, %s211
      %s214 = sphi 0, %s213
      %s228 = sphi 0, %s214
      %s232 = sphi 0, %s232
      %s234 = sphi 0, %s232
      %s235 = sphi 0, %s234
      %s249 = sphi 0, %s235
      %s253 = sphi 0, %s253
      %s255 = sphi 0, %s253
      %s256 = sphi 0, %s255
      %s270 = sphi 0, %s256
      %s274 = sphi 0, %s274
      %s276 = sphi 0, %s274
      %s277 = sphi 0, %s276
      %s291 = sphi 0, %s277
      %s295 = sphi 0, %s295
      %s297 = sphi 0, %s295
      %s298 = sphi 0, %s297
      %s312 = sphi 0, %s298
      %s316 = sphi 0, %s316
      %s318 = sphi 0, %s316
      %s319 = sphi 0, %s318
      %s333 = sphi 0, %s319
      %s337 = sphi 0, %s337
      %s339 = sphi 0, %s337
      %s340 = sphi 0, %s339
      %s354 = sphi 0, %s340
      %s358 = sphi 0, %s358
      %s360 = sphi 0, %s358
      %s361 = sphi 0, %s360
      %s375 = sphi 0, %s361
      %s379 = sphi 0, %s379
      %s381 = sphi 0, %s379
      %s382 = sphi 0, %s381
      %s396 = sphi 0, %s382
      %s400 = sphi 0, %s400
      %s402 = sphi 0, %s400
      %s403 = sphi 0, %s402
      %s417 = sphi 0, %s403
      %s423 = sphi 0, %s425
      %s426 = sphi 0, %s423
      %s427 = sphi 0, %s426
      %s443 = sphi 0, %s427
    $region4: #{tpu_custom_call.1} parent=1 // loop_header_branch
      %33 = sbr.rel (%p31) target = $region8
    $region5: #{tpu_custom_call.1} parent=1 // loop_body
      %s35 = ssub.s32 %s30, 1
      %s36 = ssub.s32 %s30, 2
      %s37 = sadd.s32 %s30, 1
      %s38 = ssub.s32 %s30, %s37
      %p39 = scmp.eq.s32.totalorder %s38, 0
      %s41 = sadd.s32 %s40, 1
      %s42 = scalar_select %p39, %s40, %s41
      %p45 = pneg %p39
      %p46 = scmp.eq.s32.totalorder %s30, 1
      %p47 = por %p45, %p46
      %p48 = scmp.ne.s32.totalorder %s40, %s43
      %p49 = scmp.eq.s32.totalorder %s30, 0
      %p50 = por %p48, %p49
      %p51 = scmp.ne.s32.totalorder %s40, %s43
      %p52 = scmp.eq.s32.totalorder %s35, 1
      %p53 = por %p51, %p52
      %p54 = scmp.ne.s32.totalorder %s43, %s44
      %p55 = scmp.eq.s32.totalorder %s35, 0
      %p56 = por %p54, %p55
      %p57 = scmp.ne.s32.totalorder %s43, %s44
      %p58 = scmp.eq.s32.totalorder %s36, 1
      %p59 = por %p57, %p58
      %p61 = scmp.ne.s32.totalorder %s44, %s60
      %p62 = scmp.eq.s32.totalorder %s36, 0
      %p63 = por %p61, %p62
      %s65 = sadd.s32 %s64, 1
      %p68 = scmp.eq.s32.totalorder %s30, 1
      %p69 = scmp.ne.s32.totalorder %s64, %s66
      %p70 = scmp.eq.s32.totalorder %s30, 0
      %p71 = por %p69, %p70
      %p72 = scmp.ne.s32.totalorder %s64, %s66
      %p73 = scmp.eq.s32.totalorder %s35, 1
      %p74 = por %p72, %p73
      %p75 = scmp.ne.s32.totalorder %s66, %s67
      %p76 = scmp.eq.s32.totalorder %s35, 0
      %p77 = por %p75, %p76
      %p78 = scmp.ne.s32.totalorder %s66, %s67
      %p79 = scmp.eq.s32.totalorder %s36, 1
      %p80 = por %p78, %p79
      %p82 = scmp.ne.s32.totalorder %s67, %s81
      %p83 = scmp.eq.s32.totalorder %s36, 0
      %p84 = por %p82, %p83
      %s86 = sadd.s32 %s85, 1
      %p89 = scmp.eq.s32.totalorder %s30, 1
      %p90 = scmp.ne.s32.totalorder %s85, %s87
      %p91 = scmp.eq.s32.totalorder %s30, 0
      %p92 = por %p90, %p91
      %p93 = scmp.ne.s32.totalorder %s85, %s87
      %p94 = scmp.eq.s32.totalorder %s35, 1
      %p95 = por %p93, %p94
      %p96 = scmp.ne.s32.totalorder %s87, %s88
      %p97 = scmp.eq.s32.totalorder %s35, 0
      %p98 = por %p96, %p97
      %p99 = scmp.ne.s32.totalorder %s87, %s88
      %p100 = scmp.eq.s32.totalorder %s36, 1
      %p101 = por %p99, %p100
      %p103 = scmp.ne.s32.totalorder %s88, %s102
      %p104 = scmp.eq.s32.totalorder %s36, 0
      %p105 = por %p103, %p104
      %s107 = sadd.s32 %s106, 1
      %p110 = scmp.eq.s32.totalorder %s30, 1
      %p111 = scmp.ne.s32.totalorder %s106, %s108
      %p112 = scmp.eq.s32.totalorder %s30, 0
      %p113 = por %p111, %p112
      %p114 = scmp.ne.s32.totalorder %s106, %s108
      %p115 = scmp.eq.s32.totalorder %s35, 1
      %p116 = por %p114, %p115
      %p117 = scmp.ne.s32.totalorder %s108, %s109
      %p118 = scmp.eq.s32.totalorder %s35, 0
      %p119 = por %p117, %p118
      %p120 = scmp.ne.s32.totalorder %s108, %s109
      %p121 = scmp.eq.s32.totalorder %s36, 1
      %p122 = por %p120, %p121
      %p124 = scmp.ne.s32.totalorder %s109, %s123
      %p125 = scmp.eq.s32.totalorder %s36, 0
      %p126 = por %p124, %p125
      %s128 = sadd.s32 %s127, 1
      %p131 = scmp.eq.s32.totalorder %s30, 1
      %p132 = scmp.ne.s32.totalorder %s127, %s129
      %p133 = scmp.eq.s32.totalorder %s30, 0
      %p134 = por %p132, %p133
      %p135 = scmp.ne.s32.totalorder %s127, %s129
      %p136 = scmp.eq.s32.totalorder %s35, 1
      %p137 = por %p135, %p136
      %p138 = scmp.ne.s32.totalorder %s129, %s130
      %p139 = scmp.eq.s32.totalorder %s35, 0
      %p140 = por %p138, %p139
      %p141 = scmp.ne.s32.totalorder %s129, %s130
      %p142 = scmp.eq.s32.totalorder %s36, 1
      %p143 = por %p141, %p142
      %p145 = scmp.ne.s32.totalorder %s130, %s144
      %p146 = scmp.eq.s32.totalorder %s36, 0
      %p147 = por %p145, %p146
      %s149 = sadd.s32 %s148, 1
      %p152 = scmp.eq.s32.totalorder %s30, 1
      %p153 = scmp.ne.s32.totalorder %s148, %s150
      %p154 = scmp.eq.s32.totalorder %s30, 0
      %p155 = por %p153, %p154
      %p156 = scmp.ne.s32.totalorder %s148, %s150
      %p157 = scmp.eq.s32.totalorder %s35, 1
      %p158 = por %p156, %p157
      %p159 = scmp.ne.s32.totalorder %s150, %s151
      %p160 = scmp.eq.s32.totalorder %s35, 0
      %p161 = por %p159, %p160
      %p162 = scmp.ne.s32.totalorder %s150, %s151
      %p163 = scmp.eq.s32.totalorder %s36, 1
      %p164 = por %p162, %p163
      %p166 = scmp.ne.s32.totalorder %s151, %s165
      %p167 = scmp.eq.s32.totalorder %s36, 0
      %p168 = por %p166, %p167
      %s170 = sadd.s32 %s169, 1
      %p173 = scmp.eq.s32.totalorder %s30, 1
      %p174 = scmp.ne.s32.totalorder %s169, %s171
      %p175 = scmp.eq.s32.totalorder %s30, 0
      %p176 = por %p174, %p175
      %p177 = scmp.ne.s32.totalorder %s169, %s171
      %p178 = scmp.eq.s32.totalorder %s35, 1
      %p179 = por %p177, %p178
      %p180 = scmp.ne.s32.totalorder %s171, %s172
      %p181 = scmp.eq.s32.totalorder %s35, 0
      %p182 = por %p180, %p181
      %p183 = scmp.ne.s32.totalorder %s171, %s172
      %p184 = scmp.eq.s32.totalorder %s36, 1
      %p185 = por %p183, %p184
      %p187 = scmp.ne.s32.totalorder %s172, %s186
      %p188 = scmp.eq.s32.totalorder %s36, 0
      %p189 = por %p187, %p188
      %s191 = sadd.s32 %s190, 1
      %p194 = scmp.eq.s32.totalorder %s30, 1
      %p195 = scmp.ne.s32.totalorder %s190, %s192
      %p196 = scmp.eq.s32.totalorder %s30, 0
      %p197 = por %p195, %p196
      %p198 = scmp.ne.s32.totalorder %s190, %s192
      %p199 = scmp.eq.s32.totalorder %s35, 1
      %p200 = por %p198, %p199
      %p201 = scmp.ne.s32.totalorder %s192, %s193
      %p202 = scmp.eq.s32.totalorder %s35, 0
      %p203 = por %p201, %p202
      %p204 = scmp.ne.s32.totalorder %s192, %s193
      %p205 = scmp.eq.s32.totalorder %s36, 1
      %p206 = por %p204, %p205
      %p208 = scmp.ne.s32.totalorder %s193, %s207
      %p209 = scmp.eq.s32.totalorder %s36, 0
      %p210 = por %p208, %p209
      %s212 = sadd.s32 %s211, 1
      %p215 = scmp.eq.s32.totalorder %s30, 1
      %p216 = scmp.ne.s32.totalorder %s211, %s213
      %p217 = scmp.eq.s32.totalorder %s30, 0
      %p218 = por %p216, %p217
      %p219 = scmp.ne.s32.totalorder %s211, %s213
      %p220 = scmp.eq.s32.totalorder %s35, 1
      %p221 = por %p219, %p220
      %p222 = scmp.ne.s32.totalorder %s213, %s214
      %p223 = scmp.eq.s32.totalorder %s35, 0
      %p224 = por %p222, %p223
      %p225 = scmp.ne.s32.totalorder %s213, %s214
      %p226 = scmp.eq.s32.totalorder %s36, 1
      %p227 = por %p225, %p226
      %p229 = scmp.ne.s32.totalorder %s214, %s228
      %p230 = scmp.eq.s32.totalorder %s36, 0
      %p231 = por %p229, %p230
      %s233 = sadd.s32 %s232, 1
      %p236 = scmp.eq.s32.totalorder %s30, 1
      %p237 = scmp.ne.s32.totalorder %s232, %s234
      %p238 = scmp.eq.s32.totalorder %s30, 0
      %p239 = por %p237, %p238
      %p240 = scmp.ne.s32.totalorder %s232, %s234
      %p241 = scmp.eq.s32.totalorder %s35, 1
      %p242 = por %p240, %p241
      %p243 = scmp.ne.s32.totalorder %s234, %s235
      %p244 = scmp.eq.s32.totalorder %s35, 0
      %p245 = por %p243, %p244
      %p246 = scmp.ne.s32.totalorder %s234, %s235
      %p247 = scmp.eq.s32.totalorder %s36, 1
      %p248 = por %p246, %p247
      %p250 = scmp.ne.s32.totalorder %s235, %s249
      %p251 = scmp.eq.s32.totalorder %s36, 0
      %p252 = por %p250, %p251
      %s254 = sadd.s32 %s253, 1
      %p257 = scmp.eq.s32.totalorder %s30, 1
      %p258 = scmp.ne.s32.totalorder %s253, %s255
      %p259 = scmp.eq.s32.totalorder %s30, 0
      %p260 = por %p258, %p259
      %p261 = scmp.ne.s32.totalorder %s253, %s255
      %p262 = scmp.eq.s32.totalorder %s35, 1
      %p263 = por %p261, %p262
      %p264 = scmp.ne.s32.totalorder %s255, %s256
      %p265 = scmp.eq.s32.totalorder %s35, 0
      %p266 = por %p264, %p265
      %p267 = scmp.ne.s32.totalorder %s255, %s256
      %p268 = scmp.eq.s32.totalorder %s36, 1
      %p269 = por %p267, %p268
      %p271 = scmp.ne.s32.totalorder %s256, %s270
      %p272 = scmp.eq.s32.totalorder %s36, 0
      %p273 = por %p271, %p272
      %s275 = sadd.s32 %s274, 1
      %p278 = scmp.eq.s32.totalorder %s30, 1
      %p279 = scmp.ne.s32.totalorder %s274, %s276
      %p280 = scmp.eq.s32.totalorder %s30, 0
      %p281 = por %p279, %p280
      %p282 = scmp.ne.s32.totalorder %s274, %s276
      %p283 = scmp.eq.s32.totalorder %s35, 1
      %p284 = por %p282, %p283
      %p285 = scmp.ne.s32.totalorder %s276, %s277
      %p286 = scmp.eq.s32.totalorder %s35, 0
      %p287 = por %p285, %p286
      %p288 = scmp.ne.s32.totalorder %s276, %s277
      %p289 = scmp.eq.s32.totalorder %s36, 1
      %p290 = por %p288, %p289
      %p292 = scmp.ne.s32.totalorder %s277, %s291
      %p293 = scmp.eq.s32.totalorder %s36, 0
      %p294 = por %p292, %p293
      %s296 = sadd.s32 %s295, 1
      %p299 = scmp.eq.s32.totalorder %s30, 1
      %p300 = scmp.ne.s32.totalorder %s295, %s297
      %p301 = scmp.eq.s32.totalorder %s30, 0
      %p302 = por %p300, %p301
      %p303 = scmp.ne.s32.totalorder %s295, %s297
      %p304 = scmp.eq.s32.totalorder %s35, 1
      %p305 = por %p303, %p304
      %p306 = scmp.ne.s32.totalorder %s297, %s298
      %p307 = scmp.eq.s32.totalorder %s35, 0
      %p308 = por %p306, %p307
      %p309 = scmp.ne.s32.totalorder %s297, %s298
      %p310 = scmp.eq.s32.totalorder %s36, 1
      %p311 = por %p309, %p310
      %p313 = scmp.ne.s32.totalorder %s298, %s312
      %p314 = scmp.eq.s32.totalorder %s36, 0
      %p315 = por %p313, %p314
      %s317 = sadd.s32 %s316, 1
      %p320 = scmp.eq.s32.totalorder %s30, 1
      %p321 = scmp.ne.s32.totalorder %s316, %s318
      %p322 = scmp.eq.s32.totalorder %s30, 0
      %p323 = por %p321, %p322
      %p324 = scmp.ne.s32.totalorder %s316, %s318
      %p325 = scmp.eq.s32.totalorder %s35, 1
      %p326 = por %p324, %p325
      %p327 = scmp.ne.s32.totalorder %s318, %s319
      %p328 = scmp.eq.s32.totalorder %s35, 0
      %p329 = por %p327, %p328
      %p330 = scmp.ne.s32.totalorder %s318, %s319
      %p331 = scmp.eq.s32.totalorder %s36, 1
      %p332 = por %p330, %p331
      %p334 = scmp.ne.s32.totalorder %s319, %s333
      %p335 = scmp.eq.s32.totalorder %s36, 0
      %p336 = por %p334, %p335
      %s338 = sadd.s32 %s337, 1
      %p341 = scmp.eq.s32.totalorder %s30, 1
      %p342 = scmp.ne.s32.totalorder %s337, %s339
      %p343 = scmp.eq.s32.totalorder %s30, 0
      %p344 = por %p342, %p343
      %p345 = scmp.ne.s32.totalorder %s337, %s339
      %p346 = scmp.eq.s32.totalorder %s35, 1
      %p347 = por %p345, %p346
      %p348 = scmp.ne.s32.totalorder %s339, %s340
      %p349 = scmp.eq.s32.totalorder %s35, 0
      %p350 = por %p348, %p349
      %p351 = scmp.ne.s32.totalorder %s339, %s340
      %p352 = scmp.eq.s32.totalorder %s36, 1
      %p353 = por %p351, %p352
      %p355 = scmp.ne.s32.totalorder %s340, %s354
      %p356 = scmp.eq.s32.totalorder %s36, 0
      %p357 = por %p355, %p356
      %s359 = sadd.s32 %s358, 1
      %p362 = scmp.eq.s32.totalorder %s30, 1
      %p363 = scmp.ne.s32.totalorder %s358, %s360
      %p364 = scmp.eq.s32.totalorder %s30, 0
      %p365 = por %p363, %p364
      %p366 = scmp.ne.s32.totalorder %s358, %s360
      %p367 = scmp.eq.s32.totalorder %s35, 1
      %p368 = por %p366, %p367
      %p369 = scmp.ne.s32.totalorder %s360, %s361
      %p370 = scmp.eq.s32.totalorder %s35, 0
      %p371 = por %p369, %p370
      %p372 = scmp.ne.s32.totalorder %s360, %s361
      %p373 = scmp.eq.s32.totalorder %s36, 1
      %p374 = por %p372, %p373
      %p376 = scmp.ne.s32.totalorder %s361, %s375
      %p377 = scmp.eq.s32.totalorder %s36, 0
      %p378 = por %p376, %p377
      %s380 = sadd.s32 %s379, 1
      %p383 = scmp.eq.s32.totalorder %s30, 1
      %p384 = scmp.ne.s32.totalorder %s379, %s381
      %p385 = scmp.eq.s32.totalorder %s30, 0
      %p386 = por %p384, %p385
      %p387 = scmp.ne.s32.totalorder %s379, %s381
      %p388 = scmp.eq.s32.totalorder %s35, 1
      %p389 = por %p387, %p388
      %p390 = scmp.ne.s32.totalorder %s381, %s382
      %p391 = scmp.eq.s32.totalorder %s35, 0
      %p392 = por %p390, %p391
      %p393 = scmp.ne.s32.totalorder %s381, %s382
      %p394 = scmp.eq.s32.totalorder %s36, 1
      %p395 = por %p393, %p394
      %p397 = scmp.ne.s32.totalorder %s382, %s396
      %p398 = scmp.eq.s32.totalorder %s36, 0
      %p399 = por %p397, %p398
      %s401 = sadd.s32 %s400, 1
      %p404 = scmp.eq.s32.totalorder %s30, 1
      %p405 = scmp.ne.s32.totalorder %s400, %s402
      %p406 = scmp.eq.s32.totalorder %s30, 0
      %p407 = por %p405, %p406
      %p408 = scmp.ne.s32.totalorder %s400, %s402
      %p409 = scmp.eq.s32.totalorder %s35, 1
      %p410 = por %p408, %p409
      %p411 = scmp.ne.s32.totalorder %s402, %s403
      %p412 = scmp.eq.s32.totalorder %s35, 0
      %p413 = por %p411, %p412
      %p414 = scmp.ne.s32.totalorder %s402, %s403
      %p415 = scmp.eq.s32.totalorder %s36, 1
      %p416 = por %p414, %p415
      %p418 = scmp.ne.s32.totalorder %s403, %s417
      %p419 = scmp.eq.s32.totalorder %s36, 0
      %p420 = por %p418, %p419
      %s421 = ssub.s32 %s30, %s37
      %p422 = scmp.eq.s32.totalorder %s421, 0
      %s424 = sadd.s32 %s423, 1
      %s425 = scalar_select %p422, %s423, %s424
      %p428 = pneg %p422
      %p429 = scmp.eq.s32.totalorder %s30, 1
      %p430 = por %p428, %p429
      %p431 = scmp.ne.s32.totalorder %s423, %s426
      %p432 = scmp.eq.s32.totalorder %s30, 0
      %p433 = por %p431, %p432
      %p434 = scmp.ne.s32.totalorder %s423, %s426
      %p435 = scmp.eq.s32.totalorder %s35, 1
      %p436 = por %p434, %p435
      %p437 = scmp.ne.s32.totalorder %s426, %s427
      %p438 = scmp.eq.s32.totalorder %s35, 0
      %p439 = por %p437, %p438
      %p440 = scmp.ne.s32.totalorder %s426, %s427
      %p441 = scmp.eq.s32.totalorder %s36, 1
      %p442 = por %p440, %p441
      %p444 = scmp.ne.s32.totalorder %s427, %s443
      %p445 = scmp.eq.s32.totalorder %s36, 0
      %p446 = por %p444, %p445
      %p447 = scmp.le.s32.totalorder 1, %s30
      %p448 = scmp.lt.s32.totalorder %s30, 3
      %p449 = pnand %p447, %p448
      %p450 = pneg %p449
      // Predicated region
      $region9: #{tpu_custom_call.1} parent=5 // pred_check
        _
      $region10: #{tpu_custom_call.1} parent=5 // pred_check_branch
        %452 = sbr.rel (%p449) target = $region12
      $region11: #{tpu_custom_call.1} parent=5 // pred_region
        %s453 = ssub.s32 %s30, 1
        // Predicated region
        $region13: #{tpu_custom_call.1} parent=11 // pred_check
          %p454 = pneg %p77
        $region14: #{tpu_custom_call.1} parent=11 // pred_check_branch
          %456 = sbr.rel (%p454) target = $region16
        $region15: #{tpu_custom_call.1} parent=11 // pred_region
          _
        $region16: #{tpu_custom_call.1} parent=11 // pred_fallthru
          _
        // Predicated region
        $region17: #{tpu_custom_call.1} parent=11 // pred_check
          %p457 = pneg %p98
        $region18: #{tpu_custom_call.1} parent=11 // pred_check_branch
          %459 = sbr.rel (%p457) target = $region20
        $region19: #{tpu_custom_call.1} parent=11 // pred_region
          _
        $region20: #{tpu_custom_call.1} parent=11 // pred_fallthru
          _
        // Predicated region
        $region21: #{tpu_custom_call.1} parent=11 // pred_check
          %p460 = pneg %p119
        $region22: #{tpu_custom_call.1} parent=11 // pred_check_branch
          %462 = sbr.rel (%p460) target = $region24
        $region23: #{tpu_custom_call.1} parent=11 // pred_region
          _
        $region24: #{tpu_custom_call.1} parent=11 // pred_fallthru
          _
        // Predicated region
        $region25: #{tpu_custom_call.1} parent=11 // pred_check
          %p463 = pneg %p140
        $region26: #{tpu_custom_call.1} parent=11 // pred_check_branch
          %465 = sbr.rel (%p463) target = $region28
        $region27: #{tpu_custom_call.1} parent=11 // pred_region
          _
        $region28: #{tpu_custom_call.1} parent=11 // pred_fallthru
          _
        // Predicated region
        $region29: #{tpu_custom_call.1} parent=11 // pred_check
          %p466 = pneg %p161
        $region30: #{tpu_custom_call.1} parent=11 // pred_check_branch
          %468 = sbr.rel (%p466) target = $region32
        $region31: #{tpu_custom_call.1} parent=11 // pred_region
          _
        $region32: #{tpu_custom_call.1} parent=11 // pred_fallthru
          _
        // Predicated region
        $region33: #{tpu_custom_call.1} parent=11 // pred_check
          %p469 = pneg %p182
        $region34: #{tpu_custom_call.1} parent=11 // pred_check_branch
          %471 = sbr.rel (%p469) target = $region36
        $region35: #{tpu_custom_call.1} parent=11 // pred_region
          _
        $region36: #{tpu_custom_call.1} parent=11 // pred_fallthru
          _
        // Predicated region
        $region37: #{tpu_custom_call.1} parent=11 // pred_check
          %p472 = pneg %p203
        $region38: #{tpu_custom_call.1} parent=11 // pred_check_branch
          %474 = sbr.rel (%p472) target = $region40
        $region39: #{tpu_custom_call.1} parent=11 // pred_region
          _
        $region40: #{tpu_custom_call.1} parent=11 // pred_fallthru
          _
        // Predicated region
        $region41: #{tpu_custom_call.1} parent=11 // pred_check
          %p475 = pneg %p224
        $region42: #{tpu_custom_call.1} parent=11 // pred_check_branch
          %477 = sbr.rel (%p475) target = $region44
        $region43: #{tpu_custom_call.1} parent=11 // pred_region
          _
        $region44: #{tpu_custom_call.1} parent=11 // pred_fallthru
          _
        // Predicated region
        $region45: #{tpu_custom_call.1} parent=11 // pred_check
          %p478 = pneg %p245
        $region46: #{tpu_custom_call.1} parent=11 // pred_check_branch
          %480 = sbr.rel (%p478) target = $region48
        $region47: #{tpu_custom_call.1} parent=11 // pred_region
          _
        $region48: #{tpu_custom_call.1} parent=11 // pred_fallthru
          _
        // Predicated region
        $region49: #{tpu_custom_call.1} parent=11 // pred_check
          %p481 = pneg %p266
        $region50: #{tpu_custom_call.1} parent=11 // pred_check_branch
          %483 = sbr.rel (%p481) target = $region52
        $region51: #{tpu_custom_call.1} parent=11 // pred_region
          _
        $region52: #{tpu_custom_call.1} parent=11 // pred_fallthru
          _
        // Predicated region
        $region53: #{tpu_custom_call.1} parent=11 // pred_check
          %p484 = pneg %p287
        $region54: #{tpu_custom_call.1} parent=11 // pred_check_branch
          %486 = sbr.rel (%p484) target = $region56
        $region55: #{tpu_custom_call.1} parent=11 // pred_region
          _
        $region56: #{tpu_custom_call.1} parent=11 // pred_fallthru
          _
        // Predicated region
        $region57: #{tpu_custom_call.1} parent=11 // pred_check
          %p487 = pneg %p308
        $region58: #{tpu_custom_call.1} parent=11 // pred_check_branch
          %489 = sbr.rel (%p487) target = $region60
        $region59: #{tpu_custom_call.1} parent=11 // pred_region
          _
        $region60: #{tpu_custom_call.1} parent=11 // pred_fallthru
          _
        // Predicated region
        $region61: #{tpu_custom_call.1} parent=11 // pred_check
          %p490 = pneg %p329
        $region62: #{tpu_custom_call.1} parent=11 // pred_check_branch
          %492 = sbr.rel (%p490) target = $region64
        $region63: #{tpu_custom_call.1} parent=11 // pred_region
          _
        $region64: #{tpu_custom_call.1} parent=11 // pred_fallthru
          _
        // Predicated region
        $region65: #{tpu_custom_call.1} parent=11 // pred_check
          %p493 = pneg %p350
        $region66: #{tpu_custom_call.1} parent=11 // pred_check_branch
          %495 = sbr.rel (%p493) target = $region68
        $region67: #{tpu_custom_call.1} parent=11 // pred_region
          _
        $region68: #{tpu_custom_call.1} parent=11 // pred_fallthru
          _
        // Predicated region
        $region69: #{tpu_custom_call.1} parent=11 // pred_check
          %p496 = pneg %p371
        $region70: #{tpu_custom_call.1} parent=11 // pred_check_branch
          %498 = sbr.rel (%p496) target = $region72
        $region71: #{tpu_custom_call.1} parent=11 // pred_region
          _
        $region72: #{tpu_custom_call.1} parent=11 // pred_fallthru
          _
        // Predicated region
        $region73: #{tpu_custom_call.1} parent=11 // pred_check
          %p499 = pneg %p392
        $region74: #{tpu_custom_call.1} parent=11 // pred_check_branch
          %501 = sbr.rel (%p499) target = $region76
        $region75: #{tpu_custom_call.1} parent=11 // pred_region
          _
        $region76: #{tpu_custom_call.1} parent=11 // pred_fallthru
          _
        // Predicated region
        $region77: #{tpu_custom_call.1} parent=11 // pred_check
          %p502 = pneg %p413
        $region78: #{tpu_custom_call.1} parent=11 // pred_check_branch
          %504 = sbr.rel (%p502) target = $region80
        $region79: #{tpu_custom_call.1} parent=11 // pred_region
          _
        $region80: #{tpu_custom_call.1} parent=11 // pred_fallthru
          _
      $region12: #{tpu_custom_call.1} parent=5 // pred_fallthru
        _
      %p505 = scmp.lt.s32.totalorder %s30, 2
      // Predicated region
      $region81: #{tpu_custom_call.1} parent=5 // pred_check
        %p506 = pneg %p505
      $region82: #{tpu_custom_call.1} parent=5 // pred_check_branch
        %508 = sbr.rel (%p506) target = $region84
      $region83: #{tpu_custom_call.1} parent=5 // pred_region
        // Predicated region
        $region85: #{tpu_custom_call.1} parent=83 // pred_check
          %p509 = pneg %p50
        $region86: #{tpu_custom_call.1} parent=83 // pred_check_branch
          %511 = sbr.rel (%p509) target = $region88
        $region87: #{tpu_custom_call.1} parent=83 // pred_region
          %s512 = sand.u32 %s40, 1
          %s513 = scalar_lea.sflag [#allocation6], %s512
          %s514 = sand.u32 %s40, 1
          %s515 = smul.addr %s514, 256
          %s516 = scalar_lea.vmem [#allocation5], %s515
          %s518 = ssub.s32 4096, 4096
          %519 = vsyncadd %s513, %s518
          %s520 = smul.addr %s30, 32
          %s521 = smul.addr %s520, 128
          %s522 = scalar_lea.hbm %s0, %s521
          %s523 = sshll.u32 %s516, 4
          %s524 = int_to_ptr.vmem [resolvable:$true] %s523
          %529 = dma.hbm_to_vmem [thread:$0]  %s522, 4096, %s524, %s513, 128, 128, 8
        $region88: #{tpu_custom_call.1} parent=83 // pred_fallthru
          _
      $region84: #{tpu_custom_call.1} parent=5 // pred_fallthru
        _
      %p530 = scmp.le.s32.totalorder 1, %s30
      %p531 = scmp.lt.s32.totalorder %s30, 3
      %p532 = pnand %p530, %p531
      %p533 = pneg %p532
      // Predicated region
      $region89: #{tpu_custom_call.1} parent=5 // pred_check
        _
      $region90: #{tpu_custom_call.1} parent=5 // pred_check_branch
        %535 = sbr.rel (%p532) target = $region92
      $region91: #{tpu_custom_call.1} parent=5 // pred_region
        %s536 = ssub.s32 %s30, 1
        %s537 = sand.u32 %s43, 1
        %s538 = scalar_lea.sflag [#allocation6], %s537
        %s539 = sand.u32 %s43, 1
        %s540 = smul.addr %s539, 256
        %s541 = scalar_lea.vmem [#allocation5], %s540
        // Predicated region
        $region93: #{tpu_custom_call.1} parent=91 // pred_check
          %p542 = pneg %p56
        $region94: #{tpu_custom_call.1} parent=91 // pred_check_branch
          %544 = sbr.rel (%p542) target = $region96
        $region95: #{tpu_custom_call.1} parent=91 // pred_region
          %545 = dma.done %s538, 4096
        $region96: #{tpu_custom_call.1} parent=91 // pred_fallthru
          _
        %s546 = sand.u32 %s43, 1
        %s547 = scalar_lea.sflag [#allocation6], %s546
        %s548 = sand.u32 %s43, 1
        %s549 = smul.addr %s548, 256
        %s550 = scalar_lea.vmem [#allocation5], %s549
        %p551 = pneg %p56
        %p552 = pneg %p53
        %p553 = pneg %p77
        %p554 = pneg %p74
        %p555 = pneg %p98
        %p556 = pneg %p95
        %p557 = pneg %p119
        %p558 = pneg %p116
        %p559 = pneg %p140
        %p560 = pneg %p137
        %p561 = pneg %p161
        %p562 = pneg %p158
        %p563 = pneg %p182
        %p564 = pneg %p179
        %p565 = pneg %p203
        %p566 = pneg %p200
        %p567 = pneg %p224
        %p568 = pneg %p221
        %p569 = pneg %p245
        %p570 = pneg %p242
        %p571 = pneg %p266
        %p572 = pneg %p263
        %p573 = pneg %p287
        %p574 = pneg %p284
        %p575 = pneg %p308
        %p576 = pneg %p305
        %p577 = pneg %p329
        %p578 = pneg %p326
        %p579 = pneg %p350
        %p580 = pneg %p347
        %p581 = pneg %p371
        %p582 = pneg %p368
        %p583 = pneg %p392
        %p584 = pneg %p389
        %p585 = pneg %p413
        %p586 = pneg %p410
        %p587 = pneg %p439
        %p588 = pneg %p436
        %s589 = sand.u32 %s426, 1
        %s590 = scalar_lea.sflag [#allocation7], %s589
        %s591 = sand.u32 %s426, 1
        %s592 = smul.addr %s591, 256
        %s593 = scalar_lea.vmem [#allocation8], %s592
        %v595 = vld [vmem:[%s541] sm:$0xff]
        %v596 = vld [vmem:[%s541 + $0x8] sm:$0xff]
        %v597 = vld [vmem:[%s541 + $0x10] sm:$0xff]
        %v598 = vld [vmem:[%s541 + $0x18] sm:$0xff]
        %v599 = vld [vmem:[%s541 + $0x20] sm:$0xff]
        %v600 = vld [vmem:[%s541 + $0x28] sm:$0xff]
        %v601 = vld [vmem:[%s541 + $0x30] sm:$0xff]
        %v602 = vld [vmem:[%s541 + $0x38] sm:$0xff]
        %v603 = vld [vmem:[%s541 + $0x40] sm:$0xff]
        %v604 = vld [vmem:[%s541 + $0x48] sm:$0xff]
        %v605 = vld [vmem:[%s541 + $0x50] sm:$0xff]
        %v606 = vld [vmem:[%s541 + $0x58] sm:$0xff]
        %v607 = vld [vmem:[%s541 + $0x60] sm:$0xff]
        %v608 = vld [vmem:[%s541 + $0x68] sm:$0xff]
        %v609 = vld [vmem:[%s541 + $0x70] sm:$0xff]
        %v610 = vld [vmem:[%s541 + $0x78] sm:$0xff]
        %v611 = vld [vmem:[%s541 + $0x80] sm:$0xff]
        %v612 = vld [vmem:[%s541 + $0x88] sm:$0xff]
        %v613 = vld [vmem:[%s541 + $0x90] sm:$0xff]
        %v614 = vld [vmem:[%s541 + $0x98] sm:$0xff]
        %v615 = vld [vmem:[%s541 + $0xa0] sm:$0xff]
        %v616 = vld [vmem:[%s541 + $0xa8] sm:$0xff]
        %v617 = vld [vmem:[%s541 + $0xb0] sm:$0xff]
        %v618 = vld [vmem:[%s541 + $0xb8] sm:$0xff]
        %v619 = vld [vmem:[%s541 + $0xc0] sm:$0xff]
        %v620 = vld [vmem:[%s541 + $0xc8] sm:$0xff]
        %v621 = vld [vmem:[%s541 + $0xd0] sm:$0xff]
        %v622 = vld [vmem:[%s541 + $0xd8] sm:$0xff]
        %v623 = vld [vmem:[%s541 + $0xe0] sm:$0xff]
        %v624 = vld [vmem:[%s541 + $0xe8] sm:$0xff]
        %v625 = vld [vmem:[%s541 + $0xf0] sm:$0xff]
        %v626 = vld [vmem:[%s541 + $0xf8] sm:$0xff]
        %v627 = vpack.c.bf16 %v596, %v595
        %v628 = vpack.c.bf16 %v598, %v597
        %v629 = vpack.c.bf16 %v600, %v599
        %v630 = vpack.c.bf16 %v602, %v601
        %v631 = vpack.c.bf16 %v604, %v603
        %v632 = vpack.c.bf16 %v606, %v605
        %v633 = vpack.c.bf16 %v608, %v607
        %v634 = vpack.c.bf16 %v610, %v609
        %v635 = vpack.c.bf16 %v612, %v611
        %v636 = vpack.c.bf16 %v614, %v613
        %v637 = vpack.c.bf16 %v616, %v615
        %v638 = vpack.c.bf16 %v618, %v617
        %v639 = vpack.c.bf16 %v620, %v619
        %v640 = vpack.c.bf16 %v622, %v621
        %v641 = vpack.c.bf16 %v624, %v623
        %v642 = vpack.c.bf16 %v626, %v625
        %v643 = vld [vmem:[%s1] sm:$0xf]
        %v644 = vld [vmem:[%s1 + $0x4] sm:$0xf]
        %v645 = vld [vmem:[%s1 + $0x8] sm:$0xf]
        %v646 = vld [vmem:[%s1 + $0xc] sm:$0xf]
        %v647 = vld [vmem:[%s1 + $0x10] sm:$0xf]
        %v648 = vld [vmem:[%s1 + $0x14] sm:$0xf]
        %v649 = vld [vmem:[%s1 + $0x18] sm:$0xf]
        %v650 = vld [vmem:[%s1 + $0x1c] sm:$0xf]
        %v651 = vld [vmem:[%s1 + $0x20] sm:$0xf]
        %v652 = vld [vmem:[%s1 + $0x24] sm:$0xf]
        %v653 = vld [vmem:[%s1 + $0x28] sm:$0xf]
        %v654 = vld [vmem:[%s1 + $0x2c] sm:$0xf]
        %v655 = vld [vmem:[%s1 + $0x30] sm:$0xf]
        %v656 = vld [vmem:[%s1 + $0x34] sm:$0xf]
        %v657 = vld [vmem:[%s1 + $0x38] sm:$0xf]
        %v658 = vld [vmem:[%s1 + $0x3c] sm:$0xf]
        %v675 = vunpack.c.l.b16 %v643
        %v676 = vunpack.c.l.b16 %v644
        %v677 = vunpack.c.l.b16 %v645
        %v678 = vunpack.c.l.b16 %v646
        %v679 = vunpack.c.l.b16 %v647
        %v680 = vunpack.c.l.b16 %v648
        %v681 = vunpack.c.l.b16 %v649
        %v682 = vunpack.c.l.b16 %v650
        %v683 = vunpack.c.l.b16 %v651
        %v684 = vunpack.c.l.b16 %v652
        %v685 = vunpack.c.l.b16 %v653
        %v686 = vunpack.c.l.b16 %v654
        %v687 = vunpack.c.l.b16 %v655
        %v688 = vunpack.c.l.b16 %v656
        %v689 = vunpack.c.l.b16 %v657
        %v690 = vunpack.c.l.b16 %v658
        %v691 = vpack.c.b16 %v676, %v675
        %v692 = vpack.c.b16 %v678, %v677
        %v693 = vpack.c.b16 %v680, %v679
        %v694 = vpack.c.b16 %v682, %v681
        %v695 = vpack.c.b16 %v684, %v683
        %v696 = vpack.c.b16 %v686, %v685
        %v697 = vpack.c.b16 %v688, %v687
        %v698 = vpack.c.b16 %v690, %v689
        %707 = vmatprep.subr.bf16.mxu0 0
        %708 = vmatpush1.bf16.msra.mxu0 %v691
        %709 = vmatprep.subr.bf16.mxu0 0
        %710 = vmatpush1.bf16.msra.mxu0 %v692
        %711 = vmatprep.subr.bf16.mxu0 0
        %712 = vmatpush1.bf16.msra.mxu0 %v693
        %713 = vmatprep.subr.bf16.mxu0 0
        %714 = vmatpush1.bf16.msra.mxu0 %v694
        %715 = vmatprep.subr.bf16.mxu0 0
        %716 = vmatpush1.bf16.msra.mxu0 %v695
        %717 = vmatprep.subr.bf16.mxu0 0
        %718 = vmatpush1.bf16.msra.mxu0 %v696
        %719 = vmatprep.subr.bf16.mxu0 0
        %720 = vmatpush1.bf16.msra.mxu0 %v697
        %721 = vmatprep.subr.bf16.mxu0 0
        %722 = vmatpush1.bf16.msra.mxu0 %v698
        %723 = vmatprep.subr.bf16.mxu0 0
        %724 = vmatpush1.bf16.msra.mxu0 0
        %725 = vmatprep.subr.bf16.mxu0 0
        %726 = vmatpush1.bf16.msra.mxu0 0
        %727 = vmatprep.subr.bf16.mxu0 0
        %728 = vmatpush1.bf16.msra.mxu0 0
        %729 = vmatprep.subr.bf16.mxu0 0
        %730 = vmatpush1.bf16.msra.mxu0 0
        %731 = vmatprep.subr.bf16.mxu0 0
        %732 = vmatpush1.bf16.msra.mxu0 0
        %733 = vmatprep.subr.bf16.mxu0 0
        %734 = vmatpush1.bf16.msra.mxu0 0
        %735 = vmatprep.subr.bf16.mxu0 0
        %736 = vmatpush1.bf16.msra.mxu0 0
        %737 = vmatprep.subr.bf16.mxu0 0
        %738 = vmatpush1.bf16.msra.mxu0 0
        %739 = vmatprep.mubr.bf16.mxu0 0
        %740 = vmatmul.mubr.bf16.gmra.mrb[0].mxu0 %v627
        %v741 = vpop.f32.mrb[0].mxu0
        %v742 = vadd.f32 0.0, %v741
        %v743 = vpop.f32.mrb[0].mxu0
        %v744 = vpop.f32.mrb[0].mxu0
        %v745 = vadd.f32 0.0, %v744
        %v746 = vpop.f32.mrb[0].mxu0
        %747 = vmatprep.mubr.bf16.mxu0 0
        %748 = vmatmul.mubr.bf16.gmra.mrb[0].mxu0 %v628
        %v749 = vpop.f32.mrb[0].mxu0
        %v750 = vadd.f32 0.0, %v749
        %v751 = vpop.f32.mrb[0].mxu0
        %v752 = vpop.f32.mrb[0].mxu0
        %v753 = vadd.f32 0.0, %v752
        %v754 = vpop.f32.mrb[0].mxu0
        %755 = vmatprep.mubr.bf16.mxu0 0
        %756 = vmatmul.mubr.bf16.gmra.mrb[0].mxu0 %v629
        %v757 = vpop.f32.mrb[0].mxu0
        %v758 = vadd.f32 0.0, %v757
        %v759 = vpop.f32.mrb[0].mxu0
        %v760 = vpop.f32.mrb[0].mxu0
        %v761 = vadd.f32 0.0, %v760
        %v762 = vpop.f32.mrb[0].mxu0
        %763 = vmatprep.mubr.bf16.mxu0 0
        %764 = vmatmul.mubr.bf16.gmra.mrb[0].mxu0 %v630
        %v765 = vpop.f32.mrb[0].mxu0
        %v766 = vadd.f32 0.0, %v765
        %v767 = vpop.f32.mrb[0].mxu0
        %v768 = vpop.f32.mrb[0].mxu0
        %v769 = vadd.f32 0.0, %v768
        %v770 = vpop.f32.mrb[0].mxu0
        %771 = vmatprep.mubr.bf16.mxu0 0
        %772 = vmatmul.mubr.bf16.gmra.mrb[0].mxu0 %v631
        %v773 = vpop.f32.mrb[0].mxu0
        %v774 = vadd.f32 0.0, %v773
        %v775 = vpop.f32.mrb[0].mxu0
        %v776 = vpop.f32.mrb[0].mxu0
        %v777 = vadd.f32 0.0, %v776
        %v778 = vpop.f32.mrb[0].mxu0
        %779 = vmatprep.mubr.bf16.mxu0 0
        %780 = vmatmul.mubr.bf16.gmra.mrb[0].mxu0 %v632
        %v781 = vpop.f32.mrb[0].mxu0
        %v782 = vadd.f32 0.0, %v781
        %v783 = vpop.f32.mrb[0].mxu0
        %v784 = vpop.f32.mrb[0].mxu0
        %v785 = vadd.f32 0.0, %v784
        %v786 = vpop.f32.mrb[0].mxu0
        %787 = vmatprep.mubr.bf16.mxu0 0
        %788 = vmatmul.mubr.bf16.gmra.mrb[0].mxu0 %v633
        %v789 = vpop.f32.mrb[0].mxu0
        %v790 = vadd.f32 0.0, %v789
        %v791 = vpop.f32.mrb[0].mxu0
        %v792 = vpop.f32.mrb[0].mxu0
        %v793 = vadd.f32 0.0, %v792
        %v794 = vpop.f32.mrb[0].mxu0
        %795 = vmatprep.mubr.bf16.mxu0 0
        %796 = vmatmul.mubr.bf16.gmra.mrb[0].mxu0 %v634
        %v797 = vpop.f32.mrb[0].mxu0
        %v798 = vadd.f32 0.0, %v797
        %v799 = vpop.f32.mrb[0].mxu0
        %v800 = vpop.f32.mrb[0].mxu0
        %v801 = vadd.f32 0.0, %v800
        %v802 = vpop.f32.mrb[0].mxu0
        %803 = vmatprep.mubr.bf16.mxu0 0
        %804 = vmatmul.mubr.bf16.gmra.mrb[0].mxu0 %v635
        %v805 = vpop.f32.mrb[0].mxu0
        %v806 = vadd.f32 0.0, %v805
        %v807 = vpop.f32.mrb[0].mxu0
        %v808 = vpop.f32.mrb[0].mxu0
        %v809 = vadd.f32 0.0, %v808
        %v810 = vpop.f32.mrb[0].mxu0
        %811 = vmatprep.mubr.bf16.mxu0 0
        %812 = vmatmul.mubr.bf16.gmra.mrb[0].mxu0 %v636
        %v813 = vpop.f32.mrb[0].mxu0
        %v814 = vadd.f32 0.0, %v813
        %v815 = vpop.f32.mrb[0].mxu0
        %v816 = vpop.f32.mrb[0].mxu0
        %v817 = vadd.f32 0.0, %v816
        %v818 = vpop.f32.mrb[0].mxu0
        %819 = vmatprep.mubr.bf16.mxu0 0
        %820 = vmatmul.mubr.bf16.gmra.mrb[0].mxu0 %v637
        %v821 = vpop.f32.mrb[0].mxu0
        %v822 = vadd.f32 0.0, %v821
        %v823 = vpop.f32.mrb[0].mxu0
        %v824 = vpop.f32.mrb[0].mxu0
        %v825 = vadd.f32 0.0, %v824
        %v826 = vpop.f32.mrb[0].mxu0
        %827 = vmatprep.mubr.bf16.mxu0 0
        %828 = vmatmul.mubr.bf16.gmra.mrb[0].mxu0 %v638
        %v829 = vpop.f32.mrb[0].mxu0
        %v830 = vadd.f32 0.0, %v829
        %v831 = vpop.f32.mrb[0].mxu0
        %v832 = vpop.f32.mrb[0].mxu0
        %v833 = vadd.f32 0.0, %v832
        %v834 = vpop.f32.mrb[0].mxu0
        %835 = vmatprep.mubr.bf16.mxu0 0
        %836 = vmatmul.mubr.bf16.gmra.mrb[0].mxu0 %v639
        %v837 = vpop.f32.mrb[0].mxu0
        %v838 = vadd.f32 0.0, %v837
        %v839 = vpop.f32.mrb[0].mxu0
        %v840 = vpop.f32.mrb[0].mxu0
        %v841 = vadd.f32 0.0, %v840
        %v842 = vpop.f32.mrb[0].mxu0
        %843 = vmatprep.mubr.bf16.mxu0 0
        %844 = vmatmul.mubr.bf16.gmra.mrb[0].mxu0 %v640
        %v845 = vpop.f32.mrb[0].mxu0
        %v846 = vadd.f32 0.0, %v845
        %v847 = vpop.f32.mrb[0].mxu0
        %v848 = vpop.f32.mrb[0].mxu0
        %v849 = vadd.f32 0.0, %v848
        %v850 = vpop.f32.mrb[0].mxu0
        %851 = vmatprep.mubr.bf16.mxu0 0
        %852 = vmatmul.mubr.bf16.gmra.mrb[0].mxu0 %v641
        %v853 = vpop.f32.mrb[0].mxu0
        %v854 = vadd.f32 0.0, %v853
        %v855 = vpop.f32.mrb[0].mxu0
        %v856 = vpop.f32.mrb[0].mxu0
        %v857 = vadd.f32 0.0, %v856
        %v858 = vpop.f32.mrb[0].mxu0
        %859 = vmatprep.mubr.bf16.mxu0 0
        %860 = vmatmul.mubr.bf16.gmra.mrb[0].mxu0 %v642
        %v861 = vpop.f32.mrb[0].mxu0
        %v862 = vadd.f32 0.0, %v861
        %v863 = vpop.f32.mrb[0].mxu0
        %v864 = vpop.f32.mrb[0].mxu0
        %v865 = vadd.f32 0.0, %v864
        %v866 = vpop.f32.mrb[0].mxu0
        %867 = vdwg.mxu0
        %v868 = vld [vmem:[%s2] sm:$0x1]
        %v870 = vlaneseq
        %v871 = vshrl.u32 %v870, 7
        %v872 = vsub.s32 0, %v871
        %v873 = vrot.slane %v868, %v872
        %v875 = vmul.f32 %v742, %v873
        %v876 = vmul.f32 %v745, %v873
        %v877 = vmul.f32 %v750, %v873
        %v878 = vmul.f32 %v753, %v873
        %v879 = vmul.f32 %v758, %v873
        %v880 = vmul.f32 %v761, %v873
        %v881 = vmul.f32 %v766, %v873
        %v882 = vmul.f32 %v769, %v873
        %v883 = vmul.f32 %v774, %v873
        %v884 = vmul.f32 %v777, %v873
        %v885 = vmul.f32 %v782, %v873
        %v886 = vmul.f32 %v785, %v873
        %v887 = vmul.f32 %v790, %v873
        %v888 = vmul.f32 %v793, %v873
        %v889 = vmul.f32 %v798, %v873
        %v890 = vmul.f32 %v801, %v873
        %v891 = vmul.f32 %v806, %v873
        %v892 = vmul.f32 %v809, %v873
        %v893 = vmul.f32 %v814, %v873
        %v894 = vmul.f32 %v817, %v873
        %v895 = vmul.f32 %v822, %v873
        %v896 = vmul.f32 %v825, %v873
        %v897 = vmul.f32 %v830, %v873
        %v898 = vmul.f32 %v833, %v873
        %v899 = vmul.f32 %v838, %v873
        %v900 = vmul.f32 %v841, %v873
        %v901 = vmul.f32 %v846, %v873
        %v902 = vmul.f32 %v849, %v873
        %v903 = vmul.f32 %v854, %v873
        %v904 = vmul.f32 %v857, %v873
        %v905 = vmul.f32 %v862, %v873
        %v906 = vmul.f32 %v865, %v873
        %v907 = vld [vmem:[%s3] sm:$0x1]
        %v909 = vlaneseq
        %v910 = vshrl.u32 %v909, 7
        %v911 = vsub.s32 0, %v910
        %v912 = vrot.slane %v907, %v911
        %v914 = vadd.f32 %v875, %v912
        %v915 = vadd.f32 %v876, %v912
        %v916 = vadd.f32 %v877, %v912
        %v917 = vadd.f32 %v878, %v912
        %v918 = vadd.f32 %v879, %v912
        %v919 = vadd.f32 %v880, %v912
        %v920 = vadd.f32 %v881, %v912
        %v921 = vadd.f32 %v882, %v912
        %v922 = vadd.f32 %v883, %v912
        %v923 = vadd.f32 %v884, %v912
        %v924 = vadd.f32 %v885, %v912
        %v925 = vadd.f32 %v886, %v912
        %v926 = vadd.f32 %v887, %v912
        %v927 = vadd.f32 %v888, %v912
        %v928 = vadd.f32 %v889, %v912
        %v929 = vadd.f32 %v890, %v912
        %v930 = vadd.f32 %v891, %v912
        %v931 = vadd.f32 %v892, %v912
        %v932 = vadd.f32 %v893, %v912
        %v933 = vadd.f32 %v894, %v912
        %v934 = vadd.f32 %v895, %v912
        %v935 = vadd.f32 %v896, %v912
        %v936 = vadd.f32 %v897, %v912
        %v937 = vadd.f32 %v898, %v912
        %v938 = vadd.f32 %v899, %v912
        %v939 = vadd.f32 %v900, %v912
        %v940 = vadd.f32 %v901, %v912
        %v941 = vadd.f32 %v902, %v912
        %v942 = vadd.f32 %v903, %v912
        %v943 = vadd.f32 %v904, %v912
        %v944 = vadd.f32 %v905, %v912
        %v945 = vadd.f32 %v906, %v912
        %v946 = vmax.f32 %v914, 0.0
        %v947 = vmax.f32 %v915, 0.0
        %v948 = vmax.f32 %v916, 0.0
        %v949 = vmax.f32 %v917, 0.0
        %v950 = vmax.f32 %v918, 0.0
        %v951 = vmax.f32 %v919, 0.0
        %v952 = vmax.f32 %v920, 0.0
        %v953 = vmax.f32 %v921, 0.0
        %v954 = vmax.f32 %v922, 0.0
        %v955 = vmax.f32 %v923, 0.0
        %v956 = vmax.f32 %v924, 0.0
        %v957 = vmax.f32 %v925, 0.0
        %v958 = vmax.f32 %v926, 0.0
        %v959 = vmax.f32 %v927, 0.0
        %v960 = vmax.f32 %v928, 0.0
        %v961 = vmax.f32 %v929, 0.0
        %v962 = vmax.f32 %v930, 0.0
        %v963 = vmax.f32 %v931, 0.0
        %v964 = vmax.f32 %v932, 0.0
        %v965 = vmax.f32 %v933, 0.0
        %v966 = vmax.f32 %v934, 0.0
        %v967 = vmax.f32 %v935, 0.0
        %v968 = vmax.f32 %v936, 0.0
        %v969 = vmax.f32 %v937, 0.0
        %v970 = vmax.f32 %v938, 0.0
        %v971 = vmax.f32 %v939, 0.0
        %v972 = vmax.f32 %v940, 0.0
        %v973 = vmax.f32 %v941, 0.0
        %v974 = vmax.f32 %v942, 0.0
        %v975 = vmax.f32 %v943, 0.0
        %v976 = vmax.f32 %v944, 0.0
        %v977 = vmax.f32 %v945, 0.0
        %vm978 = vcmask 261120
        %979 = vst.msk [vmem:[#allocation2] sm:$0xff] %vm978, 0.0
        %980 = vst.msk [vmem:[#allocation2 + $0x8] sm:$0xff] %vm978, 0.0
        %vm981 = vcmask 254976
        %982 = vst.msk [vmem:[#allocation2 + $0x10] sm:$0x3] %vm981, 0.0
        %s983 = scalar_lea.vmem [#allocation2], 408
        %984 = vst.msk [vmem:[%s983] sm:$0xff] %vm978, 0.0
        %985 = vst.msk [vmem:[%s983 + $0x8] sm:$0xff] %vm978, 0.0
        %986 = vst.msk [vmem:[%s983 + $0x10] sm:$0x3] %vm981, 0.0
        %s987 = scalar_lea.vmem [#allocation2], 24
        %vm988 = vcmask 253952
        %989 = vst.msk [vmem:[%s987] sm:$0x1] %vm988, 0.0
        %990 = vst.msk [vmem:[%s987 + $0x18] sm:$0x1] %vm988, 0.0
        %991 = vst.msk [vmem:[%s987 + $0x30] sm:$0x1] %vm988, 0.0
        %992 = vst.msk [vmem:[%s987 + $0x48] sm:$0x1] %vm988, 0.0
        %993 = vst.msk [vmem:[%s987 + $0x60] sm:$0x1] %vm988, 0.0
        %994 = vst.msk [vmem:[%s987 + $0x78] sm:$0x1] %vm988, 0.0
        %995 = vst.msk [vmem:[%s987 + $0x90] sm:$0x1] %vm988, 0.0
        %996 = vst.msk [vmem:[%s987 + $0xa8] sm:$0x1] %vm988, 0.0
        %997 = vst.msk [vmem:[%s987 + $0xc0] sm:$0x1] %vm988, 0.0
        %998 = vst.msk [vmem:[%s987 + $0xd8] sm:$0x1] %vm988, 0.0
        %999 = vst.msk [vmem:[%s987 + $0xf0] sm:$0x1] %vm988, 0.0
        %1000 = vst.msk [vmem:[%s987 + $0x108] sm:$0x1] %vm988, 0.0
        %1001 = vst.msk [vmem:[%s987 + $0x120] sm:$0x1] %vm988, 0.0
        %1002 = vst.msk [vmem:[%s987 + $0x138] sm:$0x1] %vm988, 0.0
        %1003 = vst.msk [vmem:[%s987 + $0x150] sm:$0x1] %vm988, 0.0
        %1004 = vst.msk [vmem:[%s987 + $0x168] sm:$0x1] %vm988, 0.0
        %1005 = vst.msk [vmem:[%s987 + $0x11] sm:$0x1] %vm988, 0.0
        %1006 = vst.msk [vmem:[%s987 + $0x29] sm:$0x1] %vm988, 0.0
        %1007 = vst.msk [vmem:[%s987 + $0x41] sm:$0x1] %vm988, 0.0
        %1008 = vst.msk [vmem:[%s987 + $0x59] sm:$0x1] %vm988, 0.0
        %1009 = vst.msk [vmem:[%s987 + $0x71] sm:$0x1] %vm988, 0.0
        %1010 = vst.msk [vmem:[%s987 + $0x89] sm:$0x1] %vm988, 0.0
        %1011 = vst.msk [vmem:[%s987 + $0xa1] sm:$0x1] %vm988, 0.0
        %1012 = vst.msk [vmem:[%s987 + $0xb9] sm:$0x1] %vm988, 0.0
        %1013 = vst.msk [vmem:[%s987 + $0xd1] sm:$0x1] %vm988, 0.0
        %1014 = vst.msk [vmem:[%s987 + $0xe9] sm:$0x1] %vm988, 0.0
        %1015 = vst.msk [vmem:[%s987 + $0x101] sm:$0x1] %vm988, 0.0
        %1016 = vst.msk [vmem:[%s987 + $0x119] sm:$0x1] %vm988, 0.0
        %1017 = vst.msk [vmem:[%s987 + $0x131] sm:$0x1] %vm988, 0.0
        %1018 = vst.msk [vmem:[%s987 + $0x149] sm:$0x1] %vm988, 0.0
        %1019 = vst.msk [vmem:[%s987 + $0x161] sm:$0x1] %vm988, 0.0
        %1020 = vst.msk [vmem:[%s987 + $0x179] sm:$0x1] %vm988, 0.0
        %1021 = vst.msk [vmem:[%s987 + $0x1] sm:$0xff] %vm978, %v946
        %1022 = vst.msk [vmem:[%s987 + $0x9] sm:$0xff] %vm978, %v947
        %1023 = vst.msk [vmem:[%s987 + $0x19] sm:$0xff] %vm978, %v948
        %1024 = vst.msk [vmem:[%s987 + $0x21] sm:$0xff] %vm978, %v949
        %1025 = vst.msk [vmem:[%s987 + $0x31] sm:$0xff] %vm978, %v950
        %1026 = vst.msk [vmem:[%s987 + $0x39] sm:$0xff] %vm978, %v951
        %1027 = vst.msk [vmem:[%s987 + $0x49] sm:$0xff] %vm978, %v952
        %1028 = vst.msk [vmem:[%s987 + $0x51] sm:$0xff] %vm978, %v953
        %1029 = vst.msk [vmem:[%s987 + $0x61] sm:$0xff] %vm978, %v954
        %1030 = vst.msk [vmem:[%s987 + $0x69] sm:$0xff] %vm978, %v955
        %1031 = vst.msk [vmem:[%s987 + $0x79] sm:$0xff] %vm978, %v956
        %1032 = vst.msk [vmem:[%s987 + $0x81] sm:$0xff] %vm978, %v957
        %1033 = vst.msk [vmem:[%s987 + $0x91] sm:$0xff] %vm978, %v958
        %1034 = vst.msk [vmem:[%s987 + $0x99] sm:$0xff] %vm978, %v959
        %1035 = vst.msk [vmem:[%s987 + $0xa9] sm:$0xff] %vm978, %v960
        %1036 = vst.msk [vmem:[%s987 + $0xb1] sm:$0xff] %vm978, %v961
        %1037 = vst.msk [vmem:[%s987 + $0xc1] sm:$0xff] %vm978, %v962
        %1038 = vst.msk [vmem:[%s987 + $0xc9] sm:$0xff] %vm978, %v963
        %1039 = vst.msk [vmem:[%s987 + $0xd9] sm:$0xff] %vm978, %v964
        %1040 = vst.msk [vmem:[%s987 + $0xe1] sm:$0xff] %vm978, %v965
        %1041 = vst.msk [vmem:[%s987 + $0xf1] sm:$0xff] %vm978, %v966
        %1042 = vst.msk [vmem:[%s987 + $0xf9] sm:$0xff] %vm978, %v967
        %1043 = vst.msk [vmem:[%s987 + $0x109] sm:$0xff] %vm978, %v968
        %1044 = vst.msk [vmem:[%s987 + $0x111] sm:$0xff] %vm978, %v969
        %1045 = vst.msk [vmem:[%s987 + $0x121] sm:$0xff] %vm978, %v970
        %1046 = vst.msk [vmem:[%s987 + $0x129] sm:$0xff] %vm978, %v971
        %1047 = vst.msk [vmem:[%s987 + $0x139] sm:$0xff] %vm978, %v972
        %1048 = vst.msk [vmem:[%s987 + $0x141] sm:$0xff] %vm978, %v973
        %1049 = vst.msk [vmem:[%s987 + $0x151] sm:$0xff] %vm978, %v974
        %1050 = vst.msk [vmem:[%s987 + $0x159] sm:$0xff] %vm978, %v975
        %1051 = vst.msk [vmem:[%s987 + $0x169] sm:$0xff] %vm978, %v976
        %1052 = vst.msk [vmem:[%s987 + $0x171] sm:$0xff] %vm978, %v977
        %v1053 = vld [vmem:[#allocation2] sm:$0xff]
        %v1054 = vld [vmem:[#allocation2 + $0x8] sm:$0xff]
        %v1055 = vld [vmem:[#allocation2 + $0x10] sm:$0x3]
        %v1056 = vld [vmem:[#allocation2 + $0x18] sm:$0xff]
        %v1057 = vld [vmem:[#allocation2 + $0x20] sm:$0xff]
        %v1058 = vld [vmem:[#allocation2 + $0x28] sm:$0x3]
        %v1059 = vld [vmem:[#allocation2 + $0x30] sm:$0xff]
        %v1060 = vld [vmem:[#allocation2 + $0x38] sm:$0xff]
        %v1061 = vld [vmem:[#allocation2 + $0x40] sm:$0x3]
        %v1062 = vld [vmem:[#allocation2 + $0x48] sm:$0xff]
        %v1063 = vld [vmem:[#allocation2 + $0x50] sm:$0xff]
        %v1064 = vld [vmem:[#allocation2 + $0x58] sm:$0x3]
        %v1065 = vld [vmem:[#allocation2 + $0x60] sm:$0xff]
        %v1066 = vld [vmem:[#allocation2 + $0x68] sm:$0xff]
        %v1067 = vld [vmem:[#allocation2 + $0x70] sm:$0x3]
        %v1068 = vld [vmem:[#allocation2 + $0x78] sm:$0xff]
        %v1069 = vld [vmem:[#allocation2 + $0x80] sm:$0xff]
        %v1070 = vld [vmem:[#allocation2 + $0x88] sm:$0x3]
        %v1071 = vld [vmem:[#allocation2 + $0x90] sm:$0xff]
        %v1072 = vld [vmem:[#allocation2 + $0x98] sm:$0xff]
        %v1073 = vld [vmem:[#allocation2 + $0xa0] sm:$0x3]
        %v1074 = vld [vmem:[#allocation2 + $0xa8] sm:$0xff]
        %v1075 = vld [vmem:[#allocation2 + $0xb0] sm:$0xff]
        %v1076 = vld [vmem:[#allocation2 + $0xb8] sm:$0x3]
        %v1077 = vld [vmem:[#allocation2 + $0xc0] sm:$0xff]
        %v1078 = vld [vmem:[#allocation2 + $0xc8] sm:$0xff]
        %v1079 = vld [vmem:[#allocation2 + $0xd0] sm:$0x3]
        %v1080 = vld [vmem:[#allocation2 + $0xd8] sm:$0xff]
        %v1081 = vld [vmem:[#allocation2 + $0xe0] sm:$0xff]
        %v1082 = vld [vmem:[#allocation2 + $0xe8] sm:$0x3]
        %v1083 = vld [vmem:[#allocation2 + $0xf0] sm:$0xff]
        %v1084 = vld [vmem:[#allocation2 + $0xf8] sm:$0xff]
        %v1085 = vld [vmem:[#allocation2 + $0x100] sm:$0x3]
        %v1086 = vld [vmem:[#allocation2 + $0x108] sm:$0xff]
        %v1087 = vld [vmem:[#allocation2 + $0x110] sm:$0xff]
        %v1088 = vld [vmem:[#allocation2 + $0x118] sm:$0x3]
        %v1089 = vld [vmem:[#allocation2 + $0x120] sm:$0xff]
        %v1090 = vld [vmem:[#allocation2 + $0x128] sm:$0xff]
        %v1091 = vld [vmem:[#allocation2 + $0x130] sm:$0x3]
        %v1092 = vld [vmem:[#allocation2 + $0x138] sm:$0xff]
        %v1093 = vld [vmem:[#allocation2 + $0x140] sm:$0xff]
        %v1094 = vld [vmem:[#allocation2 + $0x148] sm:$0x3]
        %v1095 = vld [vmem:[#allocation2 + $0x150] sm:$0xff]
        %v1096 = vld [vmem:[#allocation2 + $0x158] sm:$0xff]
        %v1097 = vld [vmem:[#allocation2 + $0x160] sm:$0x3]
        %v1098 = vld [vmem:[#allocation2 + $0x168] sm:$0xff]
        %v1099 = vld [vmem:[#allocation2 + $0x170] sm:$0xff]
        %v1100 = vld [vmem:[#allocation2 + $0x178] sm:$0x3]
        %vm1149 = vcmask 1046528
        %v1150 = vrot.slane %v1053, 1
        %v1151 = vrot.slane %v1054, 1
        %v1152 = vsel %vm1149, %v1150, %v1151
        %v1153 = vrot.slane %v1055, 1
        %v1154 = vsel %vm1149, %v1151, %v1153
        %v1155 = vrot.slane %v1056, 1
        %v1156 = vrot.slane %v1057, 1
        %v1157 = vsel %vm1149, %v1155, %v1156
        %v1158 = vrot.slane %v1058, 1
        %v1159 = vsel %vm1149, %v1156, %v1158
        %v1160 = vrot.slane %v1059, 1
        %v1161 = vrot.slane %v1060, 1
        %v1162 = vsel %vm1149, %v1160, %v1161
        %v1163 = vrot.slane %v1061, 1
        %v1164 = vsel %vm1149, %v1161, %v1163
        %v1165 = vrot.slane %v1062, 1
        %v1166 = vrot.slane %v1063, 1
        %v1167 = vsel %vm1149, %v1165, %v1166
        %v1168 = vrot.slane %v1064, 1
        %v1169 = vsel %vm1149, %v1166, %v1168
        %v1170 = vrot.slane %v1065, 1
        %v1171 = vrot.slane %v1066, 1
        %v1172 = vsel %vm1149, %v1170, %v1171
        %v1173 = vrot.slane %v1067, 1
        %v1174 = vsel %vm1149, %v1171, %v1173
        %v1175 = vrot.slane %v1068, 1
        %v1176 = vrot.slane %v1069, 1
        %v1177 = vsel %vm1149, %v1175, %v1176
        %v1178 = vrot.slane %v1070, 1
        %v1179 = vsel %vm1149, %v1176, %v1178
        %v1180 = vrot.slane %v1071, 1
        %v1181 = vrot.slane %v1072, 1
        %v1182 = vsel %vm1149, %v1180, %v1181
        %v1183 = vrot.slane %v1073, 1
        %v1184 = vsel %vm1149, %v1181, %v1183
        %v1185 = vrot.slane %v1074, 1
        %v1186 = vrot.slane %v1075, 1
        %v1187 = vsel %vm1149, %v1185, %v1186
        %v1188 = vrot.slane %v1076, 1
        %v1189 = vsel %vm1149, %v1186, %v1188
        %v1190 = vrot.slane %v1077, 1
        %v1191 = vrot.slane %v1078, 1
        %v1192 = vsel %vm1149, %v1190, %v1191
        %v1193 = vrot.slane %v1079, 1
        %v1194 = vsel %vm1149, %v1191, %v1193
        %v1195 = vrot.slane %v1080, 1
        %v1196 = vrot.slane %v1081, 1
        %v1197 = vsel %vm1149, %v1195, %v1196
        %v1198 = vrot.slane %v1082, 1
        %v1199 = vsel %vm1149, %v1196, %v1198
        %v1200 = vrot.slane %v1083, 1
        %v1201 = vrot.slane %v1084, 1
        %v1202 = vsel %vm1149, %v1200, %v1201
        %v1203 = vrot.slane %v1085, 1
        %v1204 = vsel %vm1149, %v1201, %v1203
        %v1205 = vrot.slane %v1086, 1
        %v1206 = vrot.slane %v1087, 1
        %v1207 = vsel %vm1149, %v1205, %v1206
        %v1208 = vrot.slane %v1088, 1
        %v1209 = vsel %vm1149, %v1206, %v1208
        %v1210 = vrot.slane %v1089, 1
        %v1211 = vrot.slane %v1090, 1
        %v1212 = vsel %vm1149, %v1210, %v1211
        %v1213 = vrot.slane %v1091, 1
        %v1214 = vsel %vm1149, %v1211, %v1213
        %v1215 = vrot.slane %v1092, 1
        %v1216 = vrot.slane %v1093, 1
        %v1217 = vsel %vm1149, %v1215, %v1216
        %v1218 = vrot.slane %v1094, 1
        %v1219 = vsel %vm1149, %v1216, %v1218
        %v1220 = vrot.slane %v1095, 1
        %v1221 = vrot.slane %v1096, 1
        %v1222 = vsel %vm1149, %v1220, %v1221
        %v1223 = vrot.slane %v1097, 1
        %v1224 = vsel %vm1149, %v1221, %v1223
        %v1225 = vrot.slane %v1098, 1
        %v1226 = vrot.slane %v1099, 1
        %v1227 = vsel %vm1149, %v1225, %v1226
        %v1228 = vrot.slane %v1100, 1
        %v1229 = vsel %vm1149, %v1226, %v1228
        %1230 = vrot.lane.b32.xlu0 %v1152, 32
        %v1231 = vpop.permute.xlu0 %1230
        %1232 = vrot.lane.b32.xlu0 %v1154, 32
        %v1233 = vpop.permute.xlu0 %1232
        %1234 = vrot.lane.b32.xlu0 %v1157, 32
        %v1235 = vpop.permute.xlu0 %1234
        %1236 = vrot.lane.b32.xlu0 %v1159, 32
        %v1237 = vpop.permute.xlu0 %1236
        %1238 = vrot.lane.b32.xlu0 %v1162, 32
        %v1239 = vpop.permute.xlu0 %1238
        %1240 = vrot.lane.b32.xlu0 %v1164, 32
        %v1241 = vpop.permute.xlu0 %1240
        %1242 = vrot.lane.b32.xlu0 %v1167, 32
        %v1243 = vpop.permute.xlu0 %1242
        %1244 = vrot.lane.b32.xlu0 %v1169, 32
        %v1245 = vpop.permute.xlu0 %1244
        %1246 = vrot.lane.b32.xlu0 %v1172, 32
        %v1247 = vpop.permute.xlu0 %1246
        %1248 = vrot.lane.b32.xlu0 %v1174, 32
        %v1249 = vpop.permute.xlu0 %1248
        %1250 = vrot.lane.b32.xlu0 %v1177, 32
        %v1251 = vpop.permute.xlu0 %1250
        %1252 = vrot.lane.b32.xlu0 %v1179, 32
        %v1253 = vpop.permute.xlu0 %1252
        %1254 = vrot.lane.b32.xlu0 %v1182, 32
        %v1255 = vpop.permute.xlu0 %1254
        %1256 = vrot.lane.b32.xlu0 %v1184, 32
        %v1257 = vpop.permute.xlu0 %1256
        %1258 = vrot.lane.b32.xlu0 %v1187, 32
        %v1259 = vpop.permute.xlu0 %1258
        %1260 = vrot.lane.b32.xlu0 %v1189, 32
        %v1261 = vpop.permute.xlu0 %1260
        %1262 = vrot.lane.b32.xlu0 %v1192, 32
        %v1263 = vpop.permute.xlu0 %1262
        %1264 = vrot.lane.b32.xlu0 %v1194, 32
        %v1265 = vpop.permute.xlu0 %1264
        %1266 = vrot.lane.b32.xlu0 %v1197, 32
        %v1267 = vpop.permute.xlu0 %1266
        %1268 = vrot.lane.b32.xlu0 %v1199, 32
        %v1269 = vpop.permute.xlu0 %1268
        %1270 = vrot.lane.b32.xlu0 %v1202, 32
        %v1271 = vpop.permute.xlu0 %1270
        %1272 = vrot.lane.b32.xlu0 %v1204, 32
        %v1273 = vpop.permute.xlu0 %1272
        %1274 = vrot.lane.b32.xlu0 %v1207, 32
        %v1275 = vpop.permute.xlu0 %1274
        %1276 = vrot.lane.b32.xlu0 %v1209, 32
        %v1277 = vpop.permute.xlu0 %1276
        %1278 = vrot.lane.b32.xlu0 %v1212, 32
        %v1279 = vpop.permute.xlu0 %1278
        %1280 = vrot.lane.b32.xlu0 %v1214, 32
        %v1281 = vpop.permute.xlu0 %1280
        %1282 = vrot.lane.b32.xlu0 %v1217, 32
        %v1283 = vpop.permute.xlu0 %1282
        %1284 = vrot.lane.b32.xlu0 %v1219, 32
        %v1285 = vpop.permute.xlu0 %1284
        %1286 = vrot.lane.b32.xlu0 %v1222, 32
        %v1287 = vpop.permute.xlu0 %1286
        %1288 = vrot.lane.b32.xlu0 %v1224, 32
        %v1289 = vpop.permute.xlu0 %1288
        %1290 = vrot.lane.b32.xlu0 %v1227, 32
        %v1291 = vpop.permute.xlu0 %1290
        %1292 = vrot.lane.b32.xlu0 %v1229, 32
        %v1293 = vpop.permute.xlu0 %1292
        %vm1326 = vcmask 1045504
        %v1327 = vrot.slane %v1053, 2
        %v1328 = vrot.slane %v1054, 2
        %v1329 = vsel %vm1326, %v1327, %v1328
        %v1330 = vrot.slane %v1055, 2
        %v1331 = vsel %vm1326, %v1328, %v1330
        %v1332 = vrot.slane %v1056, 2
        %v1333 = vrot.slane %v1057, 2
        %v1334 = vsel %vm1326, %v1332, %v1333
        %v1335 = vrot.slane %v1058, 2
        %v1336 = vsel %vm1326, %v1333, %v1335
        %v1337 = vrot.slane %v1059, 2
        %v1338 = vrot.slane %v1060, 2
        %v1339 = vsel %vm1326, %v1337, %v1338
        %v1340 = vrot.slane %v1061, 2
        %v1341 = vsel %vm1326, %v1338, %v1340
        %v1342 = vrot.slane %v1062, 2
        %v1343 = vrot.slane %v1063, 2
        %v1344 = vsel %vm1326, %v1342, %v1343
        %v1345 = vrot.slane %v1064, 2
        %v1346 = vsel %vm1326, %v1343, %v1345
        %v1347 = vrot.slane %v1065, 2
        %v1348 = vrot.slane %v1066, 2
        %v1349 = vsel %vm1326, %v1347, %v1348
        %v1350 = vrot.slane %v1067, 2
        %v1351 = vsel %vm1326, %v1348, %v1350
        %v1352 = vrot.slane %v1068, 2
        %v1353 = vrot.slane %v1069, 2
        %v1354 = vsel %vm1326, %v1352, %v1353
        %v1355 = vrot.slane %v1070, 2
        %v1356 = vsel %vm1326, %v1353, %v1355
        %v1357 = vrot.slane %v1071, 2
        %v1358 = vrot.slane %v1072, 2
        %v1359 = vsel %vm1326, %v1357, %v1358
        %v1360 = vrot.slane %v1073, 2
        %v1361 = vsel %vm1326, %v1358, %v1360
        %v1362 = vrot.slane %v1074, 2
        %v1363 = vrot.slane %v1075, 2
        %v1364 = vsel %vm1326, %v1362, %v1363
        %v1365 = vrot.slane %v1076, 2
        %v1366 = vsel %vm1326, %v1363, %v1365
        %v1367 = vrot.slane %v1077, 2
        %v1368 = vrot.slane %v1078, 2
        %v1369 = vsel %vm1326, %v1367, %v1368
        %v1370 = vrot.slane %v1079, 2
        %v1371 = vsel %vm1326, %v1368, %v1370
        %v1372 = vrot.slane %v1080, 2
        %v1373 = vrot.slane %v1081, 2
        %v1374 = vsel %vm1326, %v1372, %v1373
        %v1375 = vrot.slane %v1082, 2
        %v1376 = vsel %vm1326, %v1373, %v1375
        %v1377 = vrot.slane %v1083, 2
        %v1378 = vrot.slane %v1084, 2
        %v1379 = vsel %vm1326, %v1377, %v1378
        %v1380 = vrot.slane %v1085, 2
        %v1381 = vsel %vm1326, %v1378, %v1380
        %v1382 = vrot.slane %v1086, 2
        %v1383 = vrot.slane %v1087, 2
        %v1384 = vsel %vm1326, %v1382, %v1383
        %v1385 = vrot.slane %v1088, 2
        %v1386 = vsel %vm1326, %v1383, %v1385
        %v1387 = vrot.slane %v1089, 2
        %v1388 = vrot.slane %v1090, 2
        %v1389 = vsel %vm1326, %v1387, %v1388
        %v1390 = vrot.slane %v1091, 2
        %v1391 = vsel %vm1326, %v1388, %v1390
        %v1392 = vrot.slane %v1092, 2
        %v1393 = vrot.slane %v1093, 2
        %v1394 = vsel %vm1326, %v1392, %v1393
        %v1395 = vrot.slane %v1094, 2
        %v1396 = vsel %vm1326, %v1393, %v1395
        %v1397 = vrot.slane %v1095, 2
        %v1398 = vrot.slane %v1096, 2
        %v1399 = vsel %vm1326, %v1397, %v1398
        %v1400 = vrot.slane %v1097, 2
        %v1401 = vsel %vm1326, %v1398, %v1400
        %v1402 = vrot.slane %v1098, 2
        %v1403 = vrot.slane %v1099, 2
        %v1404 = vsel %vm1326, %v1402, %v1403
        %v1405 = vrot.slane %v1100, 2
        %v1406 = vsel %vm1326, %v1403, %v1405
        %1407 = vrot.lane.b32.xlu0 %v1329, 64
        %v1408 = vpop.permute.xlu0 %1407
        %1409 = vrot.lane.b32.xlu0 %v1331, 64
        %v1410 = vpop.permute.xlu0 %1409
        %1411 = vrot.lane.b32.xlu0 %v1334, 64
        %v1412 = vpop.permute.xlu0 %1411
        %1413 = vrot.lane.b32.xlu0 %v1336, 64
        %v1414 = vpop.permute.xlu0 %1413
        %1415 = vrot.lane.b32.xlu0 %v1339, 64
        %v1416 = vpop.permute.xlu0 %1415
        %1417 = vrot.lane.b32.xlu0 %v1341, 64
        %v1418 = vpop.permute.xlu0 %1417
        %1419 = vrot.lane.b32.xlu0 %v1344, 64
        %v1420 = vpop.permute.xlu0 %1419
        %1421 = vrot.lane.b32.xlu0 %v1346, 64
        %v1422 = vpop.permute.xlu0 %1421
        %1423 = vrot.lane.b32.xlu0 %v1349, 64
        %v1424 = vpop.permute.xlu0 %1423
        %1425 = vrot.lane.b32.xlu0 %v1351, 64
        %v1426 = vpop.permute.xlu0 %1425
        %1427 = vrot.lane.b32.xlu0 %v1354, 64
        %v1428 = vpop.permute.xlu0 %1427
        %1429 = vrot.lane.b32.xlu0 %v1356, 64
        %v1430 = vpop.permute.xlu0 %1429
        %1431 = vrot.lane.b32.xlu0 %v1359, 64
        %v1432 = vpop.permute.xlu0 %1431
        %1433 = vrot.lane.b32.xlu0 %v1361, 64
        %v1434 = vpop.permute.xlu0 %1433
        %1435 = vrot.lane.b32.xlu0 %v1364, 64
        %v1436 = vpop.permute.xlu0 %1435
        %1437 = vrot.lane.b32.xlu0 %v1366, 64
        %v1438 = vpop.permute.xlu0 %1437
        %1439 = vrot.lane.b32.xlu0 %v1369, 64
        %v1440 = vpop.permute.xlu0 %1439
        %1441 = vrot.lane.b32.xlu0 %v1371, 64
        %v1442 = vpop.permute.xlu0 %1441
        %1443 = vrot.lane.b32.xlu0 %v1374, 64
        %v1444 = vpop.permute.xlu0 %1443
        %1445 = vrot.lane.b32.xlu0 %v1376, 64
        %v1446 = vpop.permute.xlu0 %1445
        %1447 = vrot.lane.b32.xlu0 %v1379, 64
        %v1448 = vpop.permute.xlu0 %1447
        %1449 = vrot.lane.b32.xlu0 %v1381, 64
        %v1450 = vpop.permute.xlu0 %1449
        %1451 = vrot.lane.b32.xlu0 %v1384, 64
        %v1452 = vpop.permute.xlu0 %1451
        %1453 = vrot.lane.b32.xlu0 %v1386, 64
        %v1454 = vpop.permute.xlu0 %1453
        %1455 = vrot.lane.b32.xlu0 %v1389, 64
        %v1456 = vpop.permute.xlu0 %1455
        %1457 = vrot.lane.b32.xlu0 %v1391, 64
        %v1458 = vpop.permute.xlu0 %1457
        %1459 = vrot.lane.b32.xlu0 %v1394, 64
        %v1460 = vpop.permute.xlu0 %1459
        %1461 = vrot.lane.b32.xlu0 %v1396, 64
        %v1462 = vpop.permute.xlu0 %1461
        %1463 = vrot.lane.b32.xlu0 %v1399, 64
        %v1464 = vpop.permute.xlu0 %1463
        %1465 = vrot.lane.b32.xlu0 %v1401, 64
        %v1466 = vpop.permute.xlu0 %1465
        %1467 = vrot.lane.b32.xlu0 %v1404, 64
        %v1468 = vpop.permute.xlu0 %1467
        %1469 = vrot.lane.b32.xlu0 %v1406, 64
        %v1470 = vpop.permute.xlu0 %1469
        %v1503 = vsel %vm978, %v1053, %v1231
        %v1504 = vsel %vm978, %v1054, %v1233
        %v1505 = vsel %vm978, %v1056, %v1235
        %v1506 = vsel %vm978, %v1057, %v1237
        %v1507 = vsel %vm978, %v1059, %v1239
        %v1508 = vsel %vm978, %v1060, %v1241
        %v1509 = vsel %vm978, %v1062, %v1243
        %v1510 = vsel %vm978, %v1063, %v1245
        %v1511 = vsel %vm978, %v1065, %v1247
        %v1512 = vsel %vm978, %v1066, %v1249
        %v1513 = vsel %vm978, %v1068, %v1251
        %v1514 = vsel %vm978, %v1069, %v1253
        %v1515 = vsel %vm978, %v1071, %v1255
        %v1516 = vsel %vm978, %v1072, %v1257
        %v1517 = vsel %vm978, %v1074, %v1259
        %v1518 = vsel %vm978, %v1075, %v1261
        %v1519 = vsel %vm978, %v1077, %v1263
        %v1520 = vsel %vm978, %v1078, %v1265
        %v1521 = vsel %vm978, %v1080, %v1267
        %v1522 = vsel %vm978, %v1081, %v1269
        %v1523 = vsel %vm978, %v1083, %v1271
        %v1524 = vsel %vm978, %v1084, %v1273
        %v1525 = vsel %vm978, %v1086, %v1275
        %v1526 = vsel %vm978, %v1087, %v1277
        %v1527 = vsel %vm978, %v1089, %v1279
        %v1528 = vsel %vm978, %v1090, %v1281
        %v1529 = vsel %vm978, %v1092, %v1283
        %v1530 = vsel %vm978, %v1093, %v1285
        %v1531 = vsel %vm978, %v1095, %v1287
        %v1532 = vsel %vm978, %v1096, %v1289
        %v1533 = vsel %vm978, %v1098, %v1291
        %v1534 = vsel %vm978, %v1099, %v1293
        %vm1535 = vcmask 523264
        %v1536 = vsel %vm1535, %v1503, %v1408
        %v1537 = vsel %vm1535, %v1504, %v1410
        %v1538 = vsel %vm1535, %v1505, %v1412
        %v1539 = vsel %vm1535, %v1506, %v1414
        %v1540 = vsel %vm1535, %v1507, %v1416
        %v1541 = vsel %vm1535, %v1508, %v1418
        %v1542 = vsel %vm1535, %v1509, %v1420
        %v1543 = vsel %vm1535, %v1510, %v1422
        %v1544 = vsel %vm1535, %v1511, %v1424
        %v1545 = vsel %vm1535, %v1512, %v1426
        %v1546 = vsel %vm1535, %v1513, %v1428
        %v1547 = vsel %vm1535, %v1514, %v1430
        %v1548 = vsel %vm1535, %v1515, %v1432
        %v1549 = vsel %vm1535, %v1516, %v1434
        %v1550 = vsel %vm1535, %v1517, %v1436
        %v1551 = vsel %vm1535, %v1518, %v1438
        %v1552 = vsel %vm1535, %v1519, %v1440
        %v1553 = vsel %vm1535, %v1520, %v1442
        %v1554 = vsel %vm1535, %v1521, %v1444
        %v1555 = vsel %vm1535, %v1522, %v1446
        %v1556 = vsel %vm1535, %v1523, %v1448
        %v1557 = vsel %vm1535, %v1524, %v1450
        %v1558 = vsel %vm1535, %v1525, %v1452
        %v1559 = vsel %vm1535, %v1526, %v1454
        %v1560 = vsel %vm1535, %v1527, %v1456
        %v1561 = vsel %vm1535, %v1528, %v1458
        %v1562 = vsel %vm1535, %v1529, %v1460
        %v1563 = vsel %vm1535, %v1530, %v1462
        %v1564 = vsel %vm1535, %v1531, %v1464
        %v1565 = vsel %vm1535, %v1532, %v1466
        %v1566 = vsel %vm1535, %v1533, %v1468
        %v1567 = vsel %vm1535, %v1534, %v1470
        %v1568 = vpack.c.bf16 %v1537, %v1536
        %v1569 = vpack.c.bf16 %v1539, %v1538
        %v1570 = vpack.c.bf16 %v1541, %v1540
        %v1571 = vpack.c.bf16 %v1543, %v1542
        %v1572 = vpack.c.bf16 %v1545, %v1544
        %v1573 = vpack.c.bf16 %v1547, %v1546
        %v1574 = vpack.c.bf16 %v1549, %v1548
        %v1575 = vpack.c.bf16 %v1551, %v1550
        %v1576 = vpack.c.bf16 %v1553, %v1552
        %v1577 = vpack.c.bf16 %v1555, %v1554
        %v1578 = vpack.c.bf16 %v1557, %v1556
        %v1579 = vpack.c.bf16 %v1559, %v1558
        %v1580 = vpack.c.bf16 %v1561, %v1560
        %v1581 = vpack.c.bf16 %v1563, %v1562
        %v1582 = vpack.c.bf16 %v1565, %v1564
        %v1583 = vpack.c.bf16 %v1567, %v1566
        %v1584 = vld [vmem:[%s4] sm:$0xf]
        %v1585 = vld [vmem:[%s4 + $0x4] sm:$0xf]
        %v1586 = vld [vmem:[%s4 + $0x8] sm:$0xf]
        %v1587 = vld [vmem:[%s4 + $0xc] sm:$0xf]
        %v1588 = vld [vmem:[%s4 + $0x10] sm:$0xf]
        %v1589 = vld [vmem:[%s4 + $0x14] sm:$0xf]
        %v1590 = vld [vmem:[%s4 + $0x18] sm:$0xf]
        %v1591 = vld [vmem:[%s4 + $0x1c] sm:$0xf]
        %v1592 = vld [vmem:[%s4 + $0x20] sm:$0xf]
        %v1593 = vld [vmem:[%s4 + $0x24] sm:$0xf]
        %v1594 = vld [vmem:[%s4 + $0x28] sm:$0xf]
        %v1595 = vld [vmem:[%s4 + $0x2c] sm:$0xf]
        %v1596 = vld [vmem:[%s987] sm:$0xff]
        %v1597 = vld [vmem:[%s987 + $0x8] sm:$0xff]
        %v1598 = vld [vmem:[%s987 + $0x10] sm:$0x3]
        %v1599 = vld [vmem:[%s987 + $0x18] sm:$0xff]
        %v1600 = vld [vmem:[%s987 + $0x20] sm:$0xff]
        %v1601 = vld [vmem:[%s987 + $0x28] sm:$0x3]
        %v1602 = vld [vmem:[%s987 + $0x30] sm:$0xff]
        %v1603 = vld [vmem:[%s987 + $0x38] sm:$0xff]
        %v1604 = vld [vmem:[%s987 + $0x40] sm:$0x3]
        %v1605 = vld [vmem:[%s987 + $0x48] sm:$0xff]
        %v1606 = vld [vmem:[%s987 + $0x50] sm:$0xff]
        %v1607 = vld [vmem:[%s987 + $0x58] sm:$0x3]
        %v1608 = vld [vmem:[%s987 + $0x60] sm:$0xff]
        %v1609 = vld [vmem:[%s987 + $0x68] sm:$0xff]
        %v1610 = vld [vmem:[%s987 + $0x70] sm:$0x3]
        %v1611 = vld [vmem:[%s987 + $0x78] sm:$0xff]
        %v1612 = vld [vmem:[%s987 + $0x80] sm:$0xff]
        %v1613 = vld [vmem:[%s987 + $0x88] sm:$0x3]
        %v1614 = vld [vmem:[%s987 + $0x90] sm:$0xff]
        %v1615 = vld [vmem:[%s987 + $0x98] sm:$0xff]
        %v1616 = vld [vmem:[%s987 + $0xa0] sm:$0x3]
        %v1617 = vld [vmem:[%s987 + $0xa8] sm:$0xff]
        %v1618 = vld [vmem:[%s987 + $0xb0] sm:$0xff]
        %v1619 = vld [vmem:[%s987 + $0xb8] sm:$0x3]
        %v1620 = vld [vmem:[%s987 + $0xc0] sm:$0xff]
        %v1621 = vld [vmem:[%s987 + $0xc8] sm:$0xff]
        %v1622 = vld [vmem:[%s987 + $0xd0] sm:$0x3]
        %v1623 = vld [vmem:[%s987 + $0xd8] sm:$0xff]
        %v1624 = vld [vmem:[%s987 + $0xe0] sm:$0xff]
        %v1625 = vld [vmem:[%s987 + $0xe8] sm:$0x3]
        %v1626 = vld [vmem:[%s987 + $0xf0] sm:$0xff]
        %v1627 = vld [vmem:[%s987 + $0xf8] sm:$0xff]
        %v1628 = vld [vmem:[%s987 + $0x100] sm:$0x3]
        %v1629 = vld [vmem:[%s987 + $0x108] sm:$0xff]
        %v1630 = vld [vmem:[%s987 + $0x110] sm:$0xff]
        %v1631 = vld [vmem:[%s987 + $0x118] sm:$0x3]
        %v1632 = vld [vmem:[%s987 + $0x120] sm:$0xff]
        %v1633 = vld [vmem:[%s987 + $0x128] sm:$0xff]
        %v1634 = vld [vmem:[%s987 + $0x130] sm:$0x3]
        %v1635 = vld [vmem:[%s987 + $0x138] sm:$0xff]
        %v1636 = vld [vmem:[%s987 + $0x140] sm:$0xff]
        %v1637 = vld [vmem:[%s987 + $0x148] sm:$0x3]
        %v1638 = vld [vmem:[%s987 + $0x150] sm:$0xff]
        %v1639 = vld [vmem:[%s987 + $0x158] sm:$0xff]
        %v1640 = vld [vmem:[%s987 + $0x160] sm:$0x3]
        %v1641 = vld [vmem:[%s987 + $0x168] sm:$0xff]
        %v1642 = vld [vmem:[%s987 + $0x170] sm:$0xff]
        %v1643 = vld [vmem:[%s987 + $0x178] sm:$0x3]
        %v1692 = vrot.slane %v1596, 1
        %v1693 = vrot.slane %v1597, 1
        %v1694 = vsel %vm1149, %v1692, %v1693
        %v1695 = vrot.slane %v1598, 1
        %v1696 = vsel %vm1149, %v1693, %v1695
        %v1697 = vrot.slane %v1599, 1
        %v1698 = vrot.slane %v1600, 1
        %v1699 = vsel %vm1149, %v1697, %v1698
        %v1700 = vrot.slane %v1601, 1
        %v1701 = vsel %vm1149, %v1698, %v1700
        %v1702 = vrot.slane %v1602, 1
        %v1703 = vrot.slane %v1603, 1
        %v1704 = vsel %vm1149, %v1702, %v1703
        %v1705 = vrot.slane %v1604, 1
        %v1706 = vsel %vm1149, %v1703, %v1705
        %v1707 = vrot.slane %v1605, 1
        %v1708 = vrot.slane %v1606, 1
        %v1709 = vsel %vm1149, %v1707, %v1708
        %v1710 = vrot.slane %v1607, 1
        %v1711 = vsel %vm1149, %v1708, %v1710
        %v1712 = vrot.slane %v1608, 1
        %v1713 = vrot.slane %v1609, 1
        %v1714 = vsel %vm1149, %v1712, %v1713
        %v1715 = vrot.slane %v1610, 1
        %v1716 = vsel %vm1149, %v1713, %v1715
        %v1717 = vrot.slane %v1611, 1
        %v1718 = vrot.slane %v1612, 1
        %v1719 = vsel %vm1149, %v1717, %v1718
        %v1720 = vrot.slane %v1613, 1
        %v1721 = vsel %vm1149, %v1718, %v1720
        %v1722 = vrot.slane %v1614, 1
        %v1723 = vrot.slane %v1615, 1
        %v1724 = vsel %vm1149, %v1722, %v1723
        %v1725 = vrot.slane %v1616, 1
        %v1726 = vsel %vm1149, %v1723, %v1725
        %v1727 = vrot.slane %v1617, 1
        %v1728 = vrot.slane %v1618, 1
        %v1729 = vsel %vm1149, %v1727, %v1728
        %v1730 = vrot.slane %v1619, 1
        %v1731 = vsel %vm1149, %v1728, %v1730
        %v1732 = vrot.slane %v1620, 1
        %v1733 = vrot.slane %v1621, 1
        %v1734 = vsel %vm1149, %v1732, %v1733
        %v1735 = vrot.slane %v1622, 1
        %v1736 = vsel %vm1149, %v1733, %v1735
        %v1737 = vrot.slane %v1623, 1
        %v1738 = vrot.slane %v1624, 1
        %v1739 = vsel %vm1149, %v1737, %v1738
        %v1740 = vrot.slane %v1625, 1
        %v1741 = vsel %vm1149, %v1738, %v1740
        %v1742 = vrot.slane %v1626, 1
        %v1743 = vrot.slane %v1627, 1
        %v1744 = vsel %vm1149, %v1742, %v1743
        %v1745 = vrot.slane %v1628, 1
        %v1746 = vsel %vm1149, %v1743, %v1745
        %v1747 = vrot.slane %v1629, 1
        %v1748 = vrot.slane %v1630, 1
        %v1749 = vsel %vm1149, %v1747, %v1748
        %v1750 = vrot.slane %v1631, 1
        %v1751 = vsel %vm1149, %v1748, %v1750
        %v1752 = vrot.slane %v1632, 1
        %v1753 = vrot.slane %v1633, 1
        %v1754 = vsel %vm1149, %v1752, %v1753
        %v1755 = vrot.slane %v1634, 1
        %v1756 = vsel %vm1149, %v1753, %v1755
        %v1757 = vrot.slane %v1635, 1
        %v1758 = vrot.slane %v1636, 1
        %v1759 = vsel %vm1149, %v1757, %v1758
        %v1760 = vrot.slane %v1637, 1
        %v1761 = vsel %vm1149, %v1758, %v1760
        %v1762 = vrot.slane %v1638, 1
        %v1763 = vrot.slane %v1639, 1
        %v1764 = vsel %vm1149, %v1762, %v1763
        %v1765 = vrot.slane %v1640, 1
        %v1766 = vsel %vm1149, %v1763, %v1765
        %v1767 = vrot.slane %v1641, 1
        %v1768 = vrot.slane %v1642, 1
        %v1769 = vsel %vm1149, %v1767, %v1768
        %v1770 = vrot.slane %v1643, 1
        %v1771 = vsel %vm1149, %v1768, %v1770
        %1772 = vrot.lane.b32.xlu0 %v1694, 32
        %v1773 = vpop.permute.xlu0 %1772
        %1774 = vrot.lane.b32.xlu0 %v1696, 32
        %v1775 = vpop.permute.xlu0 %1774
        %1776 = vrot.lane.b32.xlu0 %v1699, 32
        %v1777 = vpop.permute.xlu0 %1776
        %1778 = vrot.lane.b32.xlu0 %v1701, 32
        %v1779 = vpop.permute.xlu0 %1778
        %1780 = vrot.lane.b32.xlu0 %v1704, 32
        %v1781 = vpop.permute.xlu0 %1780
        %1782 = vrot.lane.b32.xlu0 %v1706, 32
        %v1783 = vpop.permute.xlu0 %1782
        %1784 = vrot.lane.b32.xlu0 %v1709, 32
        %v1785 = vpop.permute.xlu0 %1784
        %1786 = vrot.lane.b32.xlu0 %v1711, 32
        %v1787 = vpop.permute.xlu0 %1786
        %1788 = vrot.lane.b32.xlu0 %v1714, 32
        %v1789 = vpop.permute.xlu0 %1788
        %1790 = vrot.lane.b32.xlu0 %v1716, 32
        %v1791 = vpop.permute.xlu0 %1790
        %1792 = vrot.lane.b32.xlu0 %v1719, 32
        %v1793 = vpop.permute.xlu0 %1792
        %1794 = vrot.lane.b32.xlu0 %v1721, 32
        %v1795 = vpop.permute.xlu0 %1794
        %1796 = vrot.lane.b32.xlu0 %v1724, 32
        %v1797 = vpop.permute.xlu0 %1796
        %1798 = vrot.lane.b32.xlu0 %v1726, 32
        %v1799 = vpop.permute.xlu0 %1798
        %1800 = vrot.lane.b32.xlu0 %v1729, 32
        %v1801 = vpop.permute.xlu0 %1800
        %1802 = vrot.lane.b32.xlu0 %v1731, 32
        %v1803 = vpop.permute.xlu0 %1802
        %1804 = vrot.lane.b32.xlu0 %v1734, 32
        %v1805 = vpop.permute.xlu0 %1804
        %1806 = vrot.lane.b32.xlu0 %v1736, 32
        %v1807 = vpop.permute.xlu0 %1806
        %1808 = vrot.lane.b32.xlu0 %v1739, 32
        %v1809 = vpop.permute.xlu0 %1808
        %1810 = vrot.lane.b32.xlu0 %v1741, 32
        %v1811 = vpop.permute.xlu0 %1810
        %1812 = vrot.lane.b32.xlu0 %v1744, 32
        %v1813 = vpop.permute.xlu0 %1812
        %1814 = vrot.lane.b32.xlu0 %v1746, 32
        %v1815 = vpop.permute.xlu0 %1814
        %1816 = vrot.lane.b32.xlu0 %v1749, 32
        %v1817 = vpop.permute.xlu0 %1816
        %1818 = vrot.lane.b32.xlu0 %v1751, 32
        %v1819 = vpop.permute.xlu0 %1818
        %1820 = vrot.lane.b32.xlu0 %v1754, 32
        %v1821 = vpop.permute.xlu0 %1820
        %1822 = vrot.lane.b32.xlu0 %v1756, 32
        %v1823 = vpop.permute.xlu0 %1822
        %1824 = vrot.lane.b32.xlu0 %v1759, 32
        %v1825 = vpop.permute.xlu0 %1824
        %1826 = vrot.lane.b32.xlu0 %v1761, 32
        %v1827 = vpop.permute.xlu0 %1826
        %1828 = vrot.lane.b32.xlu0 %v1764, 32
        %v1829 = vpop.permute.xlu0 %1828
        %1830 = vrot.lane.b32.xlu0 %v1766, 32
        %v1831 = vpop.permute.xlu0 %1830
        %1832 = vrot.lane.b32.xlu0 %v1769, 32
        %v1833 = vpop.permute.xlu0 %1832
        %1834 = vrot.lane.b32.xlu0 %v1771, 32
        %v1835 = vpop.permute.xlu0 %1834
        %v1868 = vrot.slane %v1596, 2
        %v1869 = vrot.slane %v1597, 2
        %v1870 = vsel %vm1326, %v1868, %v1869
        %v1871 = vrot.slane %v1598, 2
        %v1872 = vsel %vm1326, %v1869, %v1871
        %v1873 = vrot.slane %v1599, 2
        %v1874 = vrot.slane %v1600, 2
        %v1875 = vsel %vm1326, %v1873, %v1874
        %v1876 = vrot.slane %v1601, 2
        %v1877 = vsel %vm1326, %v1874, %v1876
        %v1878 = vrot.slane %v1602, 2
        %v1879 = vrot.slane %v1603, 2
        %v1880 = vsel %vm1326, %v1878, %v1879
        %v1881 = vrot.slane %v1604, 2
        %v1882 = vsel %vm1326, %v1879, %v1881
        %v1883 = vrot.slane %v1605, 2
        %v1884 = vrot.slane %v1606, 2
        %v1885 = vsel %vm1326, %v1883, %v1884
        %v1886 = vrot.slane %v1607, 2
        %v1887 = vsel %vm1326, %v1884, %v1886
        %v1888 = vrot.slane %v1608, 2
        %v1889 = vrot.slane %v1609, 2
        %v1890 = vsel %vm1326, %v1888, %v1889
        %v1891 = vrot.slane %v1610, 2
        %v1892 = vsel %vm1326, %v1889, %v1891
        %v1893 = vrot.slane %v1611, 2
        %v1894 = vrot.slane %v1612, 2
        %v1895 = vsel %vm1326, %v1893, %v1894
        %v1896 = vrot.slane %v1613, 2
        %v1897 = vsel %vm1326, %v1894, %v1896
        %v1898 = vrot.slane %v1614, 2
        %v1899 = vrot.slane %v1615, 2
        %v1900 = vsel %vm1326, %v1898, %v1899
        %v1901 = vrot.slane %v1616, 2
        %v1902 = vsel %vm1326, %v1899, %v1901
        %v1903 = vrot.slane %v1617, 2
        %v1904 = vrot.slane %v1618, 2
        %v1905 = vsel %vm1326, %v1903, %v1904
        %v1906 = vrot.slane %v1619, 2
        %v1907 = vsel %vm1326, %v1904, %v1906
        %v1908 = vrot.slane %v1620, 2
        %v1909 = vrot.slane %v1621, 2
        %v1910 = vsel %vm1326, %v1908, %v1909
        %v1911 = vrot.slane %v1622, 2
        %v1912 = vsel %vm1326, %v1909, %v1911
        %v1913 = vrot.slane %v1623, 2
        %v1914 = vrot.slane %v1624, 2
        %v1915 = vsel %vm1326, %v1913, %v1914
        %v1916 = vrot.slane %v1625, 2
        %v1917 = vsel %vm1326, %v1914, %v1916
        %v1918 = vrot.slane %v1626, 2
        %v1919 = vrot.slane %v1627, 2
        %v1920 = vsel %vm1326, %v1918, %v1919
        %v1921 = vrot.slane %v1628, 2
        %v1922 = vsel %vm1326, %v1919, %v1921
        %v1923 = vrot.slane %v1629, 2
        %v1924 = vrot.slane %v1630, 2
        %v1925 = vsel %vm1326, %v1923, %v1924
        %v1926 = vrot.slane %v1631, 2
        %v1927 = vsel %vm1326, %v1924, %v1926
        %v1928 = vrot.slane %v1632, 2
        %v1929 = vrot.slane %v1633, 2
        %v1930 = vsel %vm1326, %v1928, %v1929
        %v1931 = vrot.slane %v1634, 2
        %v1932 = vsel %vm1326, %v1929, %v1931
        %v1933 = vrot.slane %v1635, 2
        %v1934 = vrot.slane %v1636, 2
        %v1935 = vsel %vm1326, %v1933, %v1934
        %v1936 = vrot.slane %v1637, 2
        %v1937 = vsel %vm1326, %v1934, %v1936
        %v1938 = vrot.slane %v1638, 2
        %v1939 = vrot.slane %v1639, 2
        %v1940 = vsel %vm1326, %v1938, %v1939
        %v1941 = vrot.slane %v1640, 2
        %v1942 = vsel %vm1326, %v1939, %v1941
        %v1943 = vrot.slane %v1641, 2
        %v1944 = vrot.slane %v1642, 2
        %v1945 = vsel %vm1326, %v1943, %v1944
        %v1946 = vrot.slane %v1643, 2
        %v1947 = vsel %vm1326, %v1944, %v1946
        %1948 = vrot.lane.b32.xlu0 %v1870, 64
        %v1949 = vpop.permute.xlu0 %1948
        %1950 = vrot.lane.b32.xlu0 %v1872, 64
        %v1951 = vpop.permute.xlu0 %1950
        %1952 = vrot.lane.b32.xlu0 %v1875, 64
        %v1953 = vpop.permute.xlu0 %1952
        %1954 = vrot.lane.b32.xlu0 %v1877, 64
        %v1955 = vpop.permute.xlu0 %1954
        %1956 = vrot.lane.b32.xlu0 %v1880, 64
        %v1957 = vpop.permute.xlu0 %1956
        %1958 = vrot.lane.b32.xlu0 %v1882, 64
        %v1959 = vpop.permute.xlu0 %1958
        %1960 = vrot.lane.b32.xlu0 %v1885, 64
        %v1961 = vpop.permute.xlu0 %1960
        %1962 = vrot.lane.b32.xlu0 %v1887, 64
        %v1963 = vpop.permute.xlu0 %1962
        %1964 = vrot.lane.b32.xlu0 %v1890, 64
        %v1965 = vpop.permute.xlu0 %1964
        %1966 = vrot.lane.b32.xlu0 %v1892, 64
        %v1967 = vpop.permute.xlu0 %1966
        %1968 = vrot.lane.b32.xlu0 %v1895, 64
        %v1969 = vpop.permute.xlu0 %1968
        %1970 = vrot.lane.b32.xlu0 %v1897, 64
        %v1971 = vpop.permute.xlu0 %1970
        %1972 = vrot.lane.b32.xlu0 %v1900, 64
        %v1973 = vpop.permute.xlu0 %1972
        %1974 = vrot.lane.b32.xlu0 %v1902, 64
        %v1975 = vpop.permute.xlu0 %1974
        %1976 = vrot.lane.b32.xlu0 %v1905, 64
        %v1977 = vpop.permute.xlu0 %1976
        %1978 = vrot.lane.b32.xlu0 %v1907, 64
        %v1979 = vpop.permute.xlu0 %1978
        %1980 = vrot.lane.b32.xlu0 %v1910, 64
        %v1981 = vpop.permute.xlu0 %1980
        %1982 = vrot.lane.b32.xlu0 %v1912, 64
        %v1983 = vpop.permute.xlu0 %1982
        %1984 = vrot.lane.b32.xlu0 %v1915, 64
        %v1985 = vpop.permute.xlu0 %1984
        %1986 = vrot.lane.b32.xlu0 %v1917, 64
        %v1987 = vpop.permute.xlu0 %1986
        %1988 = vrot.lane.b32.xlu0 %v1920, 64
        %v1989 = vpop.permute.xlu0 %1988
        %1990 = vrot.lane.b32.xlu0 %v1922, 64
        %v1991 = vpop.permute.xlu0 %1990
        %1992 = vrot.lane.b32.xlu0 %v1925, 64
        %v1993 = vpop.permute.xlu0 %1992
        %1994 = vrot.lane.b32.xlu0 %v1927, 64
        %v1995 = vpop.permute.xlu0 %1994
        %1996 = vrot.lane.b32.xlu0 %v1930, 64
        %v1997 = vpop.permute.xlu0 %1996
        %1998 = vrot.lane.b32.xlu0 %v1932, 64
        %v1999 = vpop.permute.xlu0 %1998
        %2000 = vrot.lane.b32.xlu0 %v1935, 64
        %v2001 = vpop.permute.xlu0 %2000
        %2002 = vrot.lane.b32.xlu0 %v1937, 64
        %v2003 = vpop.permute.xlu0 %2002
        %2004 = vrot.lane.b32.xlu0 %v1940, 64
        %v2005 = vpop.permute.xlu0 %2004
        %2006 = vrot.lane.b32.xlu0 %v1942, 64
        %v2007 = vpop.permute.xlu0 %2006
        %2008 = vrot.lane.b32.xlu0 %v1945, 64
        %v2009 = vpop.permute.xlu0 %2008
        %2010 = vrot.lane.b32.xlu0 %v1947, 64
        %v2011 = vpop.permute.xlu0 %2010
        %v2044 = vsel %vm978, %v1596, %v1773
        %v2045 = vsel %vm978, %v1597, %v1775
        %v2046 = vsel %vm978, %v1599, %v1777
        %v2047 = vsel %vm978, %v1600, %v1779
        %v2048 = vsel %vm978, %v1602, %v1781
        %v2049 = vsel %vm978, %v1603, %v1783
        %v2050 = vsel %vm978, %v1605, %v1785
        %v2051 = vsel %vm978, %v1606, %v1787
        %v2052 = vsel %vm978, %v1608, %v1789
        %v2053 = vsel %vm978, %v1609, %v1791
        %v2054 = vsel %vm978, %v1611, %v1793
        %v2055 = vsel %vm978, %v1612, %v1795
        %v2056 = vsel %vm978, %v1614, %v1797
        %v2057 = vsel %vm978, %v1615, %v1799
        %v2058 = vsel %vm978, %v1617, %v1801
        %v2059 = vsel %vm978, %v1618, %v1803
        %v2060 = vsel %vm978, %v1620, %v1805
        %v2061 = vsel %vm978, %v1621, %v1807
        %v2062 = vsel %vm978, %v1623, %v1809
        %v2063 = vsel %vm978, %v1624, %v1811
        %v2064 = vsel %vm978, %v1626, %v1813
        %v2065 = vsel %vm978, %v1627, %v1815
        %v2066 = vsel %vm978, %v1629, %v1817
        %v2067 = vsel %vm978, %v1630, %v1819
        %v2068 = vsel %vm978, %v1632, %v1821
        %v2069 = vsel %vm978, %v1633, %v1823
        %v2070 = vsel %vm978, %v1635, %v1825
        %v2071 = vsel %vm978, %v1636, %v1827
        %v2072 = vsel %vm978, %v1638, %v1829
        %v2073 = vsel %vm978, %v1639, %v1831
        %v2074 = vsel %vm978, %v1641, %v1833
        %v2075 = vsel %vm978, %v1642, %v1835
        %v2076 = vsel %vm1535, %v2044, %v1949
        %v2077 = vsel %vm1535, %v2045, %v1951
        %v2078 = vsel %vm1535, %v2046, %v1953
        %v2079 = vsel %vm1535, %v2047, %v1955
        %v2080 = vsel %vm1535, %v2048, %v1957
        %v2081 = vsel %vm1535, %v2049, %v1959
        %v2082 = vsel %vm1535, %v2050, %v1961
        %v2083 = vsel %vm1535, %v2051, %v1963
        %v2084 = vsel %vm1535, %v2052, %v1965
        %v2085 = vsel %vm1535, %v2053, %v1967
        %v2086 = vsel %vm1535, %v2054, %v1969
        %v2087 = vsel %vm1535, %v2055, %v1971
        %v2088 = vsel %vm1535, %v2056, %v1973
        %v2089 = vsel %vm1535, %v2057, %v1975
        %v2090 = vsel %vm1535, %v2058, %v1977
        %v2091 = vsel %vm1535, %v2059, %v1979
        %v2092 = vsel %vm1535, %v2060, %v1981
        %v2093 = vsel %vm1535, %v2061, %v1983
        %v2094 = vsel %vm1535, %v2062, %v1985
        %v2095 = vsel %vm1535, %v2063, %v1987
        %v2096 = vsel %vm1535, %v2064, %v1989
        %v2097 = vsel %vm1535, %v2065, %v1991
        %v2098 = vsel %vm1535, %v2066, %v1993
        %v2099 = vsel %vm1535, %v2067, %v1995
        %v2100 = vsel %vm1535, %v2068, %v1997
        %v2101 = vsel %vm1535, %v2069, %v1999
        %v2102 = vsel %vm1535, %v2070, %v2001
        %v2103 = vsel %vm1535, %v2071, %v2003
        %v2104 = vsel %vm1535, %v2072, %v2005
        %v2105 = vsel %vm1535, %v2073, %v2007
        %v2106 = vsel %vm1535, %v2074, %v2009
        %v2107 = vsel %vm1535, %v2075, %v2011
        %v2108 = vpack.c.bf16 %v2077, %v2076
        %v2109 = vpack.c.bf16 %v2079, %v2078
        %v2110 = vpack.c.bf16 %v2081, %v2080
        %v2111 = vpack.c.bf16 %v2083, %v2082
        %v2112 = vpack.c.bf16 %v2085, %v2084
        %v2113 = vpack.c.bf16 %v2087, %v2086
        %v2114 = vpack.c.bf16 %v2089, %v2088
        %v2115 = vpack.c.bf16 %v2091, %v2090
        %v2116 = vpack.c.bf16 %v2093, %v2092
        %v2117 = vpack.c.bf16 %v2095, %v2094
        %v2118 = vpack.c.bf16 %v2097, %v2096
        %v2119 = vpack.c.bf16 %v2099, %v2098
        %v2120 = vpack.c.bf16 %v2101, %v2100
        %v2121 = vpack.c.bf16 %v2103, %v2102
        %v2122 = vpack.c.bf16 %v2105, %v2104
        %v2123 = vpack.c.bf16 %v2107, %v2106
        %s2124 = scalar_lea.vmem %s4, 48
        %v2125 = vld [vmem:[%s2124] sm:$0xf]
        %v2126 = vld [vmem:[%s2124 + $0x4] sm:$0xf]
        %v2127 = vld [vmem:[%s2124 + $0x8] sm:$0xf]
        %v2128 = vld [vmem:[%s2124 + $0xc] sm:$0xf]
        %v2129 = vld [vmem:[%s2124 + $0x10] sm:$0xf]
        %v2130 = vld [vmem:[%s2124 + $0x14] sm:$0xf]
        %v2131 = vld [vmem:[%s2124 + $0x18] sm:$0xf]
        %v2132 = vld [vmem:[%s2124 + $0x1c] sm:$0xf]
        %v2133 = vld [vmem:[%s2124 + $0x20] sm:$0xf]
        %v2134 = vld [vmem:[%s2124 + $0x24] sm:$0xf]
        %v2135 = vld [vmem:[%s2124 + $0x28] sm:$0xf]
        %v2136 = vld [vmem:[%s2124 + $0x2c] sm:$0xf]
        %v2149 = vunpack.c.l.b16 %v2125
        %v2150 = vunpack.c.l.b16 %v2126
        %v2151 = vunpack.c.l.b16 %v2127
        %v2152 = vunpack.c.l.b16 %v2128
        %v2153 = vunpack.c.l.b16 %v2129
        %v2154 = vunpack.c.l.b16 %v2130
        %v2155 = vunpack.c.l.b16 %v2131
        %v2156 = vunpack.c.l.b16 %v2132
        %v2157 = vunpack.c.l.b16 %v2133
        %v2158 = vunpack.c.l.b16 %v2134
        %v2159 = vunpack.c.l.b16 %v2135
        %v2160 = vunpack.c.l.b16 %v2136
        %v2161 = vpack.c.b16 %v2150, %v2149
        %v2162 = vpack.c.b16 %v2152, %v2151
        %v2163 = vpack.c.b16 %v2154, %v2153
        %v2164 = vpack.c.b16 %v2156, %v2155
        %v2165 = vpack.c.b16 %v2158, %v2157
        %v2166 = vpack.c.b16 %v2160, %v2159
        %vm2173 = vcmask 785408
        %v2175 = vsel %vm2173, %v2108, 0
        %v2178 = vsel %vm2173, %v2109, 0
        %v2181 = vsel %vm2173, %v2110, 0
        %v2184 = vsel %vm2173, %v2111, 0
        %v2187 = vsel %vm2173, %v2112, 0
        %v2190 = vsel %vm2173, %v2113, 0
        %v2193 = vsel %vm2173, %v2114, 0
        %v2196 = vsel %vm2173, %v2115, 0
        %v2199 = vsel %vm2173, %v2116, 0
        %v2202 = vsel %vm2173, %v2117, 0
        %v2205 = vsel %vm2173, %v2118, 0
        %v2208 = vsel %vm2173, %v2119, 0
        %v2211 = vsel %vm2173, %v2120, 0
        %v2214 = vsel %vm2173, %v2121, 0
        %v2217 = vsel %vm2173, %v2122, 0
        %v2220 = vsel %vm2173, %v2123, 0
        %2222 = vmatprep.subr.bf16.mxu0 0
        %2223 = vmatpush1.bf16.msra.mxu0 %v2161
        %2224 = vmatprep.subr.bf16.mxu0 0
        %2225 = vmatpush1.bf16.msra.mxu0 %v2162
        %2226 = vmatprep.subr.bf16.mxu0 0
        %2227 = vmatpush1.bf16.msra.mxu0 %v2163
        %2228 = vmatprep.subr.bf16.mxu0 0
        %2229 = vmatpush1.bf16.msra.mxu0 %v2164
        %2230 = vmatprep.subr.bf16.mxu0 0
        %2231 = vmatpush1.bf16.msra.mxu0 %v2165
        %2232 = vmatprep.subr.bf16.mxu0 0
        %2233 = vmatpush1.bf16.msra.mxu0 %v2166
        %2234 = vmatprep.subr.bf16.mxu0 0
        %2235 = vmatpush1.bf16.msra.mxu0 0
        %2236 = vmatprep.subr.bf16.mxu0 0
        %2237 = vmatpush1.bf16.msra.mxu0 0
        %2238 = vmatprep.subr.bf16.mxu0 0
        %2239 = vmatpush1.bf16.msra.mxu0 0
        %2240 = vmatprep.subr.bf16.mxu0 0
        %2241 = vmatpush1.bf16.msra.mxu0 0
        %2242 = vmatprep.subr.bf16.mxu0 0
        %2243 = vmatpush1.bf16.msra.mxu0 0
        %2244 = vmatprep.subr.bf16.mxu0 0
        %2245 = vmatpush1.bf16.msra.mxu0 0
        %2246 = vmatprep.subr.bf16.mxu0 0
        %2247 = vmatpush1.bf16.msra.mxu0 0
        %2248 = vmatprep.subr.bf16.mxu0 0
        %2249 = vmatpush1.bf16.msra.mxu0 0
        %2250 = vmatprep.subr.bf16.mxu0 0
        %2251 = vmatpush1.bf16.msra.mxu0 0
        %2252 = vmatprep.subr.bf16.mxu0 0
        %2253 = vmatpush1.bf16.msra.mxu0 0
        %2254 = vmatprep.mubr.bf16.mxu0 0
        %2255 = vmatmul.mubr.bf16.gmra.mrb[0].mxu0 %v2175
        %v2256 = vpop.f32.mrb[0].mxu0
        %v2257 = vadd.f32 0.0, %v2256
        %v2258 = vpop.f32.mrb[0].mxu0
        %v2259 = vpop.f32.mrb[0].mxu0
        %v2260 = vadd.f32 0.0, %v2259
        %v2261 = vpop.f32.mrb[0].mxu0
        %2262 = vmatprep.mubr.bf16.mxu0 0
        %2263 = vmatmul.mubr.bf16.gmra.mrb[0].mxu0 %v2178
        %v2264 = vpop.f32.mrb[0].mxu0
        %v2265 = vadd.f32 0.0, %v2264
        %v2266 = vpop.f32.mrb[0].mxu0
        %v2267 = vpop.f32.mrb[0].mxu0
        %v2268 = vadd.f32 0.0, %v2267
        %v2269 = vpop.f32.mrb[0].mxu0
        %2270 = vmatprep.mubr.bf16.mxu0 0
        %2271 = vmatmul.mubr.bf16.gmra.mrb[0].mxu0 %v2181
        %v2272 = vpop.f32.mrb[0].mxu0
        %v2273 = vadd.f32 0.0, %v2272
        %v2274 = vpop.f32.mrb[0].mxu0
        %v2275 = vpop.f32.mrb[0].mxu0
        %v2276 = vadd.f32 0.0, %v2275
        %v2277 = vpop.f32.mrb[0].mxu0
        %2278 = vmatprep.mubr.bf16.mxu0 0
        %2279 = vmatmul.mubr.bf16.gmra.mrb[0].mxu0 %v2184
        %v2280 = vpop.f32.mrb[0].mxu0
        %v2281 = vadd.f32 0.0, %v2280
        %v2282 = vpop.f32.mrb[0].mxu0
        %v2283 = vpop.f32.mrb[0].mxu0
        %v2284 = vadd.f32 0.0, %v2283
        %v2285 = vpop.f32.mrb[0].mxu0
        %2286 = vmatprep.mubr.bf16.mxu0 0
        %2287 = vmatmul.mubr.bf16.gmra.mrb[0].mxu0 %v2187
        %v2288 = vpop.f32.mrb[0].mxu0
        %v2289 = vadd.f32 0.0, %v2288
        %v2290 = vpop.f32.mrb[0].mxu0
        %v2291 = vpop.f32.mrb[0].mxu0
        %v2292 = vadd.f32 0.0, %v2291
        %v2293 = vpop.f32.mrb[0].mxu0
        %2294 = vmatprep.mubr.bf16.mxu0 0
        %2295 = vmatmul.mubr.bf16.gmra.mrb[0].mxu0 %v2190
        %v2296 = vpop.f32.mrb[0].mxu0
        %v2297 = vadd.f32 0.0, %v2296
        %v2298 = vpop.f32.mrb[0].mxu0
        %v2299 = vpop.f32.mrb[0].mxu0
        %v2300 = vadd.f32 0.0, %v2299
        %v2301 = vpop.f32.mrb[0].mxu0
        %2302 = vmatprep.mubr.bf16.mxu0 0
        %2303 = vmatmul.mubr.bf16.gmra.mrb[0].mxu0 %v2193
        %v2304 = vpop.f32.mrb[0].mxu0
        %v2305 = vadd.f32 0.0, %v2304
        %v2306 = vpop.f32.mrb[0].mxu0
        %v2307 = vpop.f32.mrb[0].mxu0
        %v2308 = vadd.f32 0.0, %v2307
        %v2309 = vpop.f32.mrb[0].mxu0
        %2310 = vmatprep.mubr.bf16.mxu0 0
        %2311 = vmatmul.mubr.bf16.gmra.mrb[0].mxu0 %v2196
        %v2312 = vpop.f32.mrb[0].mxu0
        %v2313 = vadd.f32 0.0, %v2312
        %v2314 = vpop.f32.mrb[0].mxu0
        %v2315 = vpop.f32.mrb[0].mxu0
        %v2316 = vadd.f32 0.0, %v2315
        %v2317 = vpop.f32.mrb[0].mxu0
        %2318 = vmatprep.mubr.bf16.mxu0 0
        %2319 = vmatmul.mubr.bf16.gmra.mrb[0].mxu0 %v2199
        %v2320 = vpop.f32.mrb[0].mxu0
        %v2321 = vadd.f32 0.0, %v2320
        %v2322 = vpop.f32.mrb[0].mxu0
        %v2323 = vpop.f32.mrb[0].mxu0
        %v2324 = vadd.f32 0.0, %v2323
        %v2325 = vpop.f32.mrb[0].mxu0
        %2326 = vmatprep.mubr.bf16.mxu0 0
        %2327 = vmatmul.mubr.bf16.gmra.mrb[0].mxu0 %v2202
        %v2328 = vpop.f32.mrb[0].mxu0
        %v2329 = vadd.f32 0.0, %v2328
        %v2330 = vpop.f32.mrb[0].mxu0
        %v2331 = vpop.f32.mrb[0].mxu0
        %v2332 = vadd.f32 0.0, %v2331
        %v2333 = vpop.f32.mrb[0].mxu0
        %2334 = vmatprep.mubr.bf16.mxu0 0
        %2335 = vmatmul.mubr.bf16.gmra.mrb[0].mxu0 %v2205
        %v2336 = vpop.f32.mrb[0].mxu0
        %v2337 = vadd.f32 0.0, %v2336
        %v2338 = vpop.f32.mrb[0].mxu0
        %v2339 = vpop.f32.mrb[0].mxu0
        %v2340 = vadd.f32 0.0, %v2339
        %v2341 = vpop.f32.mrb[0].mxu0
        %2342 = vmatprep.mubr.bf16.mxu0 0
        %2343 = vmatmul.mubr.bf16.gmra.mrb[0].mxu0 %v2208
        %v2344 = vpop.f32.mrb[0].mxu0
        %v2345 = vadd.f32 0.0, %v2344
        %v2346 = vpop.f32.mrb[0].mxu0
        %v2347 = vpop.f32.mrb[0].mxu0
        %v2348 = vadd.f32 0.0, %v2347
        %v2349 = vpop.f32.mrb[0].mxu0
        %2350 = vmatprep.mubr.bf16.mxu0 0
        %2351 = vmatmul.mubr.bf16.gmra.mrb[0].mxu0 %v2211
        %v2352 = vpop.f32.mrb[0].mxu0
        %v2353 = vadd.f32 0.0, %v2352
        %v2354 = vpop.f32.mrb[0].mxu0
        %v2355 = vpop.f32.mrb[0].mxu0
        %v2356 = vadd.f32 0.0, %v2355
        %v2357 = vpop.f32.mrb[0].mxu0
        %2358 = vmatprep.mubr.bf16.mxu0 0
        %2359 = vmatmul.mubr.bf16.gmra.mrb[0].mxu0 %v2214
        %v2360 = vpop.f32.mrb[0].mxu0
        %v2361 = vadd.f32 0.0, %v2360
        %v2362 = vpop.f32.mrb[0].mxu0
        %v2363 = vpop.f32.mrb[0].mxu0
        %v2364 = vadd.f32 0.0, %v2363
        %v2365 = vpop.f32.mrb[0].mxu0
        %2366 = vmatprep.mubr.bf16.mxu0 0
        %2367 = vmatmul.mubr.bf16.gmra.mrb[0].mxu0 %v2217
        %v2368 = vpop.f32.mrb[0].mxu0
        %v2369 = vadd.f32 0.0, %v2368
        %v2370 = vpop.f32.mrb[0].mxu0
        %v2371 = vpop.f32.mrb[0].mxu0
        %v2372 = vadd.f32 0.0, %v2371
        %v2373 = vpop.f32.mrb[0].mxu0
        %2374 = vmatprep.mubr.bf16.mxu0 0
        %2375 = vmatmul.mubr.bf16.gmra.mrb[0].mxu0 %v2220
        %v2376 = vpop.f32.mrb[0].mxu0
        %v2377 = vadd.f32 0.0, %v2376
        %v2378 = vpop.f32.mrb[0].mxu0
        %v2379 = vpop.f32.mrb[0].mxu0
        %v2380 = vadd.f32 0.0, %v2379
        %v2381 = vpop.f32.mrb[0].mxu0
        %2382 = vdwg.mxu0
        %v2395 = vunpack.c.l.b16 %v1584
        %v2396 = vunpack.c.l.b16 %v1585
        %v2397 = vunpack.c.l.b16 %v1586
        %v2398 = vunpack.c.l.b16 %v1587
        %v2399 = vunpack.c.l.b16 %v1588
        %v2400 = vunpack.c.l.b16 %v1589
        %v2401 = vunpack.c.l.b16 %v1590
        %v2402 = vunpack.c.l.b16 %v1591
        %v2403 = vunpack.c.l.b16 %v1592
        %v2404 = vunpack.c.l.b16 %v1593
        %v2405 = vunpack.c.l.b16 %v1594
        %v2406 = vunpack.c.l.b16 %v1595
        %v2407 = vpack.c.b16 %v2396, %v2395
        %v2408 = vpack.c.b16 %v2398, %v2397
        %v2409 = vpack.c.b16 %v2400, %v2399
        %v2410 = vpack.c.b16 %v2402, %v2401
        %v2411 = vpack.c.b16 %v2404, %v2403
        %v2412 = vpack.c.b16 %v2406, %v2405
        %v2420 = vsel %vm2173, %v1568, 0
        %v2423 = vsel %vm2173, %v1569, 0
        %v2426 = vsel %vm2173, %v1570, 0
        %v2429 = vsel %vm2173, %v1571, 0
        %v2432 = vsel %vm2173, %v1572, 0
        %v2435 = vsel %vm2173, %v1573, 0
        %v2438 = vsel %vm2173, %v1574, 0
        %v2441 = vsel %vm2173, %v1575, 0
        %v2444 = vsel %vm2173, %v1576, 0
        %v2447 = vsel %vm2173, %v1577, 0
        %v2450 = vsel %vm2173, %v1578, 0
        %v2453 = vsel %vm2173, %v1579, 0
        %v2456 = vsel %vm2173, %v1580, 0
        %v2459 = vsel %vm2173, %v1581, 0
        %v2462 = vsel %vm2173, %v1582, 0
        %v2465 = vsel %vm2173, %v1583, 0
        %2467 = vmatprep.subr.bf16.mxu0 0
        %2468 = vmatpush1.bf16.msra.mxu0 %v2407
        %2469 = vmatprep.subr.bf16.mxu0 0
        %2470 = vmatpush1.bf16.msra.mxu0 %v2408
        %2471 = vmatprep.subr.bf16.mxu0 0
        %2472 = vmatpush1.bf16.msra.mxu0 %v2409
        %2473 = vmatprep.subr.bf16.mxu0 0
        %2474 = vmatpush1.bf16.msra.mxu0 %v2410
        %2475 = vmatprep.subr.bf16.mxu0 0
        %2476 = vmatpush1.bf16.msra.mxu0 %v2411
        %2477 = vmatprep.subr.bf16.mxu0 0
        %2478 = vmatpush1.bf16.msra.mxu0 %v2412
        %2479 = vmatprep.subr.bf16.mxu0 0
        %2480 = vmatpush1.bf16.msra.mxu0 0
        %2481 = vmatprep.subr.bf16.mxu0 0
        %2482 = vmatpush1.bf16.msra.mxu0 0
        %2483 = vmatprep.subr.bf16.mxu0 0
        %2484 = vmatpush1.bf16.msra.mxu0 0
        %2485 = vmatprep.subr.bf16.mxu0 0
        %2486 = vmatpush1.bf16.msra.mxu0 0
        %2487 = vmatprep.subr.bf16.mxu0 0
        %2488 = vmatpush1.bf16.msra.mxu0 0
        %2489 = vmatprep.subr.bf16.mxu0 0
        %2490 = vmatpush1.bf16.msra.mxu0 0
        %2491 = vmatprep.subr.bf16.mxu0 0
        %2492 = vmatpush1.bf16.msra.mxu0 0
        %2493 = vmatprep.subr.bf16.mxu0 0
        %2494 = vmatpush1.bf16.msra.mxu0 0
        %2495 = vmatprep.subr.bf16.mxu0 0
        %2496 = vmatpush1.bf16.msra.mxu0 0
        %2497 = vmatprep.subr.bf16.mxu0 0
        %2498 = vmatpush1.bf16.msra.mxu0 0
        %2499 = vmatprep.mubr.bf16.mxu0 0
        %2500 = vmatmul.mubr.bf16.gmra.mrb[0].mxu0 %v2420
        %v2501 = vpop.f32.mrb[0].mxu0
        %v2502 = vadd.f32 %v2257, %v2501
        %v2503 = vpop.f32.mrb[0].mxu0
        %v2504 = vpop.f32.mrb[0].mxu0
        %v2505 = vadd.f32 %v2260, %v2504
        %v2506 = vpop.f32.mrb[0].mxu0
        %2507 = vmatprep.mubr.bf16.mxu0 0
        %2508 = vmatmul.mubr.bf16.gmra.mrb[0].mxu0 %v2423
        %v2509 = vpop.f32.mrb[0].mxu0
        %v2510 = vadd.f32 %v2265, %v2509
        %v2511 = vpop.f32.mrb[0].mxu0
        %v2512 = vpop.f32.mrb[0].mxu0
        %v2513 = vadd.f32 %v2268, %v2512
        %v2514 = vpop.f32.mrb[0].mxu0
        %2515 = vmatprep.mubr.bf16.mxu0 0
        %2516 = vmatmul.mubr.bf16.gmra.mrb[0].mxu0 %v2426
        %v2517 = vpop.f32.mrb[0].mxu0
        %v2518 = vadd.f32 %v2273, %v2517
        %v2519 = vpop.f32.mrb[0].mxu0
        %v2520 = vpop.f32.mrb[0].mxu0
        %v2521 = vadd.f32 %v2276, %v2520
        %v2522 = vpop.f32.mrb[0].mxu0
        %2523 = vmatprep.mubr.bf16.mxu0 0
        %2524 = vmatmul.mubr.bf16.gmra.mrb[0].mxu0 %v2429
        %v2525 = vpop.f32.mrb[0].mxu0
        %v2526 = vadd.f32 %v2281, %v2525
        %v2527 = vpop.f32.mrb[0].mxu0
        %v2528 = vpop.f32.mrb[0].mxu0
        %v2529 = vadd.f32 %v2284, %v2528
        %v2530 = vpop.f32.mrb[0].mxu0
        %2531 = vmatprep.mubr.bf16.mxu0 0
        %2532 = vmatmul.mubr.bf16.gmra.mrb[0].mxu0 %v2432
        %v2533 = vpop.f32.mrb[0].mxu0
        %v2534 = vadd.f32 %v2289, %v2533
        %v2535 = vpop.f32.mrb[0].mxu0
        %v2536 = vpop.f32.mrb[0].mxu0
        %v2537 = vadd.f32 %v2292, %v2536
        %v2538 = vpop.f32.mrb[0].mxu0
        %2539 = vmatprep.mubr.bf16.mxu0 0
        %2540 = vmatmul.mubr.bf16.gmra.mrb[0].mxu0 %v2435
        %v2541 = vpop.f32.mrb[0].mxu0
        %v2542 = vadd.f32 %v2297, %v2541
        %v2543 = vpop.f32.mrb[0].mxu0
        %v2544 = vpop.f32.mrb[0].mxu0
        %v2545 = vadd.f32 %v2300, %v2544
        %v2546 = vpop.f32.mrb[0].mxu0
        %2547 = vmatprep.mubr.bf16.mxu0 0
        %2548 = vmatmul.mubr.bf16.gmra.mrb[0].mxu0 %v2438
        %v2549 = vpop.f32.mrb[0].mxu0
        %v2550 = vadd.f32 %v2305, %v2549
        %v2551 = vpop.f32.mrb[0].mxu0
        %v2552 = vpop.f32.mrb[0].mxu0
        %v2553 = vadd.f32 %v2308, %v2552
        %v2554 = vpop.f32.mrb[0].mxu0
        %2555 = vmatprep.mubr.bf16.mxu0 0
        %2556 = vmatmul.mubr.bf16.gmra.mrb[0].mxu0 %v2441
        %v2557 = vpop.f32.mrb[0].mxu0
        %v2558 = vadd.f32 %v2313, %v2557
        %v2559 = vpop.f32.mrb[0].mxu0
        %v2560 = vpop.f32.mrb[0].mxu0
        %v2561 = vadd.f32 %v2316, %v2560
        %v2562 = vpop.f32.mrb[0].mxu0
        %2563 = vmatprep.mubr.bf16.mxu0 0
        %2564 = vmatmul.mubr.bf16.gmra.mrb[0].mxu0 %v2444
        %v2565 = vpop.f32.mrb[0].mxu0
        %v2566 = vadd.f32 %v2321, %v2565
        %v2567 = vpop.f32.mrb[0].mxu0
        %v2568 = vpop.f32.mrb[0].mxu0
        %v2569 = vadd.f32 %v2324, %v2568
        %v2570 = vpop.f32.mrb[0].mxu0
        %2571 = vmatprep.mubr.bf16.mxu0 0
        %2572 = vmatmul.mubr.bf16.gmra.mrb[0].mxu0 %v2447
        %v2573 = vpop.f32.mrb[0].mxu0
        %v2574 = vadd.f32 %v2329, %v2573
        %v2575 = vpop.f32.mrb[0].mxu0
        %v2576 = vpop.f32.mrb[0].mxu0
        %v2577 = vadd.f32 %v2332, %v2576
        %v2578 = vpop.f32.mrb[0].mxu0
        %2579 = vmatprep.mubr.bf16.mxu0 0
        %2580 = vmatmul.mubr.bf16.gmra.mrb[0].mxu0 %v2450
        %v2581 = vpop.f32.mrb[0].mxu0
        %v2582 = vadd.f32 %v2337, %v2581
        %v2583 = vpop.f32.mrb[0].mxu0
        %v2584 = vpop.f32.mrb[0].mxu0
        %v2585 = vadd.f32 %v2340, %v2584
        %v2586 = vpop.f32.mrb[0].mxu0
        %2587 = vmatprep.mubr.bf16.mxu0 0
        %2588 = vmatmul.mubr.bf16.gmra.mrb[0].mxu0 %v2453
        %v2589 = vpop.f32.mrb[0].mxu0
        %v2590 = vadd.f32 %v2345, %v2589
        %v2591 = vpop.f32.mrb[0].mxu0
        %v2592 = vpop.f32.mrb[0].mxu0
        %v2593 = vadd.f32 %v2348, %v2592
        %v2594 = vpop.f32.mrb[0].mxu0
        %2595 = vmatprep.mubr.bf16.mxu0 0
        %2596 = vmatmul.mubr.bf16.gmra.mrb[0].mxu0 %v2456
        %v2597 = vpop.f32.mrb[0].mxu0
        %v2598 = vadd.f32 %v2353, %v2597
        %v2599 = vpop.f32.mrb[0].mxu0
        %v2600 = vpop.f32.mrb[0].mxu0
        %v2601 = vadd.f32 %v2356, %v2600
        %v2602 = vpop.f32.mrb[0].mxu0
        %2603 = vmatprep.mubr.bf16.mxu0 0
        %2604 = vmatmul.mubr.bf16.gmra.mrb[0].mxu0 %v2459
        %v2605 = vpop.f32.mrb[0].mxu0
        %v2606 = vadd.f32 %v2361, %v2605
        %v2607 = vpop.f32.mrb[0].mxu0
        %v2608 = vpop.f32.mrb[0].mxu0
        %v2609 = vadd.f32 %v2364, %v2608
        %v2610 = vpop.f32.mrb[0].mxu0
        %2611 = vmatprep.mubr.bf16.mxu0 0
        %2612 = vmatmul.mubr.bf16.gmra.mrb[0].mxu0 %v2462
        %v2613 = vpop.f32.mrb[0].mxu0
        %v2614 = vadd.f32 %v2369, %v2613
        %v2615 = vpop.f32.mrb[0].mxu0
        %v2616 = vpop.f32.mrb[0].mxu0
        %v2617 = vadd.f32 %v2372, %v2616
        %v2618 = vpop.f32.mrb[0].mxu0
        %2619 = vmatprep.mubr.bf16.mxu0 0
        %2620 = vmatmul.mubr.bf16.gmra.mrb[0].mxu0 %v2465
        %v2621 = vpop.f32.mrb[0].mxu0
        %v2622 = vadd.f32 %v2377, %v2621
        %v2623 = vpop.f32.mrb[0].mxu0
        %v2624 = vpop.f32.mrb[0].mxu0
        %v2625 = vadd.f32 %v2380, %v2624
        %v2626 = vpop.f32.mrb[0].mxu0
        %2627 = vdwg.mxu0
        %s2628 = scalar_lea.vmem [#allocation2], 48
        %v2629 = vld [vmem:[%s2628] sm:$0xff]
        %v2630 = vld [vmem:[%s2628 + $0x8] sm:$0xff]
        %v2631 = vld [vmem:[%s2628 + $0x10] sm:$0x3]
        %v2632 = vld [vmem:[%s2628 + $0x18] sm:$0xff]
        %v2633 = vld [vmem:[%s2628 + $0x20] sm:$0xff]
        %v2634 = vld [vmem:[%s2628 + $0x28] sm:$0x3]
        %v2635 = vld [vmem:[%s2628 + $0x30] sm:$0xff]
        %v2636 = vld [vmem:[%s2628 + $0x38] sm:$0xff]
        %v2637 = vld [vmem:[%s2628 + $0x40] sm:$0x3]
        %v2638 = vld [vmem:[%s2628 + $0x48] sm:$0xff]
        %v2639 = vld [vmem:[%s2628 + $0x50] sm:$0xff]
        %v2640 = vld [vmem:[%s2628 + $0x58] sm:$0x3]
        %v2641 = vld [vmem:[%s2628 + $0x60] sm:$0xff]
        %v2642 = vld [vmem:[%s2628 + $0x68] sm:$0xff]
        %v2643 = vld [vmem:[%s2628 + $0x70] sm:$0x3]
        %v2644 = vld [vmem:[%s2628 + $0x78] sm:$0xff]
        %v2645 = vld [vmem:[%s2628 + $0x80] sm:$0xff]
        %v2646 = vld [vmem:[%s2628 + $0x88] sm:$0x3]
        %v2647 = vld [vmem:[%s2628 + $0x90] sm:$0xff]
        %v2648 = vld [vmem:[%s2628 + $0x98] sm:$0xff]
        %v2649 = vld [vmem:[%s2628 + $0xa0] sm:$0x3]
        %v2650 = vld [vmem:[%s2628 + $0xa8] sm:$0xff]
        %v2651 = vld [vmem:[%s2628 + $0xb0] sm:$0xff]
        %v2652 = vld [vmem:[%s2628 + $0xb8] sm:$0x3]
        %v2653 = vld [vmem:[%s2628 + $0xc0] sm:$0xff]
        %v2654 = vld [vmem:[%s2628 + $0xc8] sm:$0xff]
        %v2655 = vld [vmem:[%s2628 + $0xd0] sm:$0x3]
        %v2656 = vld [vmem:[%s2628 + $0xd8] sm:$0xff]
        %v2657 = vld [vmem:[%s2628 + $0xe0] sm:$0xff]
        %v2658 = vld [vmem:[%s2628 + $0xe8] sm:$0x3]
        %v2659 = vld [vmem:[%s2628 + $0xf0] sm:$0xff]
        %v2660 = vld [vmem:[%s2628 + $0xf8] sm:$0xff]
        %v2661 = vld [vmem:[%s2628 + $0x100] sm:$0x3]
        %v2662 = vld [vmem:[%s2628 + $0x108] sm:$0xff]
        %v2663 = vld [vmem:[%s2628 + $0x110] sm:$0xff]
        %v2664 = vld [vmem:[%s2628 + $0x118] sm:$0x3]
        %v2665 = vld [vmem:[%s2628 + $0x120] sm:$0xff]
        %v2666 = vld [vmem:[%s2628 + $0x128] sm:$0xff]
        %v2667 = vld [vmem:[%s2628 + $0x130] sm:$0x3]
        %v2668 = vld [vmem:[%s2628 + $0x138] sm:$0xff]
        %v2669 = vld [vmem:[%s2628 + $0x140] sm:$0xff]
        %v2670 = vld [vmem:[%s2628 + $0x148] sm:$0x3]
        %v2671 = vld [vmem:[%s2628 + $0x150] sm:$0xff]
        %v2672 = vld [vmem:[%s2628 + $0x158] sm:$0xff]
        %v2673 = vld [vmem:[%s2628 + $0x160] sm:$0x3]
        %v2674 = vld [vmem:[%s2628 + $0x168] sm:$0xff]
        %v2675 = vld [vmem:[%s2628 + $0x170] sm:$0xff]
        %v2676 = vld [vmem:[%s2628 + $0x178] sm:$0x3]
        %v2725 = vrot.slane %v2629, 1
        %v2726 = vrot.slane %v2630, 1
        %v2727 = vsel %vm1149, %v2725, %v2726
        %v2728 = vrot.slane %v2631, 1
        %v2729 = vsel %vm1149, %v2726, %v2728
        %v2730 = vrot.slane %v2632, 1
        %v2731 = vrot.slane %v2633, 1
        %v2732 = vsel %vm1149, %v2730, %v2731
        %v2733 = vrot.slane %v2634, 1
        %v2734 = vsel %vm1149, %v2731, %v2733
        %v2735 = vrot.slane %v2635, 1
        %v2736 = vrot.slane %v2636, 1
        %v2737 = vsel %vm1149, %v2735, %v2736
        %v2738 = vrot.slane %v2637, 1
        %v2739 = vsel %vm1149, %v2736, %v2738
        %v2740 = vrot.slane %v2638, 1
        %v2741 = vrot.slane %v2639, 1
        %v2742 = vsel %vm1149, %v2740, %v2741
        %v2743 = vrot.slane %v2640, 1
        %v2744 = vsel %vm1149, %v2741, %v2743
        %v2745 = vrot.slane %v2641, 1
        %v2746 = vrot.slane %v2642, 1
        %v2747 = vsel %vm1149, %v2745, %v2746
        %v2748 = vrot.slane %v2643, 1
        %v2749 = vsel %vm1149, %v2746, %v2748
        %v2750 = vrot.slane %v2644, 1
        %v2751 = vrot.slane %v2645, 1
        %v2752 = vsel %vm1149, %v2750, %v2751
        %v2753 = vrot.slane %v2646, 1
        %v2754 = vsel %vm1149, %v2751, %v2753
        %v2755 = vrot.slane %v2647, 1
        %v2756 = vrot.slane %v2648, 1
        %v2757 = vsel %vm1149, %v2755, %v2756
        %v2758 = vrot.slane %v2649, 1
        %v2759 = vsel %vm1149, %v2756, %v2758
        %v2760 = vrot.slane %v2650, 1
        %v2761 = vrot.slane %v2651, 1
        %v2762 = vsel %vm1149, %v2760, %v2761
        %v2763 = vrot.slane %v2652, 1
        %v2764 = vsel %vm1149, %v2761, %v2763
        %v2765 = vrot.slane %v2653, 1
        %v2766 = vrot.slane %v2654, 1
        %v2767 = vsel %vm1149, %v2765, %v2766
        %v2768 = vrot.slane %v2655, 1
        %v2769 = vsel %vm1149, %v2766, %v2768
        %v2770 = vrot.slane %v2656, 1
        %v2771 = vrot.slane %v2657, 1
        %v2772 = vsel %vm1149, %v2770, %v2771
        %v2773 = vrot.slane %v2658, 1
        %v2774 = vsel %vm1149, %v2771, %v2773
        %v2775 = vrot.slane %v2659, 1
        %v2776 = vrot.slane %v2660, 1
        %v2777 = vsel %vm1149, %v2775, %v2776
        %v2778 = vrot.slane %v2661, 1
        %v2779 = vsel %vm1149, %v2776, %v2778
        %v2780 = vrot.slane %v2662, 1
        %v2781 = vrot.slane %v2663, 1
        %v2782 = vsel %vm1149, %v2780, %v2781
        %v2783 = vrot.slane %v2664, 1
        %v2784 = vsel %vm1149, %v2781, %v2783
        %v2785 = vrot.slane %v2665, 1
        %v2786 = vrot.slane %v2666, 1
        %v2787 = vsel %vm1149, %v2785, %v2786
        %v2788 = vrot.slane %v2667, 1
        %v2789 = vsel %vm1149, %v2786, %v2788
        %v2790 = vrot.slane %v2668, 1
        %v2791 = vrot.slane %v2669, 1
        %v2792 = vsel %vm1149, %v2790, %v2791
        %v2793 = vrot.slane %v2670, 1
        %v2794 = vsel %vm1149, %v2791, %v2793
        %v2795 = vrot.slane %v2671, 1
        %v2796 = vrot.slane %v2672, 1
        %v2797 = vsel %vm1149, %v2795, %v2796
        %v2798 = vrot.slane %v2673, 1
        %v2799 = vsel %vm1149, %v2796, %v2798
        %v2800 = vrot.slane %v2674, 1
        %v2801 = vrot.slane %v2675, 1
        %v2802 = vsel %vm1149, %v2800, %v2801
        %v2803 = vrot.slane %v2676, 1
        %v2804 = vsel %vm1149, %v2801, %v2803
        %2805 = vrot.lane.b32.xlu0 %v2727, 32
        %v2806 = vpop.permute.xlu0 %2805
        %2807 = vrot.lane.b32.xlu0 %v2729, 32
        %v2808 = vpop.permute.xlu0 %2807
        %2809 = vrot.lane.b32.xlu0 %v2732, 32
        %v2810 = vpop.permute.xlu0 %2809
        %2811 = vrot.lane.b32.xlu0 %v2734, 32
        %v2812 = vpop.permute.xlu0 %2811
        %2813 = vrot.lane.b32.xlu0 %v2737, 32
        %v2814 = vpop.permute.xlu0 %2813
        %2815 = vrot.lane.b32.xlu0 %v2739, 32
        %v2816 = vpop.permute.xlu0 %2815
        %2817 = vrot.lane.b32.xlu0 %v2742, 32
        %v2818 = vpop.permute.xlu0 %2817
        %2819 = vrot.lane.b32.xlu0 %v2744, 32
        %v2820 = vpop.permute.xlu0 %2819
        %2821 = vrot.lane.b32.xlu0 %v2747, 32
        %v2822 = vpop.permute.xlu0 %2821
        %2823 = vrot.lane.b32.xlu0 %v2749, 32
        %v2824 = vpop.permute.xlu0 %2823
        %2825 = vrot.lane.b32.xlu0 %v2752, 32
        %v2826 = vpop.permute.xlu0 %2825
        %2827 = vrot.lane.b32.xlu0 %v2754, 32
        %v2828 = vpop.permute.xlu0 %2827
        %2829 = vrot.lane.b32.xlu0 %v2757, 32
        %v2830 = vpop.permute.xlu0 %2829
        %2831 = vrot.lane.b32.xlu0 %v2759, 32
        %v2832 = vpop.permute.xlu0 %2831
        %2833 = vrot.lane.b32.xlu0 %v2762, 32
        %v2834 = vpop.permute.xlu0 %2833
        %2835 = vrot.lane.b32.xlu0 %v2764, 32
        %v2836 = vpop.permute.xlu0 %2835
        %2837 = vrot.lane.b32.xlu0 %v2767, 32
        %v2838 = vpop.permute.xlu0 %2837
        %2839 = vrot.lane.b32.xlu0 %v2769, 32
        %v2840 = vpop.permute.xlu0 %2839
        %2841 = vrot.lane.b32.xlu0 %v2772, 32
        %v2842 = vpop.permute.xlu0 %2841
        %2843 = vrot.lane.b32.xlu0 %v2774, 32
        %v2844 = vpop.permute.xlu0 %2843
        %2845 = vrot.lane.b32.xlu0 %v2777, 32
        %v2846 = vpop.permute.xlu0 %2845
        %2847 = vrot.lane.b32.xlu0 %v2779, 32
        %v2848 = vpop.permute.xlu0 %2847
        %2849 = vrot.lane.b32.xlu0 %v2782, 32
        %v2850 = vpop.permute.xlu0 %2849
        %2851 = vrot.lane.b32.xlu0 %v2784, 32
        %v2852 = vpop.permute.xlu0 %2851
        %2853 = vrot.lane.b32.xlu0 %v2787, 32
        %v2854 = vpop.permute.xlu0 %2853
        %2855 = vrot.lane.b32.xlu0 %v2789, 32
        %v2856 = vpop.permute.xlu0 %2855
        %2857 = vrot.lane.b32.xlu0 %v2792, 32
        %v2858 = vpop.permute.xlu0 %2857
        %2859 = vrot.lane.b32.xlu0 %v2794, 32
        %v2860 = vpop.permute.xlu0 %2859
        %2861 = vrot.lane.b32.xlu0 %v2797, 32
        %v2862 = vpop.permute.xlu0 %2861
        %2863 = vrot.lane.b32.xlu0 %v2799, 32
        %v2864 = vpop.permute.xlu0 %2863
        %2865 = vrot.lane.b32.xlu0 %v2802, 32
        %v2866 = vpop.permute.xlu0 %2865
        %2867 = vrot.lane.b32.xlu0 %v2804, 32
        %v2868 = vpop.permute.xlu0 %2867
        %v2901 = vrot.slane %v2629, 2
        %v2902 = vrot.slane %v2630, 2
        %v2903 = vsel %vm1326, %v2901, %v2902
        %v2904 = vrot.slane %v2631, 2
        %v2905 = vsel %vm1326, %v2902, %v2904
        %v2906 = vrot.slane %v2632, 2
        %v2907 = vrot.slane %v2633, 2
        %v2908 = vsel %vm1326, %v2906, %v2907
        %v2909 = vrot.slane %v2634, 2
        %v2910 = vsel %vm1326, %v2907, %v2909
        %v2911 = vrot.slane %v2635, 2
        %v2912 = vrot.slane %v2636, 2
        %v2913 = vsel %vm1326, %v2911, %v2912
        %v2914 = vrot.slane %v2637, 2
        %v2915 = vsel %vm1326, %v2912, %v2914
        %v2916 = vrot.slane %v2638, 2
        %v2917 = vrot.slane %v2639, 2
        %v2918 = vsel %vm1326, %v2916, %v2917
        %v2919 = vrot.slane %v2640, 2
        %v2920 = vsel %vm1326, %v2917, %v2919
        %v2921 = vrot.slane %v2641, 2
        %v2922 = vrot.slane %v2642, 2
        %v2923 = vsel %vm1326, %v2921, %v2922
        %v2924 = vrot.slane %v2643, 2
        %v2925 = vsel %vm1326, %v2922, %v2924
        %v2926 = vrot.slane %v2644, 2
        %v2927 = vrot.slane %v2645, 2
        %v2928 = vsel %vm1326, %v2926, %v2927
        %v2929 = vrot.slane %v2646, 2
        %v2930 = vsel %vm1326, %v2927, %v2929
        %v2931 = vrot.slane %v2647, 2
        %v2932 = vrot.slane %v2648, 2
        %v2933 = vsel %vm1326, %v2931, %v2932
        %v2934 = vrot.slane %v2649, 2
        %v2935 = vsel %vm1326, %v2932, %v2934
        %v2936 = vrot.slane %v2650, 2
        %v2937 = vrot.slane %v2651, 2
        %v2938 = vsel %vm1326, %v2936, %v2937
        %v2939 = vrot.slane %v2652, 2
        %v2940 = vsel %vm1326, %v2937, %v2939
        %v2941 = vrot.slane %v2653, 2
        %v2942 = vrot.slane %v2654, 2
        %v2943 = vsel %vm1326, %v2941, %v2942
        %v2944 = vrot.slane %v2655, 2
        %v2945 = vsel %vm1326, %v2942, %v2944
        %v2946 = vrot.slane %v2656, 2
        %v2947 = vrot.slane %v2657, 2
        %v2948 = vsel %vm1326, %v2946, %v2947
        %v2949 = vrot.slane %v2658, 2
        %v2950 = vsel %vm1326, %v2947, %v2949
        %v2951 = vrot.slane %v2659, 2
        %v2952 = vrot.slane %v2660, 2
        %v2953 = vsel %vm1326, %v2951, %v2952
        %v2954 = vrot.slane %v2661, 2
        %v2955 = vsel %vm1326, %v2952, %v2954
        %v2956 = vrot.slane %v2662, 2
        %v2957 = vrot.slane %v2663, 2
        %v2958 = vsel %vm1326, %v2956, %v2957
        %v2959 = vrot.slane %v2664, 2
        %v2960 = vsel %vm1326, %v2957, %v2959
        %v2961 = vrot.slane %v2665, 2
        %v2962 = vrot.slane %v2666, 2
        %v2963 = vsel %vm1326, %v2961, %v2962
        %v2964 = vrot.slane %v2667, 2
        %v2965 = vsel %vm1326, %v2962, %v2964
        %v2966 = vrot.slane %v2668, 2
        %v2967 = vrot.slane %v2669, 2
        %v2968 = vsel %vm1326, %v2966, %v2967
        %v2969 = vrot.slane %v2670, 2
        %v2970 = vsel %vm1326, %v2967, %v2969
        %v2971 = vrot.slane %v2671, 2
        %v2972 = vrot.slane %v2672, 2
        %v2973 = vsel %vm1326, %v2971, %v2972
        %v2974 = vrot.slane %v2673, 2
        %v2975 = vsel %vm1326, %v2972, %v2974
        %v2976 = vrot.slane %v2674, 2
        %v2977 = vrot.slane %v2675, 2
        %v2978 = vsel %vm1326, %v2976, %v2977
        %v2979 = vrot.slane %v2676, 2
        %v2980 = vsel %vm1326, %v2977, %v2979
        %2981 = vrot.lane.b32.xlu0 %v2903, 64
        %v2982 = vpop.permute.xlu0 %2981
        %2983 = vrot.lane.b32.xlu0 %v2905, 64
        %v2984 = vpop.permute.xlu0 %2983
        %2985 = vrot.lane.b32.xlu0 %v2908, 64
        %v2986 = vpop.permute.xlu0 %2985
        %2987 = vrot.lane.b32.xlu0 %v2910, 64
        %v2988 = vpop.permute.xlu0 %2987
        %2989 = vrot.lane.b32.xlu0 %v2913, 64
        %v2990 = vpop.permute.xlu0 %2989
        %2991 = vrot.lane.b32.xlu0 %v2915, 64
        %v2992 = vpop.permute.xlu0 %2991
        %2993 = vrot.lane.b32.xlu0 %v2918, 64
        %v2994 = vpop.permute.xlu0 %2993
        %2995 = vrot.lane.b32.xlu0 %v2920, 64
        %v2996 = vpop.permute.xlu0 %2995
        %2997 = vrot.lane.b32.xlu0 %v2923, 64
        %v2998 = vpop.permute.xlu0 %2997
        %2999 = vrot.lane.b32.xlu0 %v2925, 64
        %v3000 = vpop.permute.xlu0 %2999
        %3001 = vrot.lane.b32.xlu0 %v2928, 64
        %v3002 = vpop.permute.xlu0 %3001
        %3003 = vrot.lane.b32.xlu0 %v2930, 64
        %v3004 = vpop.permute.xlu0 %3003
        %3005 = vrot.lane.b32.xlu0 %v2933, 64
        %v3006 = vpop.permute.xlu0 %3005
        %3007 = vrot.lane.b32.xlu0 %v2935, 64
        %v3008 = vpop.permute.xlu0 %3007
        %3009 = vrot.lane.b32.xlu0 %v2938, 64
        %v3010 = vpop.permute.xlu0 %3009
        %3011 = vrot.lane.b32.xlu0 %v2940, 64
        %v3012 = vpop.permute.xlu0 %3011
        %3013 = vrot.lane.b32.xlu0 %v2943, 64
        %v3014 = vpop.permute.xlu0 %3013
        %3015 = vrot.lane.b32.xlu0 %v2945, 64
        %v3016 = vpop.permute.xlu0 %3015
        %3017 = vrot.lane.b32.xlu0 %v2948, 64
        %v3018 = vpop.permute.xlu0 %3017
        %3019 = vrot.lane.b32.xlu0 %v2950, 64
        %v3020 = vpop.permute.xlu0 %3019
        %3021 = vrot.lane.b32.xlu0 %v2953, 64
        %v3022 = vpop.permute.xlu0 %3021
        %3023 = vrot.lane.b32.xlu0 %v2955, 64
        %v3024 = vpop.permute.xlu0 %3023
        %3025 = vrot.lane.b32.xlu0 %v2958, 64
        %v3026 = vpop.permute.xlu0 %3025
        %3027 = vrot.lane.b32.xlu0 %v2960, 64
        %v3028 = vpop.permute.xlu0 %3027
        %3029 = vrot.lane.b32.xlu0 %v2963, 64
        %v3030 = vpop.permute.xlu0 %3029
        %3031 = vrot.lane.b32.xlu0 %v2965, 64
        %v3032 = vpop.permute.xlu0 %3031
        %3033 = vrot.lane.b32.xlu0 %v2968, 64
        %v3034 = vpop.permute.xlu0 %3033
        %3035 = vrot.lane.b32.xlu0 %v2970, 64
        %v3036 = vpop.permute.xlu0 %3035
        %3037 = vrot.lane.b32.xlu0 %v2973, 64
        %v3038 = vpop.permute.xlu0 %3037
        %3039 = vrot.lane.b32.xlu0 %v2975, 64
        %v3040 = vpop.permute.xlu0 %3039
        %3041 = vrot.lane.b32.xlu0 %v2978, 64
        %v3042 = vpop.permute.xlu0 %3041
        %3043 = vrot.lane.b32.xlu0 %v2980, 64
        %v3044 = vpop.permute.xlu0 %3043
        %v3077 = vsel %vm978, %v2629, %v2806
        %v3078 = vsel %vm978, %v2630, %v2808
        %v3079 = vsel %vm978, %v2632, %v2810
        %v3080 = vsel %vm978, %v2633, %v2812
        %v3081 = vsel %vm978, %v2635, %v2814
        %v3082 = vsel %vm978, %v2636, %v2816
        %v3083 = vsel %vm978, %v2638, %v2818
        %v3084 = vsel %vm978, %v2639, %v2820
        %v3085 = vsel %vm978, %v2641, %v2822
        %v3086 = vsel %vm978, %v2642, %v2824
        %v3087 = vsel %vm978, %v2644, %v2826
        %v3088 = vsel %vm978, %v2645, %v2828
        %v3089 = vsel %vm978, %v2647, %v2830
        %v3090 = vsel %vm978, %v2648, %v2832
        %v3091 = vsel %vm978, %v2650, %v2834
        %v3092 = vsel %vm978, %v2651, %v2836
        %v3093 = vsel %vm978, %v2653, %v2838
        %v3094 = vsel %vm978, %v2654, %v2840
        %v3095 = vsel %vm978, %v2656, %v2842
        %v3096 = vsel %vm978, %v2657, %v2844
        %v3097 = vsel %vm978, %v2659, %v2846
        %v3098 = vsel %vm978, %v2660, %v2848
        %v3099 = vsel %vm978, %v2662, %v2850
        %v3100 = vsel %vm978, %v2663, %v2852
        %v3101 = vsel %vm978, %v2665, %v2854
        %v3102 = vsel %vm978, %v2666, %v2856
        %v3103 = vsel %vm978, %v2668, %v2858
        %v3104 = vsel %vm978, %v2669, %v2860
        %v3105 = vsel %vm978, %v2671, %v2862
        %v3106 = vsel %vm978, %v2672, %v2864
        %v3107 = vsel %vm978, %v2674, %v2866
        %v3108 = vsel %vm978, %v2675, %v2868
        %v3109 = vsel %vm1535, %v3077, %v2982
        %v3110 = vsel %vm1535, %v3078, %v2984
        %v3111 = vsel %vm1535, %v3079, %v2986
        %v3112 = vsel %vm1535, %v3080, %v2988
        %v3113 = vsel %vm1535, %v3081, %v2990
        %v3114 = vsel %vm1535, %v3082, %v2992
        %v3115 = vsel %vm1535, %v3083, %v2994
        %v3116 = vsel %vm1535, %v3084, %v2996
        %v3117 = vsel %vm1535, %v3085, %v2998
        %v3118 = vsel %vm1535, %v3086, %v3000
        %v3119 = vsel %vm1535, %v3087, %v3002
        %v3120 = vsel %vm1535, %v3088, %v3004
        %v3121 = vsel %vm1535, %v3089, %v3006
        %v3122 = vsel %vm1535, %v3090, %v3008
        %v3123 = vsel %vm1535, %v3091, %v3010
        %v3124 = vsel %vm1535, %v3092, %v3012
        %v3125 = vsel %vm1535, %v3093, %v3014
        %v3126 = vsel %vm1535, %v3094, %v3016
        %v3127 = vsel %vm1535, %v3095, %v3018
        %v3128 = vsel %vm1535, %v3096, %v3020
        %v3129 = vsel %vm1535, %v3097, %v3022
        %v3130 = vsel %vm1535, %v3098, %v3024
        %v3131 = vsel %vm1535, %v3099, %v3026
        %v3132 = vsel %vm1535, %v3100, %v3028
        %v3133 = vsel %vm1535, %v3101, %v3030
        %v3134 = vsel %vm1535, %v3102, %v3032
        %v3135 = vsel %vm1535, %v3103, %v3034
        %v3136 = vsel %vm1535, %v3104, %v3036
        %v3137 = vsel %vm1535, %v3105, %v3038
        %v3138 = vsel %vm1535, %v3106, %v3040
        %v3139 = vsel %vm1535, %v3107, %v3042
        %v3140 = vsel %vm1535, %v3108, %v3044
        %v3141 = vpack.c.bf16 %v3110, %v3109
        %v3142 = vpack.c.bf16 %v3112, %v3111
        %v3143 = vpack.c.bf16 %v3114, %v3113
        %v3144 = vpack.c.bf16 %v3116, %v3115
        %v3145 = vpack.c.bf16 %v3118, %v3117
        %v3146 = vpack.c.bf16 %v3120, %v3119
        %v3147 = vpack.c.bf16 %v3122, %v3121
        %v3148 = vpack.c.bf16 %v3124, %v3123
        %v3149 = vpack.c.bf16 %v3126, %v3125
        %v3150 = vpack.c.bf16 %v3128, %v3127
        %v3151 = vpack.c.bf16 %v3130, %v3129
        %v3152 = vpack.c.bf16 %v3132, %v3131
        %v3153 = vpack.c.bf16 %v3134, %v3133
        %v3154 = vpack.c.bf16 %v3136, %v3135
        %v3155 = vpack.c.bf16 %v3138, %v3137
        %v3156 = vpack.c.bf16 %v3140, %v3139
        %s3157 = scalar_lea.vmem %s4, 96
        %v3158 = vld [vmem:[%s3157] sm:$0xf]
        %v3159 = vld [vmem:[%s3157 + $0x4] sm:$0xf]
        %v3160 = vld [vmem:[%s3157 + $0x8] sm:$0xf]
        %v3161 = vld [vmem:[%s3157 + $0xc] sm:$0xf]
        %v3162 = vld [vmem:[%s3157 + $0x10] sm:$0xf]
        %v3163 = vld [vmem:[%s3157 + $0x14] sm:$0xf]
        %v3164 = vld [vmem:[%s3157 + $0x18] sm:$0xf]
        %v3165 = vld [vmem:[%s3157 + $0x1c] sm:$0xf]
        %v3166 = vld [vmem:[%s3157 + $0x20] sm:$0xf]
        %v3167 = vld [vmem:[%s3157 + $0x24] sm:$0xf]
        %v3168 = vld [vmem:[%s3157 + $0x28] sm:$0xf]
        %v3169 = vld [vmem:[%s3157 + $0x2c] sm:$0xf]
        %v3182 = vunpack.c.l.b16 %v3158
        %v3183 = vunpack.c.l.b16 %v3159
        %v3184 = vunpack.c.l.b16 %v3160
        %v3185 = vunpack.c.l.b16 %v3161
        %v3186 = vunpack.c.l.b16 %v3162
        %v3187 = vunpack.c.l.b16 %v3163
        %v3188 = vunpack.c.l.b16 %v3164
        %v3189 = vunpack.c.l.b16 %v3165
        %v3190 = vunpack.c.l.b16 %v3166
        %v3191 = vunpack.c.l.b16 %v3167
        %v3192 = vunpack.c.l.b16 %v3168
        %v3193 = vunpack.c.l.b16 %v3169
        %v3194 = vpack.c.b16 %v3183, %v3182
        %v3195 = vpack.c.b16 %v3185, %v3184
        %v3196 = vpack.c.b16 %v3187, %v3186
        %v3197 = vpack.c.b16 %v3189, %v3188
        %v3198 = vpack.c.b16 %v3191, %v3190
        %v3199 = vpack.c.b16 %v3193, %v3192
        %v3207 = vsel %vm2173, %v3141, 0
        %v3210 = vsel %vm2173, %v3142, 0
        %v3213 = vsel %vm2173, %v3143, 0
        %v3216 = vsel %vm2173, %v3144, 0
        %v3219 = vsel %vm2173, %v3145, 0
        %v3222 = vsel %vm2173, %v3146, 0
        %v3225 = vsel %vm2173, %v3147, 0
        %v3228 = vsel %vm2173, %v3148, 0
        %v3231 = vsel %vm2173, %v3149, 0
        %v3234 = vsel %vm2173, %v3150, 0
        %v3237 = vsel %vm2173, %v3151, 0
        %v3240 = vsel %vm2173, %v3152, 0
        %v3243 = vsel %vm2173, %v3153, 0
        %v3246 = vsel %vm2173, %v3154, 0
        %v3249 = vsel %vm2173, %v3155, 0
        %v3252 = vsel %vm2173, %v3156, 0
        %3254 = vmatprep.subr.bf16.mxu0 0
        %3255 = vmatpush1.bf16.msra.mxu0 %v3194
        %3256 = vmatprep.subr.bf16.mxu0 0
        %3257 = vmatpush1.bf16.msra.mxu0 %v3195
        %3258 = vmatprep.subr.bf16.mxu0 0
        %3259 = vmatpush1.bf16.msra.mxu0 %v3196
        %3260 = vmatprep.subr.bf16.mxu0 0
        %3261 = vmatpush1.bf16.msra.mxu0 %v3197
        %3262 = vmatprep.subr.bf16.mxu0 0
        %3263 = vmatpush1.bf16.msra.mxu0 %v3198
        %3264 = vmatprep.subr.bf16.mxu0 0
        %3265 = vmatpush1.bf16.msra.mxu0 %v3199
        %3266 = vmatprep.subr.bf16.mxu0 0
        %3267 = vmatpush1.bf16.msra.mxu0 0
        %3268 = vmatprep.subr.bf16.mxu0 0
        %3269 = vmatpush1.bf16.msra.mxu0 0
        %3270 = vmatprep.subr.bf16.mxu0 0
        %3271 = vmatpush1.bf16.msra.mxu0 0
        %3272 = vmatprep.subr.bf16.mxu0 0
        %3273 = vmatpush1.bf16.msra.mxu0 0
        %3274 = vmatprep.subr.bf16.mxu0 0
        %3275 = vmatpush1.bf16.msra.mxu0 0
        %3276 = vmatprep.subr.bf16.mxu0 0
        %3277 = vmatpush1.bf16.msra.mxu0 0
        %3278 = vmatprep.subr.bf16.mxu0 0
        %3279 = vmatpush1.bf16.msra.mxu0 0
        %3280 = vmatprep.subr.bf16.mxu0 0
        %3281 = vmatpush1.bf16.msra.mxu0 0
        %3282 = vmatprep.subr.bf16.mxu0 0
        %3283 = vmatpush1.bf16.msra.mxu0 0
        %3284 = vmatprep.subr.bf16.mxu0 0
        %3285 = vmatpush1.bf16.msra.mxu0 0
        %3286 = vmatprep.mubr.bf16.mxu0 0
        %3287 = vmatmul.mubr.bf16.gmra.mrb[0].mxu0 %v3207
        %v3288 = vpop.f32.mrb[0].mxu0
        %v3289 = vadd.f32 0.0, %v3288
        %v3290 = vpop.f32.mrb[0].mxu0
        %v3291 = vpop.f32.mrb[0].mxu0
        %v3292 = vadd.f32 0.0, %v3291
        %v3293 = vpop.f32.mrb[0].mxu0
        %3294 = vmatprep.mubr.bf16.mxu0 0
        %3295 = vmatmul.mubr.bf16.gmra.mrb[0].mxu0 %v3210
        %v3296 = vpop.f32.mrb[0].mxu0
        %v3297 = vadd.f32 0.0, %v3296
        %v3298 = vpop.f32.mrb[0].mxu0
        %v3299 = vpop.f32.mrb[0].mxu0
        %v3300 = vadd.f32 0.0, %v3299
        %v3301 = vpop.f32.mrb[0].mxu0
        %3302 = vmatprep.mubr.bf16.mxu0 0
        %3303 = vmatmul.mubr.bf16.gmra.mrb[0].mxu0 %v3213
        %v3304 = vpop.f32.mrb[0].mxu0
        %v3305 = vadd.f32 0.0, %v3304
        %v3306 = vpop.f32.mrb[0].mxu0
        %v3307 = vpop.f32.mrb[0].mxu0
        %v3308 = vadd.f32 0.0, %v3307
        %v3309 = vpop.f32.mrb[0].mxu0
        %3310 = vmatprep.mubr.bf16.mxu0 0
        %3311 = vmatmul.mubr.bf16.gmra.mrb[0].mxu0 %v3216
        %v3312 = vpop.f32.mrb[0].mxu0
        %v3313 = vadd.f32 0.0, %v3312
        %v3314 = vpop.f32.mrb[0].mxu0
        %v3315 = vpop.f32.mrb[0].mxu0
        %v3316 = vadd.f32 0.0, %v3315
        %v3317 = vpop.f32.mrb[0].mxu0
        %3318 = vmatprep.mubr.bf16.mxu0 0
        %3319 = vmatmul.mubr.bf16.gmra.mrb[0].mxu0 %v3219
        %v3320 = vpop.f32.mrb[0].mxu0
        %v3321 = vadd.f32 0.0, %v3320
        %v3322 = vpop.f32.mrb[0].mxu0
        %v3323 = vpop.f32.mrb[0].mxu0
        %v3324 = vadd.f32 0.0, %v3323
        %v3325 = vpop.f32.mrb[0].mxu0
        %3326 = vmatprep.mubr.bf16.mxu0 0
        %3327 = vmatmul.mubr.bf16.gmra.mrb[0].mxu0 %v3222
        %v3328 = vpop.f32.mrb[0].mxu0
        %v3329 = vadd.f32 0.0, %v3328
        %v3330 = vpop.f32.mrb[0].mxu0
        %v3331 = vpop.f32.mrb[0].mxu0
        %v3332 = vadd.f32 0.0, %v3331
        %v3333 = vpop.f32.mrb[0].mxu0
        %3334 = vmatprep.mubr.bf16.mxu0 0
        %3335 = vmatmul.mubr.bf16.gmra.mrb[0].mxu0 %v3225
        %v3336 = vpop.f32.mrb[0].mxu0
        %v3337 = vadd.f32 0.0, %v3336
        %v3338 = vpop.f32.mrb[0].mxu0
        %v3339 = vpop.f32.mrb[0].mxu0
        %v3340 = vadd.f32 0.0, %v3339
        %v3341 = vpop.f32.mrb[0].mxu0
        %3342 = vmatprep.mubr.bf16.mxu0 0
        %3343 = vmatmul.mubr.bf16.gmra.mrb[0].mxu0 %v3228
        %v3344 = vpop.f32.mrb[0].mxu0
        %v3345 = vadd.f32 0.0, %v3344
        %v3346 = vpop.f32.mrb[0].mxu0
        %v3347 = vpop.f32.mrb[0].mxu0
        %v3348 = vadd.f32 0.0, %v3347
        %v3349 = vpop.f32.mrb[0].mxu0
        %3350 = vmatprep.mubr.bf16.mxu0 0
        %3351 = vmatmul.mubr.bf16.gmra.mrb[0].mxu0 %v3231
        %v3352 = vpop.f32.mrb[0].mxu0
        %v3353 = vadd.f32 0.0, %v3352
        %v3354 = vpop.f32.mrb[0].mxu0
        %v3355 = vpop.f32.mrb[0].mxu0
        %v3356 = vadd.f32 0.0, %v3355
        %v3357 = vpop.f32.mrb[0].mxu0
        %3358 = vmatprep.mubr.bf16.mxu0 0
        %3359 = vmatmul.mubr.bf16.gmra.mrb[0].mxu0 %v3234
        %v3360 = vpop.f32.mrb[0].mxu0
        %v3361 = vadd.f32 0.0, %v3360
        %v3362 = vpop.f32.mrb[0].mxu0
        %v3363 = vpop.f32.mrb[0].mxu0
        %v3364 = vadd.f32 0.0, %v3363
        %v3365 = vpop.f32.mrb[0].mxu0
        %3366 = vmatprep.mubr.bf16.mxu0 0
        %3367 = vmatmul.mubr.bf16.gmra.mrb[0].mxu0 %v3237
        %v3368 = vpop.f32.mrb[0].mxu0
        %v3369 = vadd.f32 0.0, %v3368
        %v3370 = vpop.f32.mrb[0].mxu0
        %v3371 = vpop.f32.mrb[0].mxu0
        %v3372 = vadd.f32 0.0, %v3371
        %v3373 = vpop.f32.mrb[0].mxu0
        %3374 = vmatprep.mubr.bf16.mxu0 0
        %3375 = vmatmul.mubr.bf16.gmra.mrb[0].mxu0 %v3240
        %v3376 = vpop.f32.mrb[0].mxu0
        %v3377 = vadd.f32 0.0, %v3376
        %v3378 = vpop.f32.mrb[0].mxu0
        %v3379 = vpop.f32.mrb[0].mxu0
        %v3380 = vadd.f32 0.0, %v3379
        %v3381 = vpop.f32.mrb[0].mxu0
        %3382 = vmatprep.mubr.bf16.mxu0 0
        %3383 = vmatmul.mubr.bf16.gmra.mrb[0].mxu0 %v3243
        %v3384 = vpop.f32.mrb[0].mxu0
        %v3385 = vadd.f32 0.0, %v3384
        %v3386 = vpop.f32.mrb[0].mxu0
        %v3387 = vpop.f32.mrb[0].mxu0
        %v3388 = vadd.f32 0.0, %v3387
        %v3389 = vpop.f32.mrb[0].mxu0
        %3390 = vmatprep.mubr.bf16.mxu0 0
        %3391 = vmatmul.mubr.bf16.gmra.mrb[0].mxu0 %v3246
        %v3392 = vpop.f32.mrb[0].mxu0
        %v3393 = vadd.f32 0.0, %v3392
        %v3394 = vpop.f32.mrb[0].mxu0
        %v3395 = vpop.f32.mrb[0].mxu0
        %v3396 = vadd.f32 0.0, %v3395
        %v3397 = vpop.f32.mrb[0].mxu0
        %3398 = vmatprep.mubr.bf16.mxu0 0
        %3399 = vmatmul.mubr.bf16.gmra.mrb[0].mxu0 %v3249
        %v3400 = vpop.f32.mrb[0].mxu0
        %v3401 = vadd.f32 0.0, %v3400
        %v3402 = vpop.f32.mrb[0].mxu0
        %v3403 = vpop.f32.mrb[0].mxu0
        %v3404 = vadd.f32 0.0, %v3403
        %v3405 = vpop.f32.mrb[0].mxu0
        %3406 = vmatprep.mubr.bf16.mxu0 0
        %3407 = vmatmul.mubr.bf16.gmra.mrb[0].mxu0 %v3252
        %v3408 = vpop.f32.mrb[0].mxu0
        %v3409 = vadd.f32 0.0, %v3408
        %v3410 = vpop.f32.mrb[0].mxu0
        %v3411 = vpop.f32.mrb[0].mxu0
        %v3412 = vadd.f32 0.0, %v3411
        %v3413 = vpop.f32.mrb[0].mxu0
        %3414 = vdwg.mxu0
        %v3415 = vadd.f32 %v2502, %v3289
        %v3416 = vadd.f32 %v2505, %v3292
        %v3417 = vadd.f32 %v2510, %v3297
        %v3418 = vadd.f32 %v2513, %v3300
        %v3419 = vadd.f32 %v2518, %v3305
        %v3420 = vadd.f32 %v2521, %v3308
        %v3421 = vadd.f32 %v2526, %v3313
        %v3422 = vadd.f32 %v2529, %v3316
        %v3423 = vadd.f32 %v2534, %v3321
        %v3424 = vadd.f32 %v2537, %v3324
        %v3425 = vadd.f32 %v2542, %v3329
        %v3426 = vadd.f32 %v2545, %v3332
        %v3427 = vadd.f32 %v2550, %v3337
        %v3428 = vadd.f32 %v2553, %v3340
        %v3429 = vadd.f32 %v2558, %v3345
        %v3430 = vadd.f32 %v2561, %v3348
        %v3431 = vadd.f32 %v2566, %v3353
        %v3432 = vadd.f32 %v2569, %v3356
        %v3433 = vadd.f32 %v2574, %v3361
        %v3434 = vadd.f32 %v2577, %v3364
        %v3435 = vadd.f32 %v2582, %v3369
        %v3436 = vadd.f32 %v2585, %v3372
        %v3437 = vadd.f32 %v2590, %v3377
        %v3438 = vadd.f32 %v2593, %v3380
        %v3439 = vadd.f32 %v2598, %v3385
        %v3440 = vadd.f32 %v2601, %v3388
        %v3441 = vadd.f32 %v2606, %v3393
        %v3442 = vadd.f32 %v2609, %v3396
        %v3443 = vadd.f32 %v2614, %v3401
        %v3444 = vadd.f32 %v2617, %v3404
        %v3445 = vadd.f32 %v2622, %v3409
        %v3446 = vadd.f32 %v2625, %v3412
        %v3447 = vld [vmem:[%s5] sm:$0x1]
        %v3449 = vlaneseq
        %v3450 = vshrl.u32 %v3449, 7
        %v3451 = vsub.s32 0, %v3450
        %v3452 = vrot.slane %v3447, %v3451
        %v3454 = vmul.f32 %v3415, %v3452
        %v3455 = vmul.f32 %v3416, %v3452
        %v3456 = vmul.f32 %v3417, %v3452
        %v3457 = vmul.f32 %v3418, %v3452
        %v3458 = vmul.f32 %v3419, %v3452
        %v3459 = vmul.f32 %v3420, %v3452
        %v3460 = vmul.f32 %v3421, %v3452
        %v3461 = vmul.f32 %v3422, %v3452
        %v3462 = vmul.f32 %v3423, %v3452
        %v3463 = vmul.f32 %v3424, %v3452
        %v3464 = vmul.f32 %v3425, %v3452
        %v3465 = vmul.f32 %v3426, %v3452
        %v3466 = vmul.f32 %v3427, %v3452
        %v3467 = vmul.f32 %v3428, %v3452
        %v3468 = vmul.f32 %v3429, %v3452
        %v3469 = vmul.f32 %v3430, %v3452
        %v3470 = vmul.f32 %v3431, %v3452
        %v3471 = vmul.f32 %v3432, %v3452
        %v3472 = vmul.f32 %v3433, %v3452
        %v3473 = vmul.f32 %v3434, %v3452
        %v3474 = vmul.f32 %v3435, %v3452
        %v3475 = vmul.f32 %v3436, %v3452
        %v3476 = vmul.f32 %v3437, %v3452
        %v3477 = vmul.f32 %v3438, %v3452
        %v3478 = vmul.f32 %v3439, %v3452
        %v3479 = vmul.f32 %v3440, %v3452
        %v3480 = vmul.f32 %v3441, %v3452
        %v3481 = vmul.f32 %v3442, %v3452
        %v3482 = vmul.f32 %v3443, %v3452
        %v3483 = vmul.f32 %v3444, %v3452
        %v3484 = vmul.f32 %v3445, %v3452
        %v3485 = vmul.f32 %v3446, %v3452
        %v3486 = vld [vmem:[%s6] sm:$0x1]
        %v3488 = vlaneseq
        %v3489 = vshrl.u32 %v3488, 7
        %v3490 = vsub.s32 0, %v3489
        %v3491 = vrot.slane %v3486, %v3490
        %v3493 = vadd.f32 %v3454, %v3491
        %v3494 = vadd.f32 %v3455, %v3491
        %v3495 = vadd.f32 %v3456, %v3491
        %v3496 = vadd.f32 %v3457, %v3491
        %v3497 = vadd.f32 %v3458, %v3491
        %v3498 = vadd.f32 %v3459, %v3491
        %v3499 = vadd.f32 %v3460, %v3491
        %v3500 = vadd.f32 %v3461, %v3491
        %v3501 = vadd.f32 %v3462, %v3491
        %v3502 = vadd.f32 %v3463, %v3491
        %v3503 = vadd.f32 %v3464, %v3491
        %v3504 = vadd.f32 %v3465, %v3491
        %v3505 = vadd.f32 %v3466, %v3491
        %v3506 = vadd.f32 %v3467, %v3491
        %v3507 = vadd.f32 %v3468, %v3491
        %v3508 = vadd.f32 %v3469, %v3491
        %v3509 = vadd.f32 %v3470, %v3491
        %v3510 = vadd.f32 %v3471, %v3491
        %v3511 = vadd.f32 %v3472, %v3491
        %v3512 = vadd.f32 %v3473, %v3491
        %v3513 = vadd.f32 %v3474, %v3491
        %v3514 = vadd.f32 %v3475, %v3491
        %v3515 = vadd.f32 %v3476, %v3491
        %v3516 = vadd.f32 %v3477, %v3491
        %v3517 = vadd.f32 %v3478, %v3491
        %v3518 = vadd.f32 %v3479, %v3491
        %v3519 = vadd.f32 %v3480, %v3491
        %v3520 = vadd.f32 %v3481, %v3491
        %v3521 = vadd.f32 %v3482, %v3491
        %v3522 = vadd.f32 %v3483, %v3491
        %v3523 = vadd.f32 %v3484, %v3491
        %v3524 = vadd.f32 %v3485, %v3491
        %v3525 = vmax.f32 %v3493, 0.0
        %v3526 = vmax.f32 %v3494, 0.0
        %v3527 = vmax.f32 %v3495, 0.0
        %v3528 = vmax.f32 %v3496, 0.0
        %v3529 = vmax.f32 %v3497, 0.0
        %v3530 = vmax.f32 %v3498, 0.0
        %v3531 = vmax.f32 %v3499, 0.0
        %v3532 = vmax.f32 %v3500, 0.0
        %v3533 = vmax.f32 %v3501, 0.0
        %v3534 = vmax.f32 %v3502, 0.0
        %v3535 = vmax.f32 %v3503, 0.0
        %v3536 = vmax.f32 %v3504, 0.0
        %v3537 = vmax.f32 %v3505, 0.0
        %v3538 = vmax.f32 %v3506, 0.0
        %v3539 = vmax.f32 %v3507, 0.0
        %v3540 = vmax.f32 %v3508, 0.0
        %v3541 = vmax.f32 %v3509, 0.0
        %v3542 = vmax.f32 %v3510, 0.0
        %v3543 = vmax.f32 %v3511, 0.0
        %v3544 = vmax.f32 %v3512, 0.0
        %v3545 = vmax.f32 %v3513, 0.0
        %v3546 = vmax.f32 %v3514, 0.0
        %v3547 = vmax.f32 %v3515, 0.0
        %v3548 = vmax.f32 %v3516, 0.0
        %v3549 = vmax.f32 %v3517, 0.0
        %v3550 = vmax.f32 %v3518, 0.0
        %v3551 = vmax.f32 %v3519, 0.0
        %v3552 = vmax.f32 %v3520, 0.0
        %v3553 = vmax.f32 %v3521, 0.0
        %v3554 = vmax.f32 %v3522, 0.0
        %v3555 = vmax.f32 %v3523, 0.0
        %v3556 = vmax.f32 %v3524, 0.0
        %v3557 = vpack.c.bf16 %v3526, %v3525
        %v3558 = vpack.c.bf16 %v3528, %v3527
        %v3559 = vpack.c.bf16 %v3530, %v3529
        %v3560 = vpack.c.bf16 %v3532, %v3531
        %v3561 = vpack.c.bf16 %v3534, %v3533
        %v3562 = vpack.c.bf16 %v3536, %v3535
        %v3563 = vpack.c.bf16 %v3538, %v3537
        %v3564 = vpack.c.bf16 %v3540, %v3539
        %v3565 = vpack.c.bf16 %v3542, %v3541
        %v3566 = vpack.c.bf16 %v3544, %v3543
        %v3567 = vpack.c.bf16 %v3546, %v3545
        %v3568 = vpack.c.bf16 %v3548, %v3547
        %v3569 = vpack.c.bf16 %v3550, %v3549
        %v3570 = vpack.c.bf16 %v3552, %v3551
        %v3571 = vpack.c.bf16 %v3554, %v3553
        %v3572 = vpack.c.bf16 %v3556, %v3555
        %v3573 = vld [vmem:[%s7] sm:$0xf]
        %v3574 = vld [vmem:[%s7 + $0x4] sm:$0xf]
        %v3575 = vld [vmem:[%s7 + $0x8] sm:$0xf]
        %v3576 = vld [vmem:[%s7 + $0xc] sm:$0xf]
        %v3581 = vunpack.c.l.b16 %v3573
        %v3582 = vunpack.c.l.b16 %v3574
        %v3583 = vunpack.c.l.b16 %v3575
        %v3584 = vunpack.c.l.b16 %v3576
        %v3585 = vpack.c.b16 %v3582, %v3581
        %v3586 = vpack.c.b16 %v3584, %v3583
        %v3590 = vsel %vm978, %v3557, 0
        %v3593 = vsel %vm978, %v3558, 0
        %v3596 = vsel %vm978, %v3559, 0
        %v3599 = vsel %vm978, %v3560, 0
        %v3602 = vsel %vm978, %v3561, 0
        %v3605 = vsel %vm978, %v3562, 0
        %v3608 = vsel %vm978, %v3563, 0
        %v3611 = vsel %vm978, %v3564, 0
        %v3614 = vsel %vm978, %v3565, 0
        %v3617 = vsel %vm978, %v3566, 0
        %v3620 = vsel %vm978, %v3567, 0
        %v3623 = vsel %vm978, %v3568, 0
        %v3626 = vsel %vm978, %v3569, 0
        %v3629 = vsel %vm978, %v3570, 0
        %v3632 = vsel %vm978, %v3571, 0
        %v3635 = vsel %vm978, %v3572, 0
        %3637 = vmatprep.subr.bf16.mxu0 0
        %3638 = vmatpush1.bf16.msra.mxu0 %v3585
        %3639 = vmatprep.subr.bf16.mxu0 0
        %3640 = vmatpush1.bf16.msra.mxu0 %v3586
        %3641 = vmatprep.subr.bf16.mxu0 0
        %3642 = vmatpush1.bf16.msra.mxu0 0
        %3643 = vmatprep.subr.bf16.mxu0 0
        %3644 = vmatpush1.bf16.msra.mxu0 0
        %3645 = vmatprep.subr.bf16.mxu0 0
        %3646 = vmatpush1.bf16.msra.mxu0 0
        %3647 = vmatprep.subr.bf16.mxu0 0
        %3648 = vmatpush1.bf16.msra.mxu0 0
        %3649 = vmatprep.subr.bf16.mxu0 0
        %3650 = vmatpush1.bf16.msra.mxu0 0
        %3651 = vmatprep.subr.bf16.mxu0 0
        %3652 = vmatpush1.bf16.msra.mxu0 0
        %3653 = vmatprep.subr.bf16.mxu0 0
        %3654 = vmatpush1.bf16.msra.mxu0 0
        %3655 = vmatprep.subr.bf16.mxu0 0
        %3656 = vmatpush1.bf16.msra.mxu0 0
        %3657 = vmatprep.subr.bf16.mxu0 0
        %3658 = vmatpush1.bf16.msra.mxu0 0
        %3659 = vmatprep.subr.bf16.mxu0 0
        %3660 = vmatpush1.bf16.msra.mxu0 0
        %3661 = vmatprep.subr.bf16.mxu0 0
        %3662 = vmatpush1.bf16.msra.mxu0 0
        %3663 = vmatprep.subr.bf16.mxu0 0
        %3664 = vmatpush1.bf16.msra.mxu0 0
        %3665 = vmatprep.subr.bf16.mxu0 0
        %3666 = vmatpush1.bf16.msra.mxu0 0
        %3667 = vmatprep.subr.bf16.mxu0 0
        %3668 = vmatpush1.bf16.msra.mxu0 0
        %3669 = vmatprep.mubr.bf16.mxu0 0
        %3670 = vmatmul.mubr.bf16.gmra.mrb[0].mxu0 %v3590
        %v3671 = vpop.f32.mrb[0].mxu0
        %v3672 = vadd.f32 0.0, %v3671
        %v3673 = vpop.f32.mrb[0].mxu0
        %v3674 = vpop.f32.mrb[0].mxu0
        %v3675 = vadd.f32 0.0, %v3674
        %v3676 = vpop.f32.mrb[0].mxu0
        %3677 = vmatprep.mubr.bf16.mxu0 0
        %3678 = vmatmul.mubr.bf16.gmra.mrb[0].mxu0 %v3593
        %v3679 = vpop.f32.mrb[0].mxu0
        %v3680 = vadd.f32 0.0, %v3679
        %v3681 = vpop.f32.mrb[0].mxu0
        %v3682 = vpop.f32.mrb[0].mxu0
        %v3683 = vadd.f32 0.0, %v3682
        %v3684 = vpop.f32.mrb[0].mxu0
        %3685 = vmatprep.mubr.bf16.mxu0 0
        %3686 = vmatmul.mubr.bf16.gmra.mrb[0].mxu0 %v3596
        %v3687 = vpop.f32.mrb[0].mxu0
        %v3688 = vadd.f32 0.0, %v3687
        %v3689 = vpop.f32.mrb[0].mxu0
        %v3690 = vpop.f32.mrb[0].mxu0
        %v3691 = vadd.f32 0.0, %v3690
        %v3692 = vpop.f32.mrb[0].mxu0
        %3693 = vmatprep.mubr.bf16.mxu0 0
        %3694 = vmatmul.mubr.bf16.gmra.mrb[0].mxu0 %v3599
        %v3695 = vpop.f32.mrb[0].mxu0
        %v3696 = vadd.f32 0.0, %v3695
        %v3697 = vpop.f32.mrb[0].mxu0
        %v3698 = vpop.f32.mrb[0].mxu0
        %v3699 = vadd.f32 0.0, %v3698
        %v3700 = vpop.f32.mrb[0].mxu0
        %3701 = vmatprep.mubr.bf16.mxu0 0
        %3702 = vmatmul.mubr.bf16.gmra.mrb[0].mxu0 %v3602
        %v3703 = vpop.f32.mrb[0].mxu0
        %v3704 = vadd.f32 0.0, %v3703
        %v3705 = vpop.f32.mrb[0].mxu0
        %v3706 = vpop.f32.mrb[0].mxu0
        %v3707 = vadd.f32 0.0, %v3706
        %v3708 = vpop.f32.mrb[0].mxu0
        %3709 = vmatprep.mubr.bf16.mxu0 0
        %3710 = vmatmul.mubr.bf16.gmra.mrb[0].mxu0 %v3605
        %v3711 = vpop.f32.mrb[0].mxu0
        %v3712 = vadd.f32 0.0, %v3711
        %v3713 = vpop.f32.mrb[0].mxu0
        %v3714 = vpop.f32.mrb[0].mxu0
        %v3715 = vadd.f32 0.0, %v3714
        %v3716 = vpop.f32.mrb[0].mxu0
        %3717 = vmatprep.mubr.bf16.mxu0 0
        %3718 = vmatmul.mubr.bf16.gmra.mrb[0].mxu0 %v3608
        %v3719 = vpop.f32.mrb[0].mxu0
        %v3720 = vadd.f32 0.0, %v3719
        %v3721 = vpop.f32.mrb[0].mxu0
        %v3722 = vpop.f32.mrb[0].mxu0
        %v3723 = vadd.f32 0.0, %v3722
        %v3724 = vpop.f32.mrb[0].mxu0
        %3725 = vmatprep.mubr.bf16.mxu0 0
        %3726 = vmatmul.mubr.bf16.gmra.mrb[0].mxu0 %v3611
        %v3727 = vpop.f32.mrb[0].mxu0
        %v3728 = vadd.f32 0.0, %v3727
        %v3729 = vpop.f32.mrb[0].mxu0
        %v3730 = vpop.f32.mrb[0].mxu0
        %v3731 = vadd.f32 0.0, %v3730
        %v3732 = vpop.f32.mrb[0].mxu0
        %3733 = vmatprep.mubr.bf16.mxu0 0
        %3734 = vmatmul.mubr.bf16.gmra.mrb[0].mxu0 %v3614
        %v3735 = vpop.f32.mrb[0].mxu0
        %v3736 = vadd.f32 0.0, %v3735
        %v3737 = vpop.f32.mrb[0].mxu0
        %v3738 = vpop.f32.mrb[0].mxu0
        %v3739 = vadd.f32 0.0, %v3738
        %v3740 = vpop.f32.mrb[0].mxu0
        %3741 = vmatprep.mubr.bf16.mxu0 0
        %3742 = vmatmul.mubr.bf16.gmra.mrb[0].mxu0 %v3617
        %v3743 = vpop.f32.mrb[0].mxu0
        %v3744 = vadd.f32 0.0, %v3743
        %v3745 = vpop.f32.mrb[0].mxu0
        %v3746 = vpop.f32.mrb[0].mxu0
        %v3747 = vadd.f32 0.0, %v3746
        %v3748 = vpop.f32.mrb[0].mxu0
        %3749 = vmatprep.mubr.bf16.mxu0 0
        %3750 = vmatmul.mubr.bf16.gmra.mrb[0].mxu0 %v3620
        %v3751 = vpop.f32.mrb[0].mxu0
        %v3752 = vadd.f32 0.0, %v3751
        %v3753 = vpop.f32.mrb[0].mxu0
        %v3754 = vpop.f32.mrb[0].mxu0
        %v3755 = vadd.f32 0.0, %v3754
        %v3756 = vpop.f32.mrb[0].mxu0
        %3757 = vmatprep.mubr.bf16.mxu0 0
        %3758 = vmatmul.mubr.bf16.gmra.mrb[0].mxu0 %v3623
        %v3759 = vpop.f32.mrb[0].mxu0
        %v3760 = vadd.f32 0.0, %v3759
        %v3761 = vpop.f32.mrb[0].mxu0
        %v3762 = vpop.f32.mrb[0].mxu0
        %v3763 = vadd.f32 0.0, %v3762
        %v3764 = vpop.f32.mrb[0].mxu0
        %3765 = vmatprep.mubr.bf16.mxu0 0
        %3766 = vmatmul.mubr.bf16.gmra.mrb[0].mxu0 %v3626
        %v3767 = vpop.f32.mrb[0].mxu0
        %v3768 = vadd.f32 0.0, %v3767
        %v3769 = vpop.f32.mrb[0].mxu0
        %v3770 = vpop.f32.mrb[0].mxu0
        %v3771 = vadd.f32 0.0, %v3770
        %v3772 = vpop.f32.mrb[0].mxu0
        %3773 = vmatprep.mubr.bf16.mxu0 0
        %3774 = vmatmul.mubr.bf16.gmra.mrb[0].mxu0 %v3629
        %v3775 = vpop.f32.mrb[0].mxu0
        %v3776 = vadd.f32 0.0, %v3775
        %v3777 = vpop.f32.mrb[0].mxu0
        %v3778 = vpop.f32.mrb[0].mxu0
        %v3779 = vadd.f32 0.0, %v3778
        %v3780 = vpop.f32.mrb[0].mxu0
        %3781 = vmatprep.mubr.bf16.mxu0 0
        %3782 = vmatmul.mubr.bf16.gmra.mrb[0].mxu0 %v3632
        %v3783 = vpop.f32.mrb[0].mxu0
        %v3784 = vadd.f32 0.0, %v3783
        %v3785 = vpop.f32.mrb[0].mxu0
        %v3786 = vpop.f32.mrb[0].mxu0
        %v3787 = vadd.f32 0.0, %v3786
        %v3788 = vpop.f32.mrb[0].mxu0
        %3789 = vmatprep.mubr.bf16.mxu0 0
        %3790 = vmatmul.mubr.bf16.gmra.mrb[0].mxu0 %v3635
        %v3791 = vpop.f32.mrb[0].mxu0
        %v3792 = vadd.f32 0.0, %v3791
        %v3793 = vpop.f32.mrb[0].mxu0
        %v3794 = vpop.f32.mrb[0].mxu0
        %v3795 = vadd.f32 0.0, %v3794
        %v3796 = vpop.f32.mrb[0].mxu0
        %3797 = vdwg.mxu0
        %v3798 = vld [vmem:[%s8] sm:$0x1]
        %v3800 = vlaneseq
        %v3801 = vshrl.u32 %v3800, 7
        %v3802 = vsub.s32 0, %v3801
        %v3803 = vrot.slane %v3798, %v3802
        %v3805 = vmul.f32 %v3672, %v3803
        %v3806 = vmul.f32 %v3675, %v3803
        %v3807 = vmul.f32 %v3680, %v3803
        %v3808 = vmul.f32 %v3683, %v3803
        %v3809 = vmul.f32 %v3688, %v3803
        %v3810 = vmul.f32 %v3691, %v3803
        %v3811 = vmul.f32 %v3696, %v3803
        %v3812 = vmul.f32 %v3699, %v3803
        %v3813 = vmul.f32 %v3704, %v3803
        %v3814 = vmul.f32 %v3707, %v3803
        %v3815 = vmul.f32 %v3712, %v3803
        %v3816 = vmul.f32 %v3715, %v3803
        %v3817 = vmul.f32 %v3720, %v3803
        %v3818 = vmul.f32 %v3723, %v3803
        %v3819 = vmul.f32 %v3728, %v3803
        %v3820 = vmul.f32 %v3731, %v3803
        %v3821 = vmul.f32 %v3736, %v3803
        %v3822 = vmul.f32 %v3739, %v3803
        %v3823 = vmul.f32 %v3744, %v3803
        %v3824 = vmul.f32 %v3747, %v3803
        %v3825 = vmul.f32 %v3752, %v3803
        %v3826 = vmul.f32 %v3755, %v3803
        %v3827 = vmul.f32 %v3760, %v3803
        %v3828 = vmul.f32 %v3763, %v3803
        %v3829 = vmul.f32 %v3768, %v3803
        %v3830 = vmul.f32 %v3771, %v3803
        %v3831 = vmul.f32 %v3776, %v3803
        %v3832 = vmul.f32 %v3779, %v3803
        %v3833 = vmul.f32 %v3784, %v3803
        %v3834 = vmul.f32 %v3787, %v3803
        %v3835 = vmul.f32 %v3792, %v3803
        %v3836 = vmul.f32 %v3795, %v3803
        %v3837 = vld [vmem:[%s9] sm:$0x1]
        %v3839 = vlaneseq
        %v3840 = vshrl.u32 %v3839, 7
        %v3841 = vsub.s32 0, %v3840
        %v3842 = vrot.slane %v3837, %v3841
        %v3844 = vadd.f32 %v3805, %v3842
        %v3845 = vadd.f32 %v3806, %v3842
        %v3846 = vadd.f32 %v3807, %v3842
        %v3847 = vadd.f32 %v3808, %v3842
        %v3848 = vadd.f32 %v3809, %v3842
        %v3849 = vadd.f32 %v3810, %v3842
        %v3850 = vadd.f32 %v3811, %v3842
        %v3851 = vadd.f32 %v3812, %v3842
        %v3852 = vadd.f32 %v3813, %v3842
        %v3853 = vadd.f32 %v3814, %v3842
        %v3854 = vadd.f32 %v3815, %v3842
        %v3855 = vadd.f32 %v3816, %v3842
        %v3856 = vadd.f32 %v3817, %v3842
        %v3857 = vadd.f32 %v3818, %v3842
        %v3858 = vadd.f32 %v3819, %v3842
        %v3859 = vadd.f32 %v3820, %v3842
        %v3860 = vadd.f32 %v3821, %v3842
        %v3861 = vadd.f32 %v3822, %v3842
        %v3862 = vadd.f32 %v3823, %v3842
        %v3863 = vadd.f32 %v3824, %v3842
        %v3864 = vadd.f32 %v3825, %v3842
        %v3865 = vadd.f32 %v3826, %v3842
        %v3866 = vadd.f32 %v3827, %v3842
        %v3867 = vadd.f32 %v3828, %v3842
        %v3868 = vadd.f32 %v3829, %v3842
        %v3869 = vadd.f32 %v3830, %v3842
        %v3870 = vadd.f32 %v3831, %v3842
        %v3871 = vadd.f32 %v3832, %v3842
        %v3872 = vadd.f32 %v3833, %v3842
        %v3873 = vadd.f32 %v3834, %v3842
        %v3874 = vadd.f32 %v3835, %v3842
        %v3875 = vadd.f32 %v3836, %v3842
        %v3876 = vld [vmem:[%s541] sm:$0xff]
        %v3877 = vld [vmem:[%s541 + $0x8] sm:$0xff]
        %v3878 = vld [vmem:[%s541 + $0x10] sm:$0xff]
        %v3879 = vld [vmem:[%s541 + $0x18] sm:$0xff]
        %v3880 = vld [vmem:[%s541 + $0x20] sm:$0xff]
        %v3881 = vld [vmem:[%s541 + $0x28] sm:$0xff]
        %v3882 = vld [vmem:[%s541 + $0x30] sm:$0xff]
        %v3883 = vld [vmem:[%s541 + $0x38] sm:$0xff]
        %v3884 = vld [vmem:[%s541 + $0x40] sm:$0xff]
        %v3885 = vld [vmem:[%s541 + $0x48] sm:$0xff]
        %v3886 = vld [vmem:[%s541 + $0x50] sm:$0xff]
        %v3887 = vld [vmem:[%s541 + $0x58] sm:$0xff]
        %v3888 = vld [vmem:[%s541 + $0x60] sm:$0xff]
        %v3889 = vld [vmem:[%s541 + $0x68] sm:$0xff]
        %v3890 = vld [vmem:[%s541 + $0x70] sm:$0xff]
        %v3891 = vld [vmem:[%s541 + $0x78] sm:$0xff]
        %v3892 = vld [vmem:[%s541 + $0x80] sm:$0xff]
        %v3893 = vld [vmem:[%s541 + $0x88] sm:$0xff]
        %v3894 = vld [vmem:[%s541 + $0x90] sm:$0xff]
        %v3895 = vld [vmem:[%s541 + $0x98] sm:$0xff]
        %v3896 = vld [vmem:[%s541 + $0xa0] sm:$0xff]
        %v3897 = vld [vmem:[%s541 + $0xa8] sm:$0xff]
        %v3898 = vld [vmem:[%s541 + $0xb0] sm:$0xff]
        %v3899 = vld [vmem:[%s541 + $0xb8] sm:$0xff]
        %v3900 = vld [vmem:[%s541 + $0xc0] sm:$0xff]
        %v3901 = vld [vmem:[%s541 + $0xc8] sm:$0xff]
        %v3902 = vld [vmem:[%s541 + $0xd0] sm:$0xff]
        %v3903 = vld [vmem:[%s541 + $0xd8] sm:$0xff]
        %v3904 = vld [vmem:[%s541 + $0xe0] sm:$0xff]
        %v3905 = vld [vmem:[%s541 + $0xe8] sm:$0xff]
        %v3906 = vld [vmem:[%s541 + $0xf0] sm:$0xff]
        %v3907 = vld [vmem:[%s541 + $0xf8] sm:$0xff]
        %v3908 = vadd.f32 %v3844, %v3876
        %v3909 = vadd.f32 %v3845, %v3877
        %v3910 = vadd.f32 %v3846, %v3878
        %v3911 = vadd.f32 %v3847, %v3879
        %v3912 = vadd.f32 %v3848, %v3880
        %v3913 = vadd.f32 %v3849, %v3881
        %v3914 = vadd.f32 %v3850, %v3882
        %v3915 = vadd.f32 %v3851, %v3883
        %v3916 = vadd.f32 %v3852, %v3884
        %v3917 = vadd.f32 %v3853, %v3885
        %v3918 = vadd.f32 %v3854, %v3886
        %v3919 = vadd.f32 %v3855, %v3887
        %v3920 = vadd.f32 %v3856, %v3888
        %v3921 = vadd.f32 %v3857, %v3889
        %v3922 = vadd.f32 %v3858, %v3890
        %v3923 = vadd.f32 %v3859, %v3891
        %v3924 = vadd.f32 %v3860, %v3892
        %v3925 = vadd.f32 %v3861, %v3893
        %v3926 = vadd.f32 %v3862, %v3894
        %v3927 = vadd.f32 %v3863, %v3895
        %v3928 = vadd.f32 %v3864, %v3896
        %v3929 = vadd.f32 %v3865, %v3897
        %v3930 = vadd.f32 %v3866, %v3898
        %v3931 = vadd.f32 %v3867, %v3899
        %v3932 = vadd.f32 %v3868, %v3900
        %v3933 = vadd.f32 %v3869, %v3901
        %v3934 = vadd.f32 %v3870, %v3902
        %v3935 = vadd.f32 %v3871, %v3903
        %v3936 = vadd.f32 %v3872, %v3904
        %v3937 = vadd.f32 %v3873, %v3905
        %v3938 = vadd.f32 %v3874, %v3906
        %v3939 = vadd.f32 %v3875, %v3907
        %v3940 = vmax.f32 %v3908, 0.0
        %v3941 = vmax.f32 %v3909, 0.0
        %v3942 = vmax.f32 %v3910, 0.0
        %v3943 = vmax.f32 %v3911, 0.0
        %v3944 = vmax.f32 %v3912, 0.0
        %v3945 = vmax.f32 %v3913, 0.0
        %v3946 = vmax.f32 %v3914, 0.0
        %v3947 = vmax.f32 %v3915, 0.0
        %v3948 = vmax.f32 %v3916, 0.0
        %v3949 = vmax.f32 %v3917, 0.0
        %v3950 = vmax.f32 %v3918, 0.0
        %v3951 = vmax.f32 %v3919, 0.0
        %v3952 = vmax.f32 %v3920, 0.0
        %v3953 = vmax.f32 %v3921, 0.0
        %v3954 = vmax.f32 %v3922, 0.0
        %v3955 = vmax.f32 %v3923, 0.0
        %v3956 = vmax.f32 %v3924, 0.0
        %v3957 = vmax.f32 %v3925, 0.0
        %v3958 = vmax.f32 %v3926, 0.0
        %v3959 = vmax.f32 %v3927, 0.0
        %v3960 = vmax.f32 %v3928, 0.0
        %v3961 = vmax.f32 %v3929, 0.0
        %v3962 = vmax.f32 %v3930, 0.0
        %v3963 = vmax.f32 %v3931, 0.0
        %v3964 = vmax.f32 %v3932, 0.0
        %v3965 = vmax.f32 %v3933, 0.0
        %v3966 = vmax.f32 %v3934, 0.0
        %v3967 = vmax.f32 %v3935, 0.0
        %v3968 = vmax.f32 %v3936, 0.0
        %v3969 = vmax.f32 %v3937, 0.0
        %v3970 = vmax.f32 %v3938, 0.0
        %v3971 = vmax.f32 %v3939, 0.0
        %3972 = vst [vmem:[%s593] sm:$0xff] %v3940
        %3973 = vst [vmem:[%s593 + $0x8] sm:$0xff] %v3941
        %3974 = vst [vmem:[%s593 + $0x10] sm:$0xff] %v3942
        %3975 = vst [vmem:[%s593 + $0x18] sm:$0xff] %v3943
        %3976 = vst [vmem:[%s593 + $0x20] sm:$0xff] %v3944
        %3977 = vst [vmem:[%s593 + $0x28] sm:$0xff] %v3945
        %3978 = vst [vmem:[%s593 + $0x30] sm:$0xff] %v3946
        %3979 = vst [vmem:[%s593 + $0x38] sm:$0xff] %v3947
        %3980 = vst [vmem:[%s593 + $0x40] sm:$0xff] %v3948
        %3981 = vst [vmem:[%s593 + $0x48] sm:$0xff] %v3949
        %3982 = vst [vmem:[%s593 + $0x50] sm:$0xff] %v3950
        %3983 = vst [vmem:[%s593 + $0x58] sm:$0xff] %v3951
        %3984 = vst [vmem:[%s593 + $0x60] sm:$0xff] %v3952
        %3985 = vst [vmem:[%s593 + $0x68] sm:$0xff] %v3953
        %3986 = vst [vmem:[%s593 + $0x70] sm:$0xff] %v3954
        %3987 = vst [vmem:[%s593 + $0x78] sm:$0xff] %v3955
        %3988 = vst [vmem:[%s593 + $0x80] sm:$0xff] %v3956
        %3989 = vst [vmem:[%s593 + $0x88] sm:$0xff] %v3957
        %3990 = vst [vmem:[%s593 + $0x90] sm:$0xff] %v3958
        %3991 = vst [vmem:[%s593 + $0x98] sm:$0xff] %v3959
        %3992 = vst [vmem:[%s593 + $0xa0] sm:$0xff] %v3960
        %3993 = vst [vmem:[%s593 + $0xa8] sm:$0xff] %v3961
        %3994 = vst [vmem:[%s593 + $0xb0] sm:$0xff] %v3962
        %3995 = vst [vmem:[%s593 + $0xb8] sm:$0xff] %v3963
        %3996 = vst [vmem:[%s593 + $0xc0] sm:$0xff] %v3964
        %3997 = vst [vmem:[%s593 + $0xc8] sm:$0xff] %v3965
        %3998 = vst [vmem:[%s593 + $0xd0] sm:$0xff] %v3966
        %3999 = vst [vmem:[%s593 + $0xd8] sm:$0xff] %v3967
        %4000 = vst [vmem:[%s593 + $0xe0] sm:$0xff] %v3968
        %4001 = vst [vmem:[%s593 + $0xe8] sm:$0xff] %v3969
        %4002 = vst [vmem:[%s593 + $0xf0] sm:$0xff] %v3970
        %4003 = vst [vmem:[%s593 + $0xf8] sm:$0xff] %v3971
        %s4004 = sand.u32 %s426, 1
        %s4005 = scalar_lea.sflag [#allocation7], %s4004
        %s4006 = sand.u32 %s426, 1
        %s4007 = smul.addr %s4006, 256
        %s4008 = scalar_lea.vmem [#allocation8], %s4007
        // Predicated region
        $region97: #{tpu_custom_call.1} parent=91 // pred_check
          %p4009 = pneg %p436
        $region98: #{tpu_custom_call.1} parent=91 // pred_check_branch
          %4011 = sbr.rel (%p4009) target = $region100
        $region99: #{tpu_custom_call.1} parent=91 // pred_region
          %s4013 = ssub.s32 4096, 4096
          %4014 = vsyncadd %s4005, %s4013
          %s4015 = smul.addr %s35, 32
          %s4016 = smul.addr %s4015, 128
          %s4017 = scalar_lea.hbm %s18, %s4016
          %s4018 = sshll.u32 %s4008, 4
          %s4019 = int_to_ptr.vmem [resolvable:$true] %s4018
          %4024 = dma.vmem_to_hbm [thread:$0]  %s4019, 4096, %s4017, %s4005, 128, 128, 8
        $region100: #{tpu_custom_call.1} parent=91 // pred_fallthru
          _
      $region92: #{tpu_custom_call.1} parent=5 // pred_fallthru
        _
      %p4025 = scmp.le.s32.totalorder 2, %s30
      // Predicated region
      $region101: #{tpu_custom_call.1} parent=5 // pred_check
        %p4026 = pneg %p4025
      $region102: #{tpu_custom_call.1} parent=5 // pred_check_branch
        %4028 = sbr.rel (%p4026) target = $region104
      $region103: #{tpu_custom_call.1} parent=5 // pred_region
        %s4029 = ssub.s32 %s30, 2
        // Predicated region
        $region105: #{tpu_custom_call.1} parent=103 // pred_check
          %p4030 = pneg %p442
        $region106: #{tpu_custom_call.1} parent=103 // pred_check_branch
          %4032 = sbr.rel (%p4030) target = $region108
        $region107: #{tpu_custom_call.1} parent=103 // pred_region
          %s4033 = sand.u32 %s427, 1
          %s4034 = scalar_lea.sflag [#allocation7], %s4033
          %s4035 = sand.u32 %s427, 1
          %s4036 = smul.addr %s4035, 256
          %s4037 = scalar_lea.vmem [#allocation8], %s4036
          %4038 = dma.done %s4034, 4096
        $region108: #{tpu_custom_call.1} parent=103 // pred_fallthru
          _
      $region104: #{tpu_custom_call.1} parent=5 // pred_fallthru
        _
    $region6: #{tpu_custom_call.1} parent=1 // loop_footer
      %s34 = sadd.s32 1, %s30
    $region7: #{tpu_custom_call.1} parent=1 // loop_footer_branch
      %29 = sbr.rel target = $region3
    $region8: #{tpu_custom_call.1} parent=1 // loop_exit
      _
    %4039 = vsyncpa [#allocation6], 1
    %s4040 = scalar_lea.sflag [#allocation6], 1
    %4041 = vsyncpa %s4040, 1
    %4042 = vsyncpa [#allocation7], 1
    %s4043 = scalar_lea.sflag [#allocation7], 1
    %4044 = vsyncpa %s4043, 1

</llo_original>
